<compile_context>
chip_gen: v5e
topology: v5e:2x2
jax: 0.10.0
libtpu: 0.0.40
codegen_flags: <defaults>
</compile_context>

<pallas_src>
import math
import numpy as np
import jax
import jax.numpy as jnp
from jax import lax
from jax.experimental import pallas as pl
from jax.experimental.pallas import tpu as pltpu

STYLE_DIM = 64          # style_dim
NUM_HEADS = 4           # SelfAttention(4, style_dim, style_dim, 0.3)
HEAD_SIZE = STYLE_DIM // NUM_HEADS
IN_DIM = 256            # conv1 = nn.Linear(256, style_dim)
LAMBDA_GUIDE = 5.0
BN_EPS = 1e-5
LN_EPS = 1e-12
OUT_LANES = 128         # packed output slab width (out | kl broadcast)


def _atf_kernel(x_ref, tgt_ref, eps_ref, const_ref, c1w_ref, mlvkv_ref, wpack_ref, out_ref):
    f32 = jnp.float32
    bf16 = jnp.bfloat16
    d = STYLE_DIM
    hs = HEAD_SIZE

    # ---- packed constants: rows of a (8, 128) f32 array ----
    c1b = const_ref[0:1, 0:d]          # conv1 bias (BN folded)
    mlvb = const_ref[1:2, :]           # [mean_b | log_var_b]
    qb = const_ref[2:3, 0:d]
    kvb = const_ref[3:4, :]            # [k_b | v_b]
    db = const_ref[4:5, 0:d]
    ob = const_ref[5:6, 0:d]           # fused sa_out/atf_out bias
    pos = const_ref[6:7, 0:d]          # pos_embed
    gpb = const_ref[7:8, 0:d]          # folded 5 * ln_b @ G

    # ---- packed square weights: rows of a (256, 64) bf16 array ----
    qw = wpack_ref[0:d, :]
    dw = wpack_ref[d:2 * d, :]
    gpw = wpack_ref[2 * d:3 * d, :]    # folded 5 * diag(ln_w) @ G
    ow = wpack_ref[3 * d:4 * d, :]     # fused sa_out @ atf_out

    x = x_ref[...]                     # (tb, 256) bf16
    tgt_b = tgt_ref[...]               # (tb, 64)  bf16
    tgt = tgt_b.astype(f32)
    eps = eps_ref[...].astype(f32)

    def dot_b(a, w):                   # bf16 MXU matmul, f32 accumulation
        return jnp.dot(a.astype(bf16), w, preferred_element_type=f32)

    # --- ATF stem: conv1 (+ folded eval BatchNorm) + SiLU ---
    h = dot_b(x, c1w_ref[...]) + c1b
    h = h * jax.nn.sigmoid(h)

    # --- mean / log_var from one lane-dense packed matmul ---
    mlv = dot_b(h, mlvkv_ref[0:d, :]) + mlvb
    mean = mlv[:, :d]
    log_var = mlv[:, d:]
    sigma = jnp.exp(0.5 * log_var)     # == sqrt(exp(log_var))
    z0 = mean + sigma * eps

    # --- cross attention: SelfAttention.forward(z0, target) ---
    identity = z0
    inp = z0 * pos
    q = dot_b(inp, qw) + qb
    kv = dot_b(tgt_b, mlvkv_ref[d:2 * d, :]) + kvb
    k = kv[:, :d]
    v = kv[:, d:]

    # transpose_for_scores on a 2-D input contracts over the head axis (H=4) and attends
    # over head_size positions.  Unrolled over heads; every intermediate stays <= 3-D and
    # every reduction is on the minor (lane) axis.
    #   scores[b, i, j] = sum_h q[b, h*hs + i] * k[b, h*hs + j]
    scores = None
    for hh in range(NUM_HEADS):
        lo = hh * hs
        qh = q[:, lo:lo + hs]                       # (tb, hs)
        kh = k[:, lo:lo + hs]                       # (tb, hs)
        term = qh[:, :, None] * kh[:, None, :]      # (tb, hs, hs)
        scores = term if scores is None else scores + term
    scores = scores * (1.0 / math.sqrt(hs))
    smax = jnp.max(scores, axis=-1, keepdims=True)
    e = jnp.exp(scores - smax)
    probs = e * pl.reciprocal(jnp.sum(e, axis=-1, keepdims=True), approx=True)
    # attn_dropout -> identity (inference)

    #   ctx[b, h*hs + i] = sum_j probs[b, i, j] * v[b, h*hs + j]
    # (matches torch's permute(0,2,1).contiguous().view(B, D) flattening)
    ctx_parts = []
    for hh in range(NUM_HEADS):
        lo = hh * hs
        vh = v[:, lo:lo + hs]                       # (tb, hs)
        ctx_parts.append(jnp.sum(probs * vh[:, None, :], axis=-1))   # (tb, hs)
    ctx = jnp.concatenate(ctx_parts, axis=-1)       # (tb, 64)

    hidden = dot_b(ctx, dw) + db
    hidden = hidden * inp
    hidden = dot_b(hidden, dw) + db                 # same dense layer applied twice (as in torch)

    # TF-style LayerNorm (affine + lambda_guide folded into gpw / gpb)
    u = jnp.mean(hidden, axis=-1, keepdims=True)
    s = jnp.mean((hidden - u) ** 2, axis=-1, keepdims=True)
    norm = (hidden - u) * lax.rsqrt(s + LN_EPS)

    # Att_variance_smoothing: identity + 5*(blur(LN(norm)) - identity)
    hidden = dot_b(norm, gpw) + gpb - 4.0 * identity

    # fused SelfAttention.out + ATF.out
    out64 = dot_b(hidden + tgt, ow) + ob

    # KL per row (exp(lv)^2 == (sigma^2)^2, log(exp(lv)) == lv)
    var = sigma * sigma
    kl = 0.5 * jnp.sum(mean * mean + var * var - 2.0 * log_var - 1.0,
                       axis=-1, keepdims=True)      # (tb, 1)

    # lane-dense (tb, 128) output slab: [out | kl broadcast]
    out_ref[...] = jnp.concatenate(
        [out64, jnp.broadcast_to(kl, (kl.shape[0], d))], axis=-1)


def _pick_batch_tile(b):
    # Big tiles amortize the ~0.35us per-grid-step overhead; prefer >=2 grid steps so both
    # v7x TensorCores get work.  Minimum 16 rows keeps bf16 sublane tiling aligned.
    for tb in (256, 128, 64, 32, 16):
        if b >= 2 * tb:
            return tb
    return 16


def atf_forward(x, target, params, eps_noise):
    d = STYLE_DIM
    x2 = x.reshape(-1, IN_DIM)
    b = x2.shape[0]

    # ---------- parameter prep (outside the kernel) ----------
    # Fold eval-mode BatchNorm1d into conv1.
    c1w = (params['conv1_w'] * params['bn_scale']).astype(jnp.bfloat16)
    c1b = params['conv1_b'] * params['bn_scale'] + params['bn_shift']
    # Pack weight pairs sharing an output position into lane-dense (D, 2D) matrices,
    # then stack them sublane-wise into one (2D, 2D) operand.
    mlv_w = jnp.concatenate([params['mean_w'], params['log_var_w']], axis=1)
    mlv_b = jnp.concatenate([params['mean_b'], params['log_var_b']], axis=1)
    kv_w = jnp.concatenate([params['k_w'], params['v_w']], axis=1)
    kv_b = jnp.concatenate([params['k_b'], params['v_b']], axis=1)
    mlvkv_w = jnp.concatenate([mlv_w, kv_w], axis=0).astype(jnp.bfloat16)       # (128, 128)
    # Fuse the last two projections: (z @ sow + sob) @ aow + aob.
    ow = params['sa_out_w'] @ params['atf_out_w']
    ob = params['sa_out_b'] @ params['atf_out_w'] + params['atf_out_b']
    # Fold LayerNorm affine and lambda_guide into the blur matrix / bias.
    gpw = LAMBDA_GUIDE * (params['ln_w'].reshape(-1, 1) * params['gblur'])       # (64, 64)
    gpb = LAMBDA_GUIDE * (params['ln_b'] @ params['gblur'])                      # (1, 64)
    # Stack all (D, D) weights sublane-wise into one operand.
    wpack = jnp.concatenate(
        [params['q_w'], params['dense_w'], gpw, ow], axis=0).astype(jnp.bfloat16)  # (256, 64)

    # All small (1,64)/(1,128) constants stacked into one 128-lane operand.
    def row64(v):
        return jnp.pad(v.reshape(1, d), ((0, 0), (0, OUT_LANES - d)))

    consts = jnp.concatenate([
        row64(c1b),
        mlv_b.reshape(1, 2 * d),
        row64(params['q_b']),
        kv_b.reshape(1, 2 * d),
        row64(params['dense_b']),
        row64(ob),
        row64(params['pos_embed']),
        row64(gpb),
    ], axis=0).astype(jnp.float32)                                               # (8, 128)

    # ---------- batch tiling (pad remainder rows with zeros) ----------
    tb = _pick_batch_tile(b)
    b_pad = ((b + tb - 1) // tb) * tb

    def prep(a):
        a = a.astype(jnp.bfloat16)
        if b_pad != b:
            a = jnp.pad(a, ((0, b_pad - b), (0, 0)))
        return a

    x2p = prep(x2)
    tgtp = prep(target.reshape(-1, d))
    epsp = prep(eps_noise.reshape(-1, d))

    grid = (b_pad // tb,)

    def _row_spec(cols):
        return pl.BlockSpec((tb, cols), lambda i: (i, 0))

    def _const_spec(shape):
        return pl.BlockSpec(shape, lambda i: (0,) * len(shape))

    slab = pl.pallas_call(
        _atf_kernel,
        grid=grid,
        in_specs=[
            _row_spec(IN_DIM), _row_spec(d), _row_spec(d),
            _const_spec(consts.shape), _const_spec(c1w.shape),
            _const_spec(mlvkv_w.shape), _const_spec(wpack.shape),
        ],
        out_specs=pl.BlockSpec((tb, OUT_LANES), lambda i: (i, 0)),
        out_shape=jax.ShapeDtypeStruct((b_pad, OUT_LANES), jnp.float32),
        compiler_params=pltpu.CompilerParams(
            dimension_semantics=("parallel",),
            vmem_limit_bytes=32 * 1024 * 1024,
        ),
    )(x2p, tgtp, epsp, consts, c1w, mlvkv_w, wpack)

    out = slab[:b, :d]
    kl = slab[:b, d]
    return out, kl


def init_params(key):
    d = STYLE_DIM
    keys = jax.random.split(key, 9)

    def lin(k, fan_in, fan_out, scale=0.05):
        kw, kb = jax.random.split(k)
        w = scale * jax.random.normal(kw, (fan_in, fan_out), jnp.float32)
        bias = 0.01 * jax.random.normal(kb, (1, fan_out), jnp.float32)
        return w, bias

    p = {}
    p['conv1_w'], p['conv1_b'] = lin(keys[0], IN_DIM, d)
    p['mean_w'], p['mean_b'] = lin(keys[1], d, d)
    p['log_var_w'], p['log_var_b'] = lin(keys[2], d, d)
    p['q_w'], p['q_b'] = lin(keys[3], d, d)
    p['k_w'], p['k_b'] = lin(keys[4], d, d)
    p['v_w'], p['v_b'] = lin(keys[5], d, d)
    p['dense_w'], p['dense_b'] = lin(keys[6], d, d)
    p['sa_out_w'], p['sa_out_b'] = lin(keys[7], d, d)
    p['atf_out_w'], p['atf_out_b'] = lin(keys[8], d, d)

    # BatchNorm1d eval mode with fresh running stats (mean=0, var=1), affine (gamma=1, beta=0)
    p['bn_scale'] = jnp.full((1, d), 1.0 / np.sqrt(1.0 + BN_EPS), jnp.float32)
    p['bn_shift'] = jnp.zeros((1, d), jnp.float32)
    # LayerNorm init (weight=1, bias=0)
    p['ln_w'] = jnp.ones((1, d), jnp.float32)
    p['ln_b'] = jnp.zeros((1, d), jnp.float32)
    # pos_embed = sin(1 / 10000 ** (arange(D) / (D - 1)))
    ar = np.arange(d, dtype=np.float32)
    p['pos_embed'] = jnp.asarray(np.sin(1.0 / (10000.0 ** (ar / (d - 1))))).reshape(1, d)
    # GaussianBlurConv kernel (size=5, sigma=0.5) as a banded Toeplitz matrix, zero padding=2
    xs = np.arange(-2.0, 3.0, dtype=np.float32)
    kern = np.exp(-0.5 * (xs / 0.5) ** 2)
    kern = kern / kern.sum()
    g = np.zeros((d, d), dtype=np.float32)
    for col in range(d):
        for t in range(5):
            row = col + t - 2
            if 0 <= row < d:
                g[row, col] = kern[t]
    p['gblur'] = jnp.asarray(g)
    return p


if __name__ == "__main__":
    key = jax.random.PRNGKey(0)
    k_x, k_t, k_eps, k_p = jax.random.split(key, 4)

    # x reshapes to (-1, 256) inside the forward -> effective batch B = 8
    x = jax.random.normal(k_x, (2, 4, IN_DIM), jnp.float32)
    B = 2 * 4
    target = jax.random.normal(k_t, (B, STYLE_DIM), jnp.float32)
    eps_noise = jax.random.normal(k_eps, (B, STYLE_DIM), jnp.float32)  # the randn_like draw
    params = init_params(k_p)

    out, kl = jax.jit(atf_forward)(x, target, params, eps_noise)
    jax.block_until_ready((out, kl))

    assert out.shape == (B, STYLE_DIM) and kl.shape == (B,)
    assert bool(jnp.all(jnp.isfinite(out))) and bool(jnp.all(jnp.isfinite(kl)))
    print("KERNEL_OK")
</pallas_src>

<mosaic_0001>
module attributes {stable_mosaic.version = 11 : i64} {
  func.func @_atf_kernel(%arg0: i32, %arg1: memref<16x256xbf16, #tpu.memory_space<vmem>>, %arg2: memref<16x64xbf16, #tpu.memory_space<vmem>>, %arg3: memref<16x64xbf16, #tpu.memory_space<vmem>>, %arg4: memref<8x128xf32, #tpu.memory_space<vmem>>, %arg5: memref<256x64xbf16, #tpu.memory_space<vmem>>, %arg6: memref<128x128xbf16, #tpu.memory_space<vmem>>, %arg7: memref<256x64xbf16, #tpu.memory_space<vmem>>, %arg8: memref<16x128xf32, #tpu.memory_space<vmem>>) attributes {dimension_semantics = [#tpu.dimension_semantics<parallel>], iteration_bounds = array<i64: 1>, scalar_prefetch = 0 : i64, scratch_operands = 0 : i64, tpu.core_type = #tpu.core_type<tc>, window_params = [{transform_indices = @transform_0, window_bounds = array<i64: 16, 256>}, {transform_indices = @transform_1, window_bounds = array<i64: 16, 64>}, {transform_indices = @transform_2, window_bounds = array<i64: 16, 64>}, {pipeline_mode = #tpu.pipeline_mode<synchronous>, transform_indices = @transform_3, window_bounds = array<i64: 8, 128>}, {pipeline_mode = #tpu.pipeline_mode<synchronous>, transform_indices = @transform_4, window_bounds = array<i64: 256, 64>}, {pipeline_mode = #tpu.pipeline_mode<synchronous>, transform_indices = @transform_5, window_bounds = array<i64: 128, 128>}, {pipeline_mode = #tpu.pipeline_mode<synchronous>, transform_indices = @transform_6, window_bounds = array<i64: 256, 64>}, {transform_indices = @transform_7, window_bounds = array<i64: 16, 128>}]} {
    %c0 = arith.constant 0 : index
    %c0_0 = arith.constant 0 : index
    %0 = vector.load %arg4[%c0, %c0_0] : memref<8x128xf32, #tpu.memory_space<vmem>>, vector<1x64xf32>
    %c1 = arith.constant 1 : index
    %c0_1 = arith.constant 0 : index
    %1 = vector.load %arg4[%c1, %c0_1] : memref<8x128xf32, #tpu.memory_space<vmem>>, vector<1x128xf32>
    %c2 = arith.constant 2 : index
    %c0_2 = arith.constant 0 : index
    %2 = vector.load %arg4[%c2, %c0_2] : memref<8x128xf32, #tpu.memory_space<vmem>>, vector<1x64xf32>
    %c3 = arith.constant 3 : index
    %c0_3 = arith.constant 0 : index
    %3 = vector.load %arg4[%c3, %c0_3] : memref<8x128xf32, #tpu.memory_space<vmem>>, vector<1x128xf32>
    %c4 = arith.constant 4 : index
    %c0_4 = arith.constant 0 : index
    %4 = vector.load %arg4[%c4, %c0_4] : memref<8x128xf32, #tpu.memory_space<vmem>>, vector<1x64xf32>
    %c5 = arith.constant 5 : index
    %c0_5 = arith.constant 0 : index
    %5 = vector.load %arg4[%c5, %c0_5] : memref<8x128xf32, #tpu.memory_space<vmem>>, vector<1x64xf32>
    %c6 = arith.constant 6 : index
    %c0_6 = arith.constant 0 : index
    %6 = vector.load %arg4[%c6, %c0_6] : memref<8x128xf32, #tpu.memory_space<vmem>>, vector<1x64xf32>
    %c7 = arith.constant 7 : index
    %c0_7 = arith.constant 0 : index
    %7 = vector.load %arg4[%c7, %c0_7] : memref<8x128xf32, #tpu.memory_space<vmem>>, vector<1x64xf32>
    %c0_8 = arith.constant 0 : index
    %c0_9 = arith.constant 0 : index
    %8 = vector.load %arg7[%c0_8, %c0_9] : memref<256x64xbf16, #tpu.memory_space<vmem>>, vector<64x64xbf16>
    %c64 = arith.constant 64 : index
    %c0_10 = arith.constant 0 : index
    %9 = vector.load %arg7[%c64, %c0_10] : memref<256x64xbf16, #tpu.memory_space<vmem>>, vector<64x64xbf16>
    %c128 = arith.constant 128 : index
    %c0_11 = arith.constant 0 : index
    %10 = vector.load %arg7[%c128, %c0_11] : memref<256x64xbf16, #tpu.memory_space<vmem>>, vector<64x64xbf16>
    %c192 = arith.constant 192 : index
    %c0_12 = arith.constant 0 : index
    %11 = vector.load %arg7[%c192, %c0_12] : memref<256x64xbf16, #tpu.memory_space<vmem>>, vector<64x64xbf16>
    %c0_13 = arith.constant 0 : index
    %c0_14 = arith.constant 0 : index
    %12 = vector.load %arg1[%c0_13, %c0_14] : memref<16x256xbf16, #tpu.memory_space<vmem>>, vector<16x256xbf16>
    %c0_15 = arith.constant 0 : index
    %c0_16 = arith.constant 0 : index
    %13 = vector.load %arg2[%c0_15, %c0_16] : memref<16x64xbf16, #tpu.memory_space<vmem>>, vector<16x64xbf16>
    %14 = arith.extf %13 : vector<16x64xbf16> to vector<16x64xf32>
    %c0_17 = arith.constant 0 : index
    %c0_18 = arith.constant 0 : index
    %15 = vector.load %arg3[%c0_17, %c0_18] : memref<16x64xbf16, #tpu.memory_space<vmem>>, vector<16x64xbf16>
    %16 = arith.extf %15 : vector<16x64xbf16> to vector<16x64xf32>
    %c0_19 = arith.constant 0 : index
    %c0_20 = arith.constant 0 : index
    %17 = vector.load %arg5[%c0_19, %c0_20] : memref<256x64xbf16, #tpu.memory_space<vmem>>, vector<256x64xbf16>
    %cst = arith.constant dense<0.000000e+00> : vector<16x64xf32>
    %18 = tpu.matmul %12, %17, %cst {dimension_numbers = #tpu.dot_dimension_numbers<[1], [0], [0], [1], [0, 0, 1, 1], [], []>} : vector<16x256xbf16>, vector<256x64xbf16>, vector<16x64xf32> -> vector<16x64xf32>
    %19 = vector.broadcast %0 : vector<1x64xf32> to vector<16x64xf32>
    %20 = arith.addf %18, %19 : vector<16x64xf32>
    %21 = arith.negf %20 : vector<16x64xf32>
    %22 = math.exp %21 : vector<16x64xf32>
    %cst_21 = arith.constant 1.000000e+00 : f32
    %23 = vector.broadcast %cst_21 : f32 to vector<16x64xf32>
    %24 = arith.addf %23, %22 : vector<16x64xf32>
    %25 = arith.divf %23, %24 : vector<16x64xf32>
    %26 = arith.mulf %20, %25 : vector<16x64xf32>
    %c0_22 = arith.constant 0 : index
    %c0_23 = arith.constant 0 : index
    %27 = vector.load %arg6[%c0_22, %c0_23] : memref<128x128xbf16, #tpu.memory_space<vmem>>, vector<64x128xbf16>
    %28 = arith.truncf %26 : vector<16x64xf32> to vector<16x64xbf16>
    %cst_24 = arith.constant dense<0.000000e+00> : vector<16x128xf32>
    %29 = tpu.matmul %28, %27, %cst_24 {dimension_numbers = #tpu.dot_dimension_numbers<[1], [0], [0], [1], [0, 0, 1, 1], [], []>} : vector<16x64xbf16>, vector<64x128xbf16>, vector<16x128xf32> -> vector<16x128xf32>
    %30 = vector.broadcast %1 : vector<1x128xf32> to vector<16x128xf32>
    %31 = arith.addf %29, %30 : vector<16x128xf32>
    %32 = vector.extract_strided_slice %31 {offsets = [0, 0], sizes = [16, 64], strides = [1, 1]} : vector<16x128xf32> to vector<16x64xf32>
    %33 = vector.extract_strided_slice %31 {offsets = [0, 64], sizes = [16, 64], strides = [1, 1]} : vector<16x128xf32> to vector<16x64xf32>
    %cst_25 = arith.constant 5.000000e-01 : f32
    %34 = vector.broadcast %cst_25 : f32 to vector<16x64xf32>
    %35 = arith.mulf %34, %33 : vector<16x64xf32>
    %36 = math.exp %35 : vector<16x64xf32>
    %37 = arith.mulf %36, %16 : vector<16x64xf32>
    %38 = arith.addf %32, %37 : vector<16x64xf32>
    %39 = vector.broadcast %6 : vector<1x64xf32> to vector<16x64xf32>
    %40 = arith.mulf %38, %39 : vector<16x64xf32>
    %41 = arith.truncf %40 : vector<16x64xf32> to vector<16x64xbf16>
    %cst_26 = arith.constant dense<0.000000e+00> : vector<16x64xf32>
    %42 = tpu.matmul %41, %8, %cst_26 {dimension_numbers = #tpu.dot_dimension_numbers<[1], [0], [0], [1], [0, 0, 1, 1], [], []>} : vector<16x64xbf16>, vector<64x64xbf16>, vector<16x64xf32> -> vector<16x64xf32>
    %43 = vector.broadcast %2 : vector<1x64xf32> to vector<16x64xf32>
    %44 = arith.addf %42, %43 : vector<16x64xf32>
    %c64_27 = arith.constant 64 : index
    %c0_28 = arith.constant 0 : index
    %45 = vector.load %arg6[%c64_27, %c0_28] : memref<128x128xbf16, #tpu.memory_space<vmem>>, vector<64x128xbf16>
    %cst_29 = arith.constant dense<0.000000e+00> : vector<16x128xf32>
    %46 = tpu.matmul %13, %45, %cst_29 {dimension_numbers = #tpu.dot_dimension_numbers<[1], [0], [0], [1], [0, 0, 1, 1], [], []>} : vector<16x64xbf16>, vector<64x128xbf16>, vector<16x128xf32> -> vector<16x128xf32>
    %47 = vector.broadcast %3 : vector<1x128xf32> to vector<16x128xf32>
    %48 = arith.addf %46, %47 : vector<16x128xf32>
    %49 = vector.extract_strided_slice %48 {offsets = [0, 0], sizes = [16, 64], strides = [1, 1]} : vector<16x128xf32> to vector<16x64xf32>
    %50 = vector.extract_strided_slice %48 {offsets = [0, 64], sizes = [16, 64], strides = [1, 1]} : vector<16x128xf32> to vector<16x64xf32>
    %51 = vector.extract_strided_slice %44 {offsets = [0, 0], sizes = [16, 16], strides = [1, 1]} : vector<16x64xf32> to vector<16x16xf32>
    %52 = vector.extract_strided_slice %49 {offsets = [0, 0], sizes = [16, 16], strides = [1, 1]} : vector<16x64xf32> to vector<16x16xf32>
    %53 = vector.shape_cast %51 : vector<16x16xf32> to vector<16x16x1xf32>
    %54 = vector.shape_cast %52 : vector<16x16xf32> to vector<16x1x16xf32>
    %55 = vector.broadcast %53 : vector<16x16x1xf32> to vector<16x16x16xf32>
    %56 = vector.broadcast %54 : vector<16x1x16xf32> to vector<16x16x16xf32>
    %57 = arith.mulf %55, %56 : vector<16x16x16xf32>
    %58 = vector.extract_strided_slice %44 {offsets = [0, 16], sizes = [16, 16], strides = [1, 1]} : vector<16x64xf32> to vector<16x16xf32>
    %59 = vector.extract_strided_slice %49 {offsets = [0, 16], sizes = [16, 16], strides = [1, 1]} : vector<16x64xf32> to vector<16x16xf32>
    %60 = vector.shape_cast %58 : vector<16x16xf32> to vector<16x16x1xf32>
    %61 = vector.shape_cast %59 : vector<16x16xf32> to vector<16x1x16xf32>
    %62 = vector.broadcast %60 : vector<16x16x1xf32> to vector<16x16x16xf32>
    %63 = vector.broadcast %61 : vector<16x1x16xf32> to vector<16x16x16xf32>
    %64 = arith.mulf %62, %63 : vector<16x16x16xf32>
    %65 = arith.addf %57, %64 : vector<16x16x16xf32>
    %66 = vector.extract_strided_slice %44 {offsets = [0, 32], sizes = [16, 16], strides = [1, 1]} : vector<16x64xf32> to vector<16x16xf32>
    %67 = vector.extract_strided_slice %49 {offsets = [0, 32], sizes = [16, 16], strides = [1, 1]} : vector<16x64xf32> to vector<16x16xf32>
    %68 = vector.shape_cast %66 : vector<16x16xf32> to vector<16x16x1xf32>
    %69 = vector.shape_cast %67 : vector<16x16xf32> to vector<16x1x16xf32>
    %70 = vector.broadcast %68 : vector<16x16x1xf32> to vector<16x16x16xf32>
    %71 = vector.broadcast %69 : vector<16x1x16xf32> to vector<16x16x16xf32>
    %72 = arith.mulf %70, %71 : vector<16x16x16xf32>
    %73 = arith.addf %65, %72 : vector<16x16x16xf32>
    %74 = vector.extract_strided_slice %44 {offsets = [0, 48], sizes = [16, 16], strides = [1, 1]} : vector<16x64xf32> to vector<16x16xf32>
    %75 = vector.extract_strided_slice %49 {offsets = [0, 48], sizes = [16, 16], strides = [1, 1]} : vector<16x64xf32> to vector<16x16xf32>
    %76 = vector.shape_cast %74 : vector<16x16xf32> to vector<16x16x1xf32>
    %77 = vector.shape_cast %75 : vector<16x16xf32> to vector<16x1x16xf32>
    %78 = vector.broadcast %76 : vector<16x16x1xf32> to vector<16x16x16xf32>
    %79 = vector.broadcast %77 : vector<16x1x16xf32> to vector<16x16x16xf32>
    %80 = arith.mulf %78, %79 : vector<16x16x16xf32>
    %81 = arith.addf %73, %80 : vector<16x16x16xf32>
    %cst_30 = arith.constant 2.500000e-01 : f32
    %82 = vector.broadcast %cst_30 : f32 to vector<16x16x16xf32>
    %83 = arith.mulf %81, %82 : vector<16x16x16xf32>
    %cst_31 = arith.constant dense<0xFF800000> : vector<16x16xf32>
    %84 = vector.multi_reduction <maximumf>, %83, %cst_31 [2] : vector<16x16x16xf32> to vector<16x16xf32>
    %85 = vector.shape_cast %84 : vector<16x16xf32> to vector<16x16x1xf32>
    %86 = vector.broadcast %85 : vector<16x16x1xf32> to vector<16x16x16xf32>
    %87 = arith.subf %83, %86 : vector<16x16x16xf32>
    %88 = math.exp %87 : vector<16x16x16xf32>
    %cst_32 = arith.constant dense<0.000000e+00> : vector<16x16xf32>
    %89 = vector.multi_reduction <add>, %88, %cst_32 [2] : vector<16x16x16xf32> to vector<16x16xf32>
    %90 = vector.shape_cast %89 : vector<16x16xf32> to vector<16x16x1xf32>
    %91 = tpu.reciprocal %90 {approx = true} : vector<16x16x1xf32> -> vector<16x16x1xf32>
    %92 = vector.broadcast %91 : vector<16x16x1xf32> to vector<16x16x16xf32>
    %93 = arith.mulf %88, %92 : vector<16x16x16xf32>
    %94 = vector.extract_strided_slice %50 {offsets = [0, 0], sizes = [16, 16], strides = [1, 1]} : vector<16x64xf32> to vector<16x16xf32>
    %95 = vector.shape_cast %94 : vector<16x16xf32> to vector<16x1x16xf32>
    %96 = vector.broadcast %95 : vector<16x1x16xf32> to vector<16x16x16xf32>
    %97 = arith.mulf %93, %96 : vector<16x16x16xf32>
    %cst_33 = arith.constant dense<0.000000e+00> : vector<16x16xf32>
    %98 = vector.multi_reduction <add>, %97, %cst_33 [2] : vector<16x16x16xf32> to vector<16x16xf32>
    %99 = vector.extract_strided_slice %50 {offsets = [0, 16], sizes = [16, 16], strides = [1, 1]} : vector<16x64xf32> to vector<16x16xf32>
    %100 = vector.shape_cast %99 : vector<16x16xf32> to vector<16x1x16xf32>
    %101 = vector.broadcast %100 : vector<16x1x16xf32> to vector<16x16x16xf32>
    %102 = arith.mulf %93, %101 : vector<16x16x16xf32>
    %cst_34 = arith.constant dense<0.000000e+00> : vector<16x16xf32>
    %103 = vector.multi_reduction <add>, %102, %cst_34 [2] : vector<16x16x16xf32> to vector<16x16xf32>
    %104 = vector.extract_strided_slice %50 {offsets = [0, 32], sizes = [16, 16], strides = [1, 1]} : vector<16x64xf32> to vector<16x16xf32>
    %105 = vector.shape_cast %104 : vector<16x16xf32> to vector<16x1x16xf32>
    %106 = vector.broadcast %105 : vector<16x1x16xf32> to vector<16x16x16xf32>
    %107 = arith.mulf %93, %106 : vector<16x16x16xf32>
    %cst_35 = arith.constant dense<0.000000e+00> : vector<16x16xf32>
    %108 = vector.multi_reduction <add>, %107, %cst_35 [2] : vector<16x16x16xf32> to vector<16x16xf32>
    %109 = vector.extract_strided_slice %50 {offsets = [0, 48], sizes = [16, 16], strides = [1, 1]} : vector<16x64xf32> to vector<16x16xf32>
    %110 = vector.shape_cast %109 : vector<16x16xf32> to vector<16x1x16xf32>
    %111 = vector.broadcast %110 : vector<16x1x16xf32> to vector<16x16x16xf32>
    %112 = arith.mulf %93, %111 : vector<16x16x16xf32>
    %cst_36 = arith.constant dense<0.000000e+00> : vector<16x16xf32>
    %113 = vector.multi_reduction <add>, %112, %cst_36 [2] : vector<16x16x16xf32> to vector<16x16xf32>
    %114 = tpu.concatenate %98, %103, %108, %113 in 1 : vector<16x16xf32>, vector<16x16xf32>, vector<16x16xf32>, vector<16x16xf32> -> vector<16x64xf32>
    %115 = arith.truncf %114 : vector<16x64xf32> to vector<16x64xbf16>
    %cst_37 = arith.constant dense<0.000000e+00> : vector<16x64xf32>
    %116 = tpu.matmul %115, %9, %cst_37 {dimension_numbers = #tpu.dot_dimension_numbers<[1], [0], [0], [1], [0, 0, 1, 1], [], []>} : vector<16x64xbf16>, vector<64x64xbf16>, vector<16x64xf32> -> vector<16x64xf32>
    %117 = vector.broadcast %4 : vector<1x64xf32> to vector<16x64xf32>
    %118 = arith.addf %116, %117 : vector<16x64xf32>
    %119 = arith.mulf %118, %40 : vector<16x64xf32>
    %120 = arith.truncf %119 : vector<16x64xf32> to vector<16x64xbf16>
    %cst_38 = arith.constant dense<0.000000e+00> : vector<16x64xf32>
    %121 = tpu.matmul %120, %9, %cst_38 {dimension_numbers = #tpu.dot_dimension_numbers<[1], [0], [0], [1], [0, 0, 1, 1], [], []>} : vector<16x64xbf16>, vector<64x64xbf16>, vector<16x64xf32> -> vector<16x64xf32>
    %122 = vector.broadcast %4 : vector<1x64xf32> to vector<16x64xf32>
    %123 = arith.addf %121, %122 : vector<16x64xf32>
    %cst_39 = arith.constant dense<0.000000e+00> : vector<16xf32>
    %124 = vector.multi_reduction <add>, %123, %cst_39 [1] : vector<16x64xf32> to vector<16xf32>
    %125 = vector.shape_cast %124 : vector<16xf32> to vector<16x1xf32>
    %cst_40 = arith.constant 6.400000e+01 : f32
    %126 = vector.broadcast %cst_40 : f32 to vector<16x1xf32>
    %127 = arith.divf %125, %126 : vector<16x1xf32>
    %128 = vector.broadcast %127 : vector<16x1xf32> to vector<16x64xf32>
    %129 = arith.subf %123, %128 : vector<16x64xf32>
    %130 = arith.mulf %129, %129 : vector<16x64xf32>
    %cst_41 = arith.constant dense<0.000000e+00> : vector<16xf32>
    %131 = vector.multi_reduction <add>, %130, %cst_41 [1] : vector<16x64xf32> to vector<16xf32>
    %132 = vector.shape_cast %131 : vector<16xf32> to vector<16x1xf32>
    %cst_42 = arith.constant 6.400000e+01 : f32
    %133 = vector.broadcast %cst_42 : f32 to vector<16x1xf32>
    %134 = arith.divf %132, %133 : vector<16x1xf32>
    %135 = vector.broadcast %127 : vector<16x1xf32> to vector<16x64xf32>
    %136 = arith.subf %123, %135 : vector<16x64xf32>
    %cst_43 = arith.constant 9.99999996E-13 : f32
    %137 = vector.broadcast %cst_43 : f32 to vector<16x1xf32>
    %138 = arith.addf %134, %137 : vector<16x1xf32>
    %139 = math.rsqrt %138 : vector<16x1xf32>
    %140 = vector.broadcast %139 : vector<16x1xf32> to vector<16x64xf32>
    %141 = arith.mulf %136, %140 : vector<16x64xf32>
    %142 = arith.truncf %141 : vector<16x64xf32> to vector<16x64xbf16>
    %cst_44 = arith.constant dense<0.000000e+00> : vector<16x64xf32>
    %143 = tpu.matmul %142, %10, %cst_44 {dimension_numbers = #tpu.dot_dimension_numbers<[1], [0], [0], [1], [0, 0, 1, 1], [], []>} : vector<16x64xbf16>, vector<64x64xbf16>, vector<16x64xf32> -> vector<16x64xf32>
    %144 = vector.broadcast %7 : vector<1x64xf32> to vector<16x64xf32>
    %145 = arith.addf %143, %144 : vector<16x64xf32>
    %cst_45 = arith.constant 4.000000e+00 : f32
    %146 = vector.broadcast %cst_45 : f32 to vector<16x64xf32>
    %147 = arith.mulf %146, %38 : vector<16x64xf32>
    %148 = arith.subf %145, %147 : vector<16x64xf32>
    %149 = arith.addf %148, %14 : vector<16x64xf32>
    %150 = arith.truncf %149 : vector<16x64xf32> to vector<16x64xbf16>
    %cst_46 = arith.constant dense<0.000000e+00> : vector<16x64xf32>
    %151 = tpu.matmul %150, %11, %cst_46 {dimension_numbers = #tpu.dot_dimension_numbers<[1], [0], [0], [1], [0, 0, 1, 1], [], []>} : vector<16x64xbf16>, vector<64x64xbf16>, vector<16x64xf32> -> vector<16x64xf32>
    %152 = vector.broadcast %5 : vector<1x64xf32> to vector<16x64xf32>
    %153 = arith.addf %151, %152 : vector<16x64xf32>
    %154 = arith.mulf %36, %36 : vector<16x64xf32>
    %155 = arith.mulf %32, %32 : vector<16x64xf32>
    %156 = arith.mulf %154, %154 : vector<16x64xf32>
    %157 = arith.addf %155, %156 : vector<16x64xf32>
    %cst_47 = arith.constant 2.000000e+00 : f32
    %158 = vector.broadcast %cst_47 : f32 to vector<16x64xf32>
    %159 = arith.mulf %158, %33 : vector<16x64xf32>
    %160 = arith.subf %157, %159 : vector<16x64xf32>
    %cst_48 = arith.constant 1.000000e+00 : f32
    %161 = vector.broadcast %cst_48 : f32 to vector<16x64xf32>
    %162 = arith.subf %160, %161 : vector<16x64xf32>
    %cst_49 = arith.constant dense<0.000000e+00> : vector<16xf32>
    %163 = vector.multi_reduction <add>, %162, %cst_49 [1] : vector<16x64xf32> to vector<16xf32>
    %164 = vector.shape_cast %163 : vector<16xf32> to vector<16x1xf32>
    %cst_50 = arith.constant 5.000000e-01 : f32
    %165 = vector.broadcast %cst_50 : f32 to vector<16x1xf32>
    %166 = arith.mulf %165, %164 : vector<16x1xf32>
    %167 = vector.shape_cast %166 : vector<16x1xf32> to vector<16x1xf32>
    %168 = vector.broadcast %167 : vector<16x1xf32> to vector<16x64xf32>
    %169 = tpu.concatenate %153, %168 in 1 : vector<16x64xf32>, vector<16x64xf32> -> vector<16x128xf32>
    %c0_51 = arith.constant 0 : index
    %c0_52 = arith.constant 0 : index
    %170 = vector.load %arg8[%c0_51, %c0_52] : memref<16x128xf32, #tpu.memory_space<vmem>>, vector<16x128xf32>
    tpu.vector_store %arg8[%c0_51, %c0_52], %169 {strides = array<i32>} : memref<16x128xf32, #tpu.memory_space<vmem>>, vector<16x128xf32>,
    return
  }
  func.func @transform_0(%arg0: i32) -> (i32, i32) {
    %c0_i32 = arith.constant 0 : i32
    %c0_i32_0 = arith.constant 0 : i32
    return %arg0, %c0_i32 : i32, i32
  }
  func.func @transform_1(%arg0: i32) -> (i32, i32) {
    %c0_i32 = arith.constant 0 : i32
    %c0_i32_0 = arith.constant 0 : i32
    return %arg0, %c0_i32 : i32, i32
  }
  func.func @transform_2(%arg0: i32) -> (i32, i32) {
    %c0_i32 = arith.constant 0 : i32
    %c0_i32_0 = arith.constant 0 : i32
    return %arg0, %c0_i32 : i32, i32
  }
  func.func @transform_3(%arg0: i32) -> (i32, i32) {
    %c0_i32 = arith.constant 0 : i32
    %c0_i32_0 = arith.constant 0 : i32
    %c0_i32_1 = arith.constant 0 : i32
    return %c0_i32, %c0_i32_0 : i32, i32
  }
  func.func @transform_4(%arg0: i32) -> (i32, i32) {
    %c0_i32 = arith.constant 0 : i32
    %c0_i32_0 = arith.constant 0 : i32
    %c0_i32_1 = arith.constant 0 : i32
    return %c0_i32, %c0_i32_0 : i32, i32
  }
  func.func @transform_5(%arg0: i32) -> (i32, i32) {
    %c0_i32 = arith.constant 0 : i32
    %c0_i32_0 = arith.constant 0 : i32
    %c0_i32_1 = arith.constant 0 : i32
    return %c0_i32, %c0_i32_0 : i32, i32
  }
  func.func @transform_6(%arg0: i32) -> (i32, i32) {
    %c0_i32 = arith.constant 0 : i32
    %c0_i32_0 = arith.constant 0 : i32
    %c0_i32_1 = arith.constant 0 : i32
    return %c0_i32, %c0_i32_0 : i32, i32
  }
  func.func @transform_7(%arg0: i32) -> (i32, i32) {
    %c0_i32 = arith.constant 0 : i32
    %c0_i32_0 = arith.constant 0 : i32
    return %arg0, %c0_i32 : i32, i32
  }
}

</mosaic_0001>

<llo_original>
// kernel: atf_forward.1
$region0: #{atf_forward.1}
  #allocation0 [shape = 'u32[]', space=smem, size = 0x4, offset = 0x4, fixed_abs, tag = 'smem constant byte address 0x4 - core index']
  #allocation1 [shape = 'u32[72,128]{1,0:T(1,128)}', space=vmem, size = 0x9000, scoped, tag = 'internal scratch']
  %s0 = inlined_call_operand.vmem [shape: bf16[16,256], index: 0, kind: input, shape index: {}]
  %s1 = inlined_call_operand.vmem [shape: bf16[16,64], index: 1, kind: input, shape index: {}]
  %s2 = inlined_call_operand.vmem [shape: bf16[16,64], index: 2, kind: input, shape index: {}]
  %s3 = inlined_call_operand.vmem [shape: f32[8,128], index: 3, kind: input, shape index: {}]
  %s4 = inlined_call_operand.vmem [shape: bf16[256,64], index: 4, kind: input, shape index: {}]
  %s5 = inlined_call_operand.vmem [shape: bf16[128,128], index: 5, kind: input, shape index: {}]
  %s6 = inlined_call_operand.vmem [shape: bf16[256,64], index: 6, kind: input, shape index: {}]
  %s7 = inlined_call_operand.vmem [shape: f32[16,128], index: 7, kind: output, shape index: {}]
  %s8 = sld [smem:[#allocation0]]
  $region38: #{atf_forward.1} parent=0
    _
  %s10 = ssub.s32 1, %s8
  %s11 = scalar_select 0, %s10, %s8
  // Predicated region
  $region2: #{atf_forward.1} parent=0 // pred_check
    _
  $region3: #{atf_forward.1} parent=0 // pred_check_branch
    %13 = sbr.rel (0) target = $region5
  $region4: #{atf_forward.1} parent=0 // pred_region
    _
  $region5: #{atf_forward.1} parent=0 // pred_fallthru
    _
  // Predicated region
  $region6: #{atf_forward.1} parent=0 // pred_check
    _
  $region7: #{atf_forward.1} parent=0 // pred_check_branch
    %15 = sbr.rel (0) target = $region9
  $region8: #{atf_forward.1} parent=0 // pred_region
    _
  $region9: #{atf_forward.1} parent=0 // pred_fallthru
    _
  // Predicated region
  $region10: #{atf_forward.1} parent=0 // pred_check
    _
  $region11: #{atf_forward.1} parent=0 // pred_check_branch
    %17 = sbr.rel (0) target = $region13
  $region12: #{atf_forward.1} parent=0 // pred_region
    _
  $region13: #{atf_forward.1} parent=0 // pred_fallthru
    _
  // Predicated region
  $region14: #{atf_forward.1} parent=0 // pred_check
    _
  $region15: #{atf_forward.1} parent=0 // pred_check_branch
    %19 = sbr.rel (0) target = $region17
  $region16: #{atf_forward.1} parent=0 // pred_region
    _
  $region17: #{atf_forward.1} parent=0 // pred_fallthru
    _
  // Predicated region
  $region18: #{atf_forward.1} parent=0 // pred_check
    _
  $region19: #{atf_forward.1} parent=0 // pred_check_branch
    %21 = sbr.rel (0) target = $region21
  $region20: #{atf_forward.1} parent=0 // pred_region
    _
  $region21: #{atf_forward.1} parent=0 // pred_fallthru
    _
  // Predicated region
  $region22: #{atf_forward.1} parent=0 // pred_check
    _
  $region23: #{atf_forward.1} parent=0 // pred_check_branch
    %23 = sbr.rel (0) target = $region25
  $region24: #{atf_forward.1} parent=0 // pred_region
    _
  $region25: #{atf_forward.1} parent=0 // pred_fallthru
    _
  // Predicated region
  $region26: #{atf_forward.1} parent=0 // pred_check
    _
  $region27: #{atf_forward.1} parent=0 // pred_check_branch
    %25 = sbr.rel (0) target = $region29
  $region28: #{atf_forward.1} parent=0 // pred_region
    _
  $region29: #{atf_forward.1} parent=0 // pred_fallthru
    _
  %v27 = vld [vmem:[%s3] sm:$0x1]
  %v28 = vld [vmem:[%s3 + $0x1] sm:$0x1]
  %v29 = vld [vmem:[%s3 + $0x2] sm:$0x1]
  %v30 = vld [vmem:[%s3 + $0x3] sm:$0x1]
  %v31 = vld [vmem:[%s3 + $0x4] sm:$0x1]
  %v32 = vld [vmem:[%s3 + $0x5] sm:$0x1]
  %v33 = vld [vmem:[%s3 + $0x6] sm:$0x1]
  %v34 = vld [vmem:[%s3 + $0x7] sm:$0x1]
  %v35 = vld [vmem:[%s6] sm:$0xf]
  %v36 = vld [vmem:[%s6 + $0x4] sm:$0xf]
  %v37 = vld [vmem:[%s6 + $0x8] sm:$0xf]
  %v38 = vld [vmem:[%s6 + $0xc] sm:$0xf]
  %v39 = vld [vmem:[%s6 + $0x10] sm:$0xf]
  %v40 = vld [vmem:[%s6 + $0x14] sm:$0xf]
  %v41 = vld [vmem:[%s6 + $0x18] sm:$0xf]
  %v42 = vld [vmem:[%s6 + $0x1c] sm:$0xf]
  %v43 = vld [vmem:[%s6 + $0x20] sm:$0xf]
  %v44 = vld [vmem:[%s6 + $0x24] sm:$0xf]
  %v45 = vld [vmem:[%s6 + $0x28] sm:$0xf]
  %v46 = vld [vmem:[%s6 + $0x2c] sm:$0xf]
  %v47 = vld [vmem:[%s6 + $0x30] sm:$0xf]
  %v48 = vld [vmem:[%s6 + $0x34] sm:$0xf]
  %v49 = vld [vmem:[%s6 + $0x38] sm:$0xf]
  %v50 = vld [vmem:[%s6 + $0x3c] sm:$0xf]
  %v51 = vld [vmem:[%s6 + $0x40] sm:$0xf]
  %v52 = vld [vmem:[%s6 + $0x44] sm:$0xf]
  %v53 = vld [vmem:[%s6 + $0x48] sm:$0xf]
  %v54 = vld [vmem:[%s6 + $0x4c] sm:$0xf]
  %v55 = vld [vmem:[%s6 + $0x50] sm:$0xf]
  %v56 = vld [vmem:[%s6 + $0x54] sm:$0xf]
  %v57 = vld [vmem:[%s6 + $0x58] sm:$0xf]
  %v58 = vld [vmem:[%s6 + $0x5c] sm:$0xf]
  %v59 = vld [vmem:[%s6 + $0x60] sm:$0xf]
  %v60 = vld [vmem:[%s6 + $0x64] sm:$0xf]
  %v61 = vld [vmem:[%s6 + $0x68] sm:$0xf]
  %v62 = vld [vmem:[%s6 + $0x6c] sm:$0xf]
  %v63 = vld [vmem:[%s6 + $0x70] sm:$0xf]
  %v64 = vld [vmem:[%s6 + $0x74] sm:$0xf]
  %v65 = vld [vmem:[%s6 + $0x78] sm:$0xf]
  %v66 = vld [vmem:[%s6 + $0x7c] sm:$0xf]
  %v67 = vld [vmem:[%s0] sm:$0xff]
  %v68 = vld [vmem:[%s0 + $0x8] sm:$0xff]
  %v69 = vld [vmem:[%s1] sm:$0xf]
  %v70 = vld [vmem:[%s1 + $0x4] sm:$0xf]
  %v71 = vunpack.c.l.bf16 %v69
  %v72 = vunpack.c.l.bf16 %v70
  %v73 = vld [vmem:[%s2] sm:$0xf]
  %v74 = vld [vmem:[%s2 + $0x4] sm:$0xf]
  %v75 = vunpack.c.l.bf16 %v73
  %v76 = vunpack.c.l.bf16 %v74
  %v77 = vld [vmem:[%s4] sm:$0xf]
  %v78 = vld [vmem:[%s4 + $0x4] sm:$0xf]
  %v79 = vld [vmem:[%s4 + $0x8] sm:$0xf]
  %v80 = vld [vmem:[%s4 + $0xc] sm:$0xf]
  %v81 = vld [vmem:[%s4 + $0x10] sm:$0xf]
  %v82 = vld [vmem:[%s4 + $0x14] sm:$0xf]
  %v83 = vld [vmem:[%s4 + $0x18] sm:$0xf]
  %v84 = vld [vmem:[%s4 + $0x1c] sm:$0xf]
  %v85 = vld [vmem:[%s4 + $0x20] sm:$0xf]
  %v86 = vld [vmem:[%s4 + $0x24] sm:$0xf]
  %v87 = vld [vmem:[%s4 + $0x28] sm:$0xf]
  %v88 = vld [vmem:[%s4 + $0x2c] sm:$0xf]
  %v89 = vld [vmem:[%s4 + $0x30] sm:$0xf]
  %v90 = vld [vmem:[%s4 + $0x34] sm:$0xf]
  %v91 = vld [vmem:[%s4 + $0x38] sm:$0xf]
  %v92 = vld [vmem:[%s4 + $0x3c] sm:$0xf]
  %v93 = vld [vmem:[%s4 + $0x40] sm:$0xf]
  %v94 = vld [vmem:[%s4 + $0x44] sm:$0xf]
  %v95 = vld [vmem:[%s4 + $0x48] sm:$0xf]
  %v96 = vld [vmem:[%s4 + $0x4c] sm:$0xf]
  %v97 = vld [vmem:[%s4 + $0x50] sm:$0xf]
  %v98 = vld [vmem:[%s4 + $0x54] sm:$0xf]
  %v99 = vld [vmem:[%s4 + $0x58] sm:$0xf]
  %v100 = vld [vmem:[%s4 + $0x5c] sm:$0xf]
  %v101 = vld [vmem:[%s4 + $0x60] sm:$0xf]
  %v102 = vld [vmem:[%s4 + $0x64] sm:$0xf]
  %v103 = vld [vmem:[%s4 + $0x68] sm:$0xf]
  %v104 = vld [vmem:[%s4 + $0x6c] sm:$0xf]
  %v105 = vld [vmem:[%s4 + $0x70] sm:$0xf]
  %v106 = vld [vmem:[%s4 + $0x74] sm:$0xf]
  %v107 = vld [vmem:[%s4 + $0x78] sm:$0xf]
  %v108 = vld [vmem:[%s4 + $0x7c] sm:$0xf]
  %v109 = vperm.slane %v27, 0
  %v112 = vunpack.c.l.b16 %v67
  %v113 = vunpack.c.h.b16 %v67
  %v114 = vunpack.c.l.b16 %v68
  %v115 = vunpack.c.h.b16 %v68
  %v116 = vpack.c.b16 %v114, %v112
  %v117 = vpack.c.b16 %v115, %v113
  %v152 = vunpack.c.l.b16 %v77
  %v153 = vunpack.c.l.b16 %v78
  %v154 = vunpack.c.l.b16 %v79
  %v155 = vunpack.c.l.b16 %v80
  %v156 = vunpack.c.l.b16 %v81
  %v157 = vunpack.c.l.b16 %v82
  %v158 = vunpack.c.l.b16 %v83
  %v159 = vunpack.c.l.b16 %v84
  %v160 = vunpack.c.l.b16 %v85
  %v161 = vunpack.c.l.b16 %v86
  %v162 = vunpack.c.l.b16 %v87
  %v163 = vunpack.c.l.b16 %v88
  %v164 = vunpack.c.l.b16 %v89
  %v165 = vunpack.c.l.b16 %v90
  %v166 = vunpack.c.l.b16 %v91
  %v167 = vunpack.c.l.b16 %v92
  %v168 = vunpack.c.l.b16 %v93
  %v169 = vunpack.c.l.b16 %v94
  %v170 = vunpack.c.l.b16 %v95
  %v171 = vunpack.c.l.b16 %v96
  %v172 = vunpack.c.l.b16 %v97
  %v173 = vunpack.c.l.b16 %v98
  %v174 = vunpack.c.l.b16 %v99
  %v175 = vunpack.c.l.b16 %v100
  %v176 = vunpack.c.l.b16 %v101
  %v177 = vunpack.c.l.b16 %v102
  %v178 = vunpack.c.l.b16 %v103
  %v179 = vunpack.c.l.b16 %v104
  %v180 = vunpack.c.l.b16 %v105
  %v181 = vunpack.c.l.b16 %v106
  %v182 = vunpack.c.l.b16 %v107
  %v183 = vunpack.c.l.b16 %v108
  %v184 = vpack.c.b16 %v153, %v152
  %v185 = vpack.c.b16 %v155, %v154
  %v186 = vpack.c.b16 %v157, %v156
  %v187 = vpack.c.b16 %v159, %v158
  %v188 = vpack.c.b16 %v161, %v160
  %v189 = vpack.c.b16 %v163, %v162
  %v190 = vpack.c.b16 %v165, %v164
  %v191 = vpack.c.b16 %v167, %v166
  %v192 = vpack.c.b16 %v169, %v168
  %v193 = vpack.c.b16 %v171, %v170
  %v194 = vpack.c.b16 %v173, %v172
  %v195 = vpack.c.b16 %v175, %v174
  %v196 = vpack.c.b16 %v177, %v176
  %v197 = vpack.c.b16 %v179, %v178
  %v198 = vpack.c.b16 %v181, %v180
  %v199 = vpack.c.b16 %v183, %v182
  %216 = vmatpush.bf16.msra.mxu0 %v191
  %217 = vmatpush.bf16.msra.mxu0 %v190
  %218 = vmatpush.bf16.msra.mxu0 %v189
  %219 = vmatpush.bf16.msra.mxu0 %v188
  %220 = vmatpush.bf16.msra.mxu0 %v187
  %221 = vmatpush.bf16.msra.mxu0 %v186
  %222 = vmatpush.bf16.msra.mxu0 %v185
  %223 = vmatpush.bf16.msra.mxu0 %v184
  %224 = vmatmul.bf16.gmra.mxu0 %v116
  %v225 = vpop.f32.mrf.mxu0
  %v226 = vadd.f32 %v109, %v225
  %v227 = vpop.f32.mrf.mxu0
  %v228 = vadd.f32 %v109, %v227
  %229 = vdwg.mxu0
  %230 = vmatpush.bf16.msra.mxu0 %v199
  %231 = vmatpush.bf16.msra.mxu0 %v198
  %232 = vmatpush.bf16.msra.mxu0 %v197
  %233 = vmatpush.bf16.msra.mxu0 %v196
  %234 = vmatpush.bf16.msra.mxu0 %v195
  %235 = vmatpush.bf16.msra.mxu0 %v194
  %236 = vmatpush.bf16.msra.mxu0 %v193
  %237 = vmatpush.bf16.msra.mxu0 %v192
  %238 = vmatmul.bf16.gmra.mxu0 %v117
  %v239 = vpop.f32.mrf.mxu0
  %v240 = vadd.f32 %v226, %v239
  %v241 = vpop.f32.mrf.mxu0
  %v242 = vadd.f32 %v228, %v241
  %243 = vdwg.mxu0
  %v244 = vxor.u32 %v240, 2147483648
  %v245 = vxor.u32 %v242, 2147483648
  %v246 = vmul.f32 %v244, 1.442695
  %v247 = vpow.pop %v246
  %v248 = vmul.f32 %v245, 1.442695
  %v249 = vpow.pop %v248
  %v250 = vadd.f32 %v247, 1.0
  %v251 = vadd.f32 %v249, 1.0
  %v252 = vrcp.pop %v250
  %v253 = vmul.f32 %v250, %v252
  %v254 = vsub.f32 1.0, %v253
  %v255 = vmul.f32 %v252, %v254
  %v256 = vadd.f32 %v252, %v255
  %vm257 = vweird.f32 %v250
  %vm258 = vweird.f32 %v252
  %vm259 = vmor %vm257, %vm258
  %v260 = vsel %vm259, %v252, %v256
  %v261 = vand.u32 2147483647, %v250
  %vm262 = vcmp.eq.f32.partialorder %v261, 8.507059e+37
  %v263 = vand.u32 %v250, 2147483648
  %v264 = vor.u32 1.1754944e-38, %v263
  %v265 = vsel %vm262, %v264, %v260
  %v266 = vmul.f32 1.0, %v265
  %v267 = vrcp.pop %v251
  %v268 = vmul.f32 %v251, %v267
  %v269 = vsub.f32 1.0, %v268
  %v270 = vmul.f32 %v267, %v269
  %v271 = vadd.f32 %v267, %v270
  %vm272 = vweird.f32 %v251
  %vm273 = vweird.f32 %v267
  %vm274 = vmor %vm272, %vm273
  %v275 = vsel %vm274, %v267, %v271
  %v276 = vand.u32 2147483647, %v251
  %vm277 = vcmp.eq.f32.partialorder %v276, 8.507059e+37
  %v278 = vand.u32 %v251, 2147483648
  %v279 = vor.u32 1.1754944e-38, %v278
  %v280 = vsel %vm277, %v279, %v275
  %v281 = vmul.f32 1.0, %v280
  %v282 = vmul.f32 %v240, %v266
  %v283 = vmul.f32 %v242, %v281
  %v284 = vld [vmem:[%s5] sm:$0xf]
  %v285 = vld [vmem:[%s5 + $0x4] sm:$0xf]
  %v286 = vld [vmem:[%s5 + $0x8] sm:$0xf]
  %v287 = vld [vmem:[%s5 + $0xc] sm:$0xf]
  %v288 = vld [vmem:[%s5 + $0x10] sm:$0xf]
  %v289 = vld [vmem:[%s5 + $0x14] sm:$0xf]
  %v290 = vld [vmem:[%s5 + $0x18] sm:$0xf]
  %v291 = vld [vmem:[%s5 + $0x1c] sm:$0xf]
  %v292 = vpack.c.bf16 %v283, %v282
  %v293 = vperm.slane %v28, 0
  %v302 = vunpack.c.l.b16 %v284
  %v303 = vunpack.c.l.b16 %v285
  %v304 = vunpack.c.l.b16 %v286
  %v305 = vunpack.c.l.b16 %v287
  %v306 = vunpack.c.l.b16 %v288
  %v307 = vunpack.c.l.b16 %v289
  %v308 = vunpack.c.l.b16 %v290
  %v309 = vunpack.c.l.b16 %v291
  %v310 = vpack.c.b16 %v303, %v302
  %v311 = vpack.c.b16 %v305, %v304
  %v312 = vpack.c.b16 %v307, %v306
  %v313 = vpack.c.b16 %v309, %v308
  %vm318 = vcmask 523264
  %v320 = vsel %vm318, %v292, 0
  %322 = vmatpush.bf16.msra.mxu0 0
  %323 = vmatpush.bf16.msra.mxu0 0
  %324 = vmatpush.bf16.msra.mxu0 0
  %325 = vmatpush.bf16.msra.mxu0 0
  %326 = vmatpush.bf16.msra.mxu0 %v313
  %327 = vmatpush.bf16.msra.mxu0 %v312
  %328 = vmatpush.bf16.msra.mxu0 %v311
  %329 = vmatpush.bf16.msra.mxu0 %v310
  %330 = vmatmul.bf16.gmra.mxu0 %v320
  %v331 = vpop.f32.mrf.mxu0
  %v332 = vadd.f32 %v293, %v331
  %v333 = vpop.f32.mrf.mxu0
  %v334 = vadd.f32 %v293, %v333
  %335 = vdwg.mxu0
  %v336 = vmul.f32 %v332, 0.5
  %v337 = vmul.f32 %v334, 0.5
  %v338 = vmul.f32 %v336, 1.442695
  %v339 = vpow.pop %v338
  %v340 = vmul.f32 %v337, 1.442695
  %v341 = vpow.pop %v340
  %344 = vrot.lane.b32.xlu0 %v75, 64
  %v345 = vpop.permute.xlu0 %344
  %346 = vrot.lane.b32.xlu0 %v76, 64
  %v347 = vpop.permute.xlu0 %346
  %v350 = vmul.f32 %v339, %v345
  %v351 = vmul.f32 %v341, %v347
  %354 = vrot.lane.b32.xlu0 %v350, 64
  %v355 = vpop.permute.xlu0 %354
  %356 = vrot.lane.b32.xlu0 %v351, 64
  %v357 = vpop.permute.xlu0 %356
  %v360 = vadd.f32 %v332, %v355
  %v361 = vadd.f32 %v334, %v357
  %v362 = vperm.slane %v33, 0
  %v363 = vmul.f32 %v360, %v362
  %v364 = vmul.f32 %v361, %v362
  %v365 = vpack.c.bf16 %v364, %v363
  %v366 = vperm.slane %v29, 0
  %v375 = vunpack.c.l.b16 %v35
  %v376 = vunpack.c.l.b16 %v36
  %v377 = vunpack.c.l.b16 %v37
  %v378 = vunpack.c.l.b16 %v38
  %v379 = vunpack.c.l.b16 %v39
  %v380 = vunpack.c.l.b16 %v40
  %v381 = vunpack.c.l.b16 %v41
  %v382 = vunpack.c.l.b16 %v42
  %v383 = vpack.c.b16 %v376, %v375
  %v384 = vpack.c.b16 %v378, %v377
  %v385 = vpack.c.b16 %v380, %v379
  %v386 = vpack.c.b16 %v382, %v381
  %v392 = vsel %vm318, %v365, 0
  %394 = vmatpush.bf16.msra.mxu0 0
  %395 = vmatpush.bf16.msra.mxu0 0
  %396 = vmatpush.bf16.msra.mxu0 0
  %397 = vmatpush.bf16.msra.mxu0 0
  %398 = vmatpush.bf16.msra.mxu0 %v386
  %399 = vmatpush.bf16.msra.mxu0 %v385
  %400 = vmatpush.bf16.msra.mxu0 %v384
  %401 = vmatpush.bf16.msra.mxu0 %v383
  %402 = vmatmul.bf16.gmra.mxu0 %v392
  %v403 = vpop.f32.mrf.mxu0
  %v404 = vadd.f32 %v366, %v403
  %v405 = vpop.f32.mrf.mxu0
  %v406 = vadd.f32 %v366, %v405
  %407 = vdwg.mxu0
  %v408 = vld [vmem:[%s5 + $0x20] sm:$0xf]
  %v409 = vld [vmem:[%s5 + $0x24] sm:$0xf]
  %v410 = vld [vmem:[%s5 + $0x28] sm:$0xf]
  %v411 = vld [vmem:[%s5 + $0x2c] sm:$0xf]
  %v412 = vld [vmem:[%s5 + $0x30] sm:$0xf]
  %v413 = vld [vmem:[%s5 + $0x34] sm:$0xf]
  %v414 = vld [vmem:[%s5 + $0x38] sm:$0xf]
  %v415 = vld [vmem:[%s5 + $0x3c] sm:$0xf]
  %v416 = vperm.slane %v30, 0
  %v419 = vunpack.c.l.b16 %v69
  %v420 = vunpack.c.l.b16 %v70
  %v421 = vpack.c.b16 %v420, %v419
  %v430 = vunpack.c.l.b16 %v408
  %v431 = vunpack.c.l.b16 %v409
  %v432 = vunpack.c.l.b16 %v410
  %v433 = vunpack.c.l.b16 %v411
  %v434 = vunpack.c.l.b16 %v412
  %v435 = vunpack.c.l.b16 %v413
  %v436 = vunpack.c.l.b16 %v414
  %v437 = vunpack.c.l.b16 %v415
  %v438 = vpack.c.b16 %v431, %v430
  %v439 = vpack.c.b16 %v433, %v432
  %v440 = vpack.c.b16 %v435, %v434
  %v441 = vpack.c.b16 %v437, %v436
  %v447 = vsel %vm318, %v421, 0
  %449 = vmatpush.bf16.msra.mxu0 0
  %450 = vmatpush.bf16.msra.mxu0 0
  %451 = vmatpush.bf16.msra.mxu0 0
  %452 = vmatpush.bf16.msra.mxu0 0
  %453 = vmatpush.bf16.msra.mxu0 %v441
  %454 = vmatpush.bf16.msra.mxu0 %v440
  %455 = vmatpush.bf16.msra.mxu0 %v439
  %456 = vmatpush.bf16.msra.mxu0 %v438
  %457 = vmatmul.bf16.gmra.mxu0 %v447
  %v458 = vpop.f32.mrf.mxu0
  %v459 = vadd.f32 %v416, %v458
  %v460 = vpop.f32.mrf.mxu0
  %v461 = vadd.f32 %v416, %v460
  %462 = vdwg.mxu0
  %v463 = vperm.slane %v404, 0
  %v464 = vlaneseq
  %v465 = vshrl.u32 %v464, 7
  %467 = vset.pattern.permute.xlu0 %v465
  %468 = vperm.xlu0 %467, %v463
  %v469 = vpop.permute.xlu0 %468
  %v470 = vlaneseq
  %v471 = vshrl.u32 %v470, 7
  %v472 = vadd.s32 %v471, 8
  %473 = vset.pattern.permute.xlu0 %v472
  %474 = vperm.xlu0 %473, %v463
  %v475 = vpop.permute.xlu0 %474
  %v476 = vperm.slane %v404, 1
  %v477 = vlaneseq
  %v478 = vshrl.u32 %v477, 7
  %480 = vset.pattern.permute.xlu0 %v478
  %481 = vperm.xlu0 %480, %v476
  %v482 = vpop.permute.xlu0 %481
  %v483 = vlaneseq
  %v484 = vshrl.u32 %v483, 7
  %v485 = vadd.s32 %v484, 8
  %486 = vset.pattern.permute.xlu0 %v485
  %487 = vperm.xlu0 %486, %v476
  %v488 = vpop.permute.xlu0 %487
  %v489 = vperm.slane %v404, 2
  %v490 = vlaneseq
  %v491 = vshrl.u32 %v490, 7
  %493 = vset.pattern.permute.xlu0 %v491
  %494 = vperm.xlu0 %493, %v489
  %v495 = vpop.permute.xlu0 %494
  %v496 = vlaneseq
  %v497 = vshrl.u32 %v496, 7
  %v498 = vadd.s32 %v497, 8
  %499 = vset.pattern.permute.xlu0 %v498
  %500 = vperm.xlu0 %499, %v489
  %v501 = vpop.permute.xlu0 %500
  %v502 = vperm.slane %v404, 3
  %v503 = vlaneseq
  %v504 = vshrl.u32 %v503, 7
  %506 = vset.pattern.permute.xlu0 %v504
  %507 = vperm.xlu0 %506, %v502
  %v508 = vpop.permute.xlu0 %507
  %v509 = vlaneseq
  %v510 = vshrl.u32 %v509, 7
  %v511 = vadd.s32 %v510, 8
  %512 = vset.pattern.permute.xlu0 %v511
  %513 = vperm.xlu0 %512, %v502
  %v514 = vpop.permute.xlu0 %513
  %v515 = vperm.slane %v404, 4
  %v516 = vlaneseq
  %v517 = vshrl.u32 %v516, 7
  %519 = vset.pattern.permute.xlu0 %v517
  %520 = vperm.xlu0 %519, %v515
  %v521 = vpop.permute.xlu0 %520
  %v522 = vlaneseq
  %v523 = vshrl.u32 %v522, 7
  %v524 = vadd.s32 %v523, 8
  %525 = vset.pattern.permute.xlu0 %v524
  %526 = vperm.xlu0 %525, %v515
  %v527 = vpop.permute.xlu0 %526
  %v528 = vperm.slane %v404, 5
  %v529 = vlaneseq
  %v530 = vshrl.u32 %v529, 7
  %532 = vset.pattern.permute.xlu0 %v530
  %533 = vperm.xlu0 %532, %v528
  %v534 = vpop.permute.xlu0 %533
  %v535 = vlaneseq
  %v536 = vshrl.u32 %v535, 7
  %v537 = vadd.s32 %v536, 8
  %538 = vset.pattern.permute.xlu0 %v537
  %539 = vperm.xlu0 %538, %v528
  %v540 = vpop.permute.xlu0 %539
  %v541 = vperm.slane %v404, 6
  %v542 = vlaneseq
  %v543 = vshrl.u32 %v542, 7
  %545 = vset.pattern.permute.xlu0 %v543
  %546 = vperm.xlu0 %545, %v541
  %v547 = vpop.permute.xlu0 %546
  %v548 = vlaneseq
  %v549 = vshrl.u32 %v548, 7
  %v550 = vadd.s32 %v549, 8
  %551 = vset.pattern.permute.xlu0 %v550
  %552 = vperm.xlu0 %551, %v541
  %v553 = vpop.permute.xlu0 %552
  %v554 = vperm.slane %v404, 7
  %v555 = vlaneseq
  %v556 = vshrl.u32 %v555, 7
  %558 = vset.pattern.permute.xlu0 %v556
  %559 = vperm.xlu0 %558, %v554
  %v560 = vpop.permute.xlu0 %559
  %v561 = vlaneseq
  %v562 = vshrl.u32 %v561, 7
  %v563 = vadd.s32 %v562, 8
  %564 = vset.pattern.permute.xlu0 %v563
  %565 = vperm.xlu0 %564, %v554
  %v566 = vpop.permute.xlu0 %565
  %v567 = vperm.slane %v406, 0
  %v568 = vlaneseq
  %v569 = vshrl.u32 %v568, 7
  %571 = vset.pattern.permute.xlu0 %v569
  %572 = vperm.xlu0 %571, %v567
  %v573 = vpop.permute.xlu0 %572
  %v574 = vlaneseq
  %v575 = vshrl.u32 %v574, 7
  %v576 = vadd.s32 %v575, 8
  %577 = vset.pattern.permute.xlu0 %v576
  %578 = vperm.xlu0 %577, %v567
  %v579 = vpop.permute.xlu0 %578
  %v580 = vperm.slane %v406, 1
  %v581 = vlaneseq
  %v582 = vshrl.u32 %v581, 7
  %584 = vset.pattern.permute.xlu0 %v582
  %585 = vperm.xlu0 %584, %v580
  %v586 = vpop.permute.xlu0 %585
  %v587 = vlaneseq
  %v588 = vshrl.u32 %v587, 7
  %v589 = vadd.s32 %v588, 8
  %590 = vset.pattern.permute.xlu0 %v589
  %591 = vperm.xlu0 %590, %v580
  %v592 = vpop.permute.xlu0 %591
  %v593 = vperm.slane %v406, 2
  %v594 = vlaneseq
  %v595 = vshrl.u32 %v594, 7
  %597 = vset.pattern.permute.xlu0 %v595
  %598 = vperm.xlu0 %597, %v593
  %v599 = vpop.permute.xlu0 %598
  %v600 = vlaneseq
  %v601 = vshrl.u32 %v600, 7
  %v602 = vadd.s32 %v601, 8
  %603 = vset.pattern.permute.xlu0 %v602
  %604 = vperm.xlu0 %603, %v593
  %v605 = vpop.permute.xlu0 %604
  %v606 = vperm.slane %v406, 3
  %v607 = vlaneseq
  %v608 = vshrl.u32 %v607, 7
  %610 = vset.pattern.permute.xlu0 %v608
  %611 = vperm.xlu0 %610, %v606
  %v612 = vpop.permute.xlu0 %611
  %v613 = vlaneseq
  %v614 = vshrl.u32 %v613, 7
  %v615 = vadd.s32 %v614, 8
  %616 = vset.pattern.permute.xlu0 %v615
  %617 = vperm.xlu0 %616, %v606
  %v618 = vpop.permute.xlu0 %617
  %v619 = vperm.slane %v406, 4
  %v620 = vlaneseq
  %v621 = vshrl.u32 %v620, 7
  %623 = vset.pattern.permute.xlu0 %v621
  %624 = vperm.xlu0 %623, %v619
  %v625 = vpop.permute.xlu0 %624
  %v626 = vlaneseq
  %v627 = vshrl.u32 %v626, 7
  %v628 = vadd.s32 %v627, 8
  %629 = vset.pattern.permute.xlu0 %v628
  %630 = vperm.xlu0 %629, %v619
  %v631 = vpop.permute.xlu0 %630
  %v632 = vperm.slane %v406, 5
  %v633 = vlaneseq
  %v634 = vshrl.u32 %v633, 7
  %636 = vset.pattern.permute.xlu0 %v634
  %637 = vperm.xlu0 %636, %v632
  %v638 = vpop.permute.xlu0 %637
  %v639 = vlaneseq
  %v640 = vshrl.u32 %v639, 7
  %v641 = vadd.s32 %v640, 8
  %642 = vset.pattern.permute.xlu0 %v641
  %643 = vperm.xlu0 %642, %v632
  %v644 = vpop.permute.xlu0 %643
  %v645 = vperm.slane %v406, 6
  %v646 = vlaneseq
  %v647 = vshrl.u32 %v646, 7
  %649 = vset.pattern.permute.xlu0 %v647
  %650 = vperm.xlu0 %649, %v645
  %v651 = vpop.permute.xlu0 %650
  %v652 = vlaneseq
  %v653 = vshrl.u32 %v652, 7
  %v654 = vadd.s32 %v653, 8
  %655 = vset.pattern.permute.xlu0 %v654
  %656 = vperm.xlu0 %655, %v645
  %v657 = vpop.permute.xlu0 %656
  %v658 = vperm.slane %v406, 7
  %v659 = vlaneseq
  %v660 = vshrl.u32 %v659, 7
  %662 = vset.pattern.permute.xlu0 %v660
  %663 = vperm.xlu0 %662, %v658
  %v664 = vpop.permute.xlu0 %663
  %v665 = vlaneseq
  %v666 = vshrl.u32 %v665, 7
  %v667 = vadd.s32 %v666, 8
  %668 = vset.pattern.permute.xlu0 %v667
  %669 = vperm.xlu0 %668, %v658
  %v670 = vpop.permute.xlu0 %669
  %v673 = vrot.slane %v459, 1
  %v674 = vrot.slane %v459, 2
  %v675 = vrot.slane %v459, 3
  %v676 = vrot.slane %v459, 4
  %v677 = vrot.slane %v459, 5
  %v678 = vrot.slane %v459, 6
  %v679 = vrot.slane %v459, 7
  %v680 = vrot.slane %v461, 1
  %v681 = vrot.slane %v461, 2
  %v682 = vrot.slane %v461, 3
  %v683 = vrot.slane %v461, 4
  %v684 = vrot.slane %v461, 5
  %v685 = vrot.slane %v461, 6
  %v686 = vrot.slane %v461, 7
  %v687 = vperm.slane %v459, 0
  %v688 = vperm.slane %v673, 0
  %v689 = vperm.slane %v674, 0
  %v690 = vperm.slane %v675, 0
  %v691 = vperm.slane %v676, 0
  %v692 = vperm.slane %v677, 0
  %v693 = vperm.slane %v678, 0
  %v694 = vperm.slane %v679, 0
  %v695 = vperm.slane %v461, 0
  %v696 = vperm.slane %v680, 0
  %v697 = vperm.slane %v681, 0
  %v698 = vperm.slane %v682, 0
  %v699 = vperm.slane %v683, 0
  %v700 = vperm.slane %v684, 0
  %v701 = vperm.slane %v685, 0
  %v702 = vperm.slane %v686, 0
  %v719 = vmul.f32 %v469, %v687
  %v720 = vmul.f32 %v475, %v687
  %v721 = vmul.f32 %v482, %v688
  %v722 = vmul.f32 %v488, %v688
  %v723 = vmul.f32 %v495, %v689
  %v724 = vmul.f32 %v501, %v689
  %v725 = vmul.f32 %v508, %v690
  %v726 = vmul.f32 %v514, %v690
  %v727 = vmul.f32 %v521, %v691
  %v728 = vmul.f32 %v527, %v691
  %v729 = vmul.f32 %v534, %v692
  %v730 = vmul.f32 %v540, %v692
  %v731 = vmul.f32 %v547, %v693
  %v732 = vmul.f32 %v553, %v693
  %v733 = vmul.f32 %v560, %v694
  %v734 = vmul.f32 %v566, %v694
  %v735 = vmul.f32 %v573, %v695
  %v736 = vmul.f32 %v579, %v695
  %v737 = vmul.f32 %v586, %v696
  %v738 = vmul.f32 %v592, %v696
  %v739 = vmul.f32 %v599, %v697
  %v740 = vmul.f32 %v605, %v697
  %v741 = vmul.f32 %v612, %v698
  %v742 = vmul.f32 %v618, %v698
  %v743 = vmul.f32 %v625, %v699
  %v744 = vmul.f32 %v631, %v699
  %v745 = vmul.f32 %v638, %v700
  %v746 = vmul.f32 %v644, %v700
  %v747 = vmul.f32 %v651, %v701
  %v748 = vmul.f32 %v657, %v701
  %v749 = vmul.f32 %v664, %v702
  %v750 = vmul.f32 %v670, %v702
  %v751 = vlaneseq
  %v752 = vshrl.u32 %v751, 7
  %v753 = vadd.s32 %v752, 16
  %754 = vset.pattern.permute.xlu0 %v753
  %755 = vperm.xlu0 %754, %v463
  %v756 = vpop.permute.xlu0 %755
  %v757 = vlaneseq
  %v758 = vshrl.u32 %v757, 7
  %v759 = vadd.s32 %v758, 24
  %760 = vset.pattern.permute.xlu0 %v759
  %761 = vperm.xlu0 %760, %v463
  %v762 = vpop.permute.xlu0 %761
  %v763 = vlaneseq
  %v764 = vshrl.u32 %v763, 7
  %v765 = vadd.s32 %v764, 16
  %766 = vset.pattern.permute.xlu0 %v765
  %767 = vperm.xlu0 %766, %v476
  %v768 = vpop.permute.xlu0 %767
  %v769 = vlaneseq
  %v770 = vshrl.u32 %v769, 7
  %v771 = vadd.s32 %v770, 24
  %772 = vset.pattern.permute.xlu0 %v771
  %773 = vperm.xlu0 %772, %v476
  %v774 = vpop.permute.xlu0 %773
  %v775 = vlaneseq
  %v776 = vshrl.u32 %v775, 7
  %v777 = vadd.s32 %v776, 16
  %778 = vset.pattern.permute.xlu0 %v777
  %779 = vperm.xlu0 %778, %v489
  %v780 = vpop.permute.xlu0 %779
  %v781 = vlaneseq
  %v782 = vshrl.u32 %v781, 7
  %v783 = vadd.s32 %v782, 24
  %784 = vset.pattern.permute.xlu0 %v783
  %785 = vperm.xlu0 %784, %v489
  %v786 = vpop.permute.xlu0 %785
  %v787 = vlaneseq
  %v788 = vshrl.u32 %v787, 7
  %v789 = vadd.s32 %v788, 16
  %790 = vset.pattern.permute.xlu0 %v789
  %791 = vperm.xlu0 %790, %v502
  %v792 = vpop.permute.xlu0 %791
  %v793 = vlaneseq
  %v794 = vshrl.u32 %v793, 7
  %v795 = vadd.s32 %v794, 24
  %796 = vset.pattern.permute.xlu0 %v795
  %797 = vperm.xlu0 %796, %v502
  %v798 = vpop.permute.xlu0 %797
  %v799 = vlaneseq
  %v800 = vshrl.u32 %v799, 7
  %v801 = vadd.s32 %v800, 16
  %802 = vset.pattern.permute.xlu0 %v801
  %803 = vperm.xlu0 %802, %v515
  %v804 = vpop.permute.xlu0 %803
  %v805 = vlaneseq
  %v806 = vshrl.u32 %v805, 7
  %v807 = vadd.s32 %v806, 24
  %808 = vset.pattern.permute.xlu0 %v807
  %809 = vperm.xlu0 %808, %v515
  %v810 = vpop.permute.xlu0 %809
  %v811 = vlaneseq
  %v812 = vshrl.u32 %v811, 7
  %v813 = vadd.s32 %v812, 16
  %814 = vset.pattern.permute.xlu0 %v813
  %815 = vperm.xlu0 %814, %v528
  %v816 = vpop.permute.xlu0 %815
  %v817 = vlaneseq
  %v818 = vshrl.u32 %v817, 7
  %v819 = vadd.s32 %v818, 24
  %820 = vset.pattern.permute.xlu0 %v819
  %821 = vperm.xlu0 %820, %v528
  %v822 = vpop.permute.xlu0 %821
  %v823 = vlaneseq
  %v824 = vshrl.u32 %v823, 7
  %v825 = vadd.s32 %v824, 16
  %826 = vset.pattern.permute.xlu0 %v825
  %827 = vperm.xlu0 %826, %v541
  %v828 = vpop.permute.xlu0 %827
  %v829 = vlaneseq
  %v830 = vshrl.u32 %v829, 7
  %v831 = vadd.s32 %v830, 24
  %832 = vset.pattern.permute.xlu0 %v831
  %833 = vperm.xlu0 %832, %v541
  %v834 = vpop.permute.xlu0 %833
  %v835 = vlaneseq
  %v836 = vshrl.u32 %v835, 7
  %v837 = vadd.s32 %v836, 16
  %838 = vset.pattern.permute.xlu0 %v837
  %839 = vperm.xlu0 %838, %v554
  %v840 = vpop.permute.xlu0 %839
  %v841 = vlaneseq
  %v842 = vshrl.u32 %v841, 7
  %v843 = vadd.s32 %v842, 24
  %844 = vset.pattern.permute.xlu0 %v843
  %845 = vperm.xlu0 %844, %v554
  %v846 = vpop.permute.xlu0 %845
  %v847 = vlaneseq
  %v848 = vshrl.u32 %v847, 7
  %v849 = vadd.s32 %v848, 16
  %850 = vset.pattern.permute.xlu0 %v849
  %851 = vperm.xlu0 %850, %v567
  %v852 = vpop.permute.xlu0 %851
  %v853 = vlaneseq
  %v854 = vshrl.u32 %v853, 7
  %v855 = vadd.s32 %v854, 24
  %856 = vset.pattern.permute.xlu0 %v855
  %857 = vperm.xlu0 %856, %v567
  %v858 = vpop.permute.xlu0 %857
  %v859 = vlaneseq
  %v860 = vshrl.u32 %v859, 7
  %v861 = vadd.s32 %v860, 16
  %862 = vset.pattern.permute.xlu0 %v861
  %863 = vperm.xlu0 %862, %v580
  %v864 = vpop.permute.xlu0 %863
  %v865 = vlaneseq
  %v866 = vshrl.u32 %v865, 7
  %v867 = vadd.s32 %v866, 24
  %868 = vset.pattern.permute.xlu0 %v867
  %869 = vperm.xlu0 %868, %v580
  %v870 = vpop.permute.xlu0 %869
  %v871 = vlaneseq
  %v872 = vshrl.u32 %v871, 7
  %v873 = vadd.s32 %v872, 16
  %874 = vset.pattern.permute.xlu0 %v873
  %875 = vperm.xlu0 %874, %v593
  %v876 = vpop.permute.xlu0 %875
  %v877 = vlaneseq
  %v878 = vshrl.u32 %v877, 7
  %v879 = vadd.s32 %v878, 24
  %880 = vset.pattern.permute.xlu0 %v879
  %881 = vperm.xlu0 %880, %v593
  %v882 = vpop.permute.xlu0 %881
  %v883 = vlaneseq
  %v884 = vshrl.u32 %v883, 7
  %v885 = vadd.s32 %v884, 16
  %886 = vset.pattern.permute.xlu0 %v885
  %887 = vperm.xlu0 %886, %v606
  %v888 = vpop.permute.xlu0 %887
  %v889 = vlaneseq
  %v890 = vshrl.u32 %v889, 7
  %v891 = vadd.s32 %v890, 24
  %892 = vset.pattern.permute.xlu0 %v891
  %893 = vperm.xlu0 %892, %v606
  %v894 = vpop.permute.xlu0 %893
  %v895 = vlaneseq
  %v896 = vshrl.u32 %v895, 7
  %v897 = vadd.s32 %v896, 16
  %898 = vset.pattern.permute.xlu0 %v897
  %899 = vperm.xlu0 %898, %v619
  %v900 = vpop.permute.xlu0 %899
  %v901 = vlaneseq
  %v902 = vshrl.u32 %v901, 7
  %v903 = vadd.s32 %v902, 24
  %904 = vset.pattern.permute.xlu0 %v903
  %905 = vperm.xlu0 %904, %v619
  %v906 = vpop.permute.xlu0 %905
  %v907 = vlaneseq
  %v908 = vshrl.u32 %v907, 7
  %v909 = vadd.s32 %v908, 16
  %910 = vset.pattern.permute.xlu0 %v909
  %911 = vperm.xlu0 %910, %v632
  %v912 = vpop.permute.xlu0 %911
  %v913 = vlaneseq
  %v914 = vshrl.u32 %v913, 7
  %v915 = vadd.s32 %v914, 24
  %916 = vset.pattern.permute.xlu0 %v915
  %917 = vperm.xlu0 %916, %v632
  %v918 = vpop.permute.xlu0 %917
  %v919 = vlaneseq
  %v920 = vshrl.u32 %v919, 7
  %v921 = vadd.s32 %v920, 16
  %922 = vset.pattern.permute.xlu0 %v921
  %923 = vperm.xlu0 %922, %v645
  %v924 = vpop.permute.xlu0 %923
  %v925 = vlaneseq
  %v926 = vshrl.u32 %v925, 7
  %v927 = vadd.s32 %v926, 24
  %928 = vset.pattern.permute.xlu0 %v927
  %929 = vperm.xlu0 %928, %v645
  %v930 = vpop.permute.xlu0 %929
  %v931 = vlaneseq
  %v932 = vshrl.u32 %v931, 7
  %v933 = vadd.s32 %v932, 16
  %934 = vset.pattern.permute.xlu0 %v933
  %935 = vperm.xlu0 %934, %v658
  %v936 = vpop.permute.xlu0 %935
  %v937 = vlaneseq
  %v938 = vshrl.u32 %v937, 7
  %v939 = vadd.s32 %v938, 24
  %940 = vset.pattern.permute.xlu0 %v939
  %941 = vperm.xlu0 %940, %v658
  %v942 = vpop.permute.xlu0 %941
  %v943 = vmul.f32 %v756, %v687
  %v944 = vmul.f32 %v762, %v687
  %v945 = vmul.f32 %v768, %v688
  %v946 = vmul.f32 %v774, %v688
  %v947 = vmul.f32 %v780, %v689
  %v948 = vmul.f32 %v786, %v689
  %v949 = vmul.f32 %v792, %v690
  %v950 = vmul.f32 %v798, %v690
  %v951 = vmul.f32 %v804, %v691
  %v952 = vmul.f32 %v810, %v691
  %v953 = vmul.f32 %v816, %v692
  %v954 = vmul.f32 %v822, %v692
  %v955 = vmul.f32 %v828, %v693
  %v956 = vmul.f32 %v834, %v693
  %v957 = vmul.f32 %v840, %v694
  %v958 = vmul.f32 %v846, %v694
  %v959 = vmul.f32 %v852, %v695
  %v960 = vmul.f32 %v858, %v695
  %v961 = vmul.f32 %v864, %v696
  %v962 = vmul.f32 %v870, %v696
  %v963 = vmul.f32 %v876, %v697
  %v964 = vmul.f32 %v882, %v697
  %v965 = vmul.f32 %v888, %v698
  %v966 = vmul.f32 %v894, %v698
  %v967 = vmul.f32 %v900, %v699
  %v968 = vmul.f32 %v906, %v699
  %v969 = vmul.f32 %v912, %v700
  %v970 = vmul.f32 %v918, %v700
  %v971 = vmul.f32 %v924, %v701
  %v972 = vmul.f32 %v930, %v701
  %v973 = vmul.f32 %v936, %v702
  %v974 = vmul.f32 %v942, %v702
  %1007 = vrot.lane.b32.xlu0 %v943, 112
  %v1008 = vpop.permute.xlu0 %1007
  %1009 = vrot.lane.b32.xlu0 %v944, 112
  %v1010 = vpop.permute.xlu0 %1009
  %1011 = vrot.lane.b32.xlu0 %v945, 112
  %v1012 = vpop.permute.xlu0 %1011
  %1013 = vrot.lane.b32.xlu0 %v946, 112
  %v1014 = vpop.permute.xlu0 %1013
  %1015 = vrot.lane.b32.xlu0 %v947, 112
  %v1016 = vpop.permute.xlu0 %1015
  %1017 = vrot.lane.b32.xlu0 %v948, 112
  %v1018 = vpop.permute.xlu0 %1017
  %1019 = vrot.lane.b32.xlu0 %v949, 112
  %v1020 = vpop.permute.xlu0 %1019
  %1021 = vrot.lane.b32.xlu0 %v950, 112
  %v1022 = vpop.permute.xlu0 %1021
  %1023 = vrot.lane.b32.xlu0 %v951, 112
  %v1024 = vpop.permute.xlu0 %1023
  %1025 = vrot.lane.b32.xlu0 %v952, 112
  %v1026 = vpop.permute.xlu0 %1025
  %1027 = vrot.lane.b32.xlu0 %v953, 112
  %v1028 = vpop.permute.xlu0 %1027
  %1029 = vrot.lane.b32.xlu0 %v954, 112
  %v1030 = vpop.permute.xlu0 %1029
  %1031 = vrot.lane.b32.xlu0 %v955, 112
  %v1032 = vpop.permute.xlu0 %1031
  %1033 = vrot.lane.b32.xlu0 %v956, 112
  %v1034 = vpop.permute.xlu0 %1033
  %1035 = vrot.lane.b32.xlu0 %v957, 112
  %v1036 = vpop.permute.xlu0 %1035
  %1037 = vrot.lane.b32.xlu0 %v958, 112
  %v1038 = vpop.permute.xlu0 %1037
  %1039 = vrot.lane.b32.xlu0 %v959, 112
  %v1040 = vpop.permute.xlu0 %1039
  %1041 = vrot.lane.b32.xlu0 %v960, 112
  %v1042 = vpop.permute.xlu0 %1041
  %1043 = vrot.lane.b32.xlu0 %v961, 112
  %v1044 = vpop.permute.xlu0 %1043
  %1045 = vrot.lane.b32.xlu0 %v962, 112
  %v1046 = vpop.permute.xlu0 %1045
  %1047 = vrot.lane.b32.xlu0 %v963, 112
  %v1048 = vpop.permute.xlu0 %1047
  %1049 = vrot.lane.b32.xlu0 %v964, 112
  %v1050 = vpop.permute.xlu0 %1049
  %1051 = vrot.lane.b32.xlu0 %v965, 112
  %v1052 = vpop.permute.xlu0 %1051
  %1053 = vrot.lane.b32.xlu0 %v966, 112
  %v1054 = vpop.permute.xlu0 %1053
  %1055 = vrot.lane.b32.xlu0 %v967, 112
  %v1056 = vpop.permute.xlu0 %1055
  %1057 = vrot.lane.b32.xlu0 %v968, 112
  %v1058 = vpop.permute.xlu0 %1057
  %1059 = vrot.lane.b32.xlu0 %v969, 112
  %v1060 = vpop.permute.xlu0 %1059
  %1061 = vrot.lane.b32.xlu0 %v970, 112
  %v1062 = vpop.permute.xlu0 %1061
  %1063 = vrot.lane.b32.xlu0 %v971, 112
  %v1064 = vpop.permute.xlu0 %1063
  %1065 = vrot.lane.b32.xlu0 %v972, 112
  %v1066 = vpop.permute.xlu0 %1065
  %1067 = vrot.lane.b32.xlu0 %v973, 112
  %v1068 = vpop.permute.xlu0 %1067
  %1069 = vrot.lane.b32.xlu0 %v974, 112
  %v1070 = vpop.permute.xlu0 %1069
  %v1103 = vadd.f32 %v719, %v1008
  %v1104 = vadd.f32 %v720, %v1010
  %v1105 = vadd.f32 %v721, %v1012
  %v1106 = vadd.f32 %v722, %v1014
  %v1107 = vadd.f32 %v723, %v1016
  %v1108 = vadd.f32 %v724, %v1018
  %v1109 = vadd.f32 %v725, %v1020
  %v1110 = vadd.f32 %v726, %v1022
  %v1111 = vadd.f32 %v727, %v1024
  %v1112 = vadd.f32 %v728, %v1026
  %v1113 = vadd.f32 %v729, %v1028
  %v1114 = vadd.f32 %v730, %v1030
  %v1115 = vadd.f32 %v731, %v1032
  %v1116 = vadd.f32 %v732, %v1034
  %v1117 = vadd.f32 %v733, %v1036
  %v1118 = vadd.f32 %v734, %v1038
  %v1119 = vadd.f32 %v735, %v1040
  %v1120 = vadd.f32 %v736, %v1042
  %v1121 = vadd.f32 %v737, %v1044
  %v1122 = vadd.f32 %v738, %v1046
  %v1123 = vadd.f32 %v739, %v1048
  %v1124 = vadd.f32 %v740, %v1050
  %v1125 = vadd.f32 %v741, %v1052
  %v1126 = vadd.f32 %v742, %v1054
  %v1127 = vadd.f32 %v743, %v1056
  %v1128 = vadd.f32 %v744, %v1058
  %v1129 = vadd.f32 %v745, %v1060
  %v1130 = vadd.f32 %v746, %v1062
  %v1131 = vadd.f32 %v747, %v1064
  %v1132 = vadd.f32 %v748, %v1066
  %v1133 = vadd.f32 %v749, %v1068
  %v1134 = vadd.f32 %v750, %v1070
  %v1135 = vlaneseq
  %v1136 = vshrl.u32 %v1135, 7
  %v1137 = vadd.s32 %v1136, 32
  %1138 = vset.pattern.permute.xlu0 %v1137
  %1139 = vperm.xlu0 %1138, %v463
  %v1140 = vpop.permute.xlu0 %1139
  %v1141 = vlaneseq
  %v1142 = vshrl.u32 %v1141, 7
  %v1143 = vadd.s32 %v1142, 40
  %1144 = vset.pattern.permute.xlu0 %v1143
  %1145 = vperm.xlu0 %1144, %v463
  %v1146 = vpop.permute.xlu0 %1145
  %v1147 = vlaneseq
  %v1148 = vshrl.u32 %v1147, 7
  %v1149 = vadd.s32 %v1148, 32
  %1150 = vset.pattern.permute.xlu0 %v1149
  %1151 = vperm.xlu0 %1150, %v476
  %v1152 = vpop.permute.xlu0 %1151
  %v1153 = vlaneseq
  %v1154 = vshrl.u32 %v1153, 7
  %v1155 = vadd.s32 %v1154, 40
  %1156 = vset.pattern.permute.xlu0 %v1155
  %1157 = vperm.xlu0 %1156, %v476
  %v1158 = vpop.permute.xlu0 %1157
  %v1159 = vlaneseq
  %v1160 = vshrl.u32 %v1159, 7
  %v1161 = vadd.s32 %v1160, 32
  %1162 = vset.pattern.permute.xlu0 %v1161
  %1163 = vperm.xlu0 %1162, %v489
  %v1164 = vpop.permute.xlu0 %1163
  %v1165 = vlaneseq
  %v1166 = vshrl.u32 %v1165, 7
  %v1167 = vadd.s32 %v1166, 40
  %1168 = vset.pattern.permute.xlu0 %v1167
  %1169 = vperm.xlu0 %1168, %v489
  %v1170 = vpop.permute.xlu0 %1169
  %v1171 = vlaneseq
  %v1172 = vshrl.u32 %v1171, 7
  %v1173 = vadd.s32 %v1172, 32
  %1174 = vset.pattern.permute.xlu0 %v1173
  %1175 = vperm.xlu0 %1174, %v502
  %v1176 = vpop.permute.xlu0 %1175
  %v1177 = vlaneseq
  %v1178 = vshrl.u32 %v1177, 7
  %v1179 = vadd.s32 %v1178, 40
  %1180 = vset.pattern.permute.xlu0 %v1179
  %1181 = vperm.xlu0 %1180, %v502
  %v1182 = vpop.permute.xlu0 %1181
  %v1183 = vlaneseq
  %v1184 = vshrl.u32 %v1183, 7
  %v1185 = vadd.s32 %v1184, 32
  %1186 = vset.pattern.permute.xlu0 %v1185
  %1187 = vperm.xlu0 %1186, %v515
  %v1188 = vpop.permute.xlu0 %1187
  %v1189 = vlaneseq
  %v1190 = vshrl.u32 %v1189, 7
  %v1191 = vadd.s32 %v1190, 40
  %1192 = vset.pattern.permute.xlu0 %v1191
  %1193 = vperm.xlu0 %1192, %v515
  %v1194 = vpop.permute.xlu0 %1193
  %v1195 = vlaneseq
  %v1196 = vshrl.u32 %v1195, 7
  %v1197 = vadd.s32 %v1196, 32
  %1198 = vset.pattern.permute.xlu0 %v1197
  %1199 = vperm.xlu0 %1198, %v528
  %v1200 = vpop.permute.xlu0 %1199
  %v1201 = vlaneseq
  %v1202 = vshrl.u32 %v1201, 7
  %v1203 = vadd.s32 %v1202, 40
  %1204 = vset.pattern.permute.xlu0 %v1203
  %1205 = vperm.xlu0 %1204, %v528
  %v1206 = vpop.permute.xlu0 %1205
  %v1207 = vlaneseq
  %v1208 = vshrl.u32 %v1207, 7
  %v1209 = vadd.s32 %v1208, 32
  %1210 = vset.pattern.permute.xlu0 %v1209
  %1211 = vperm.xlu0 %1210, %v541
  %v1212 = vpop.permute.xlu0 %1211
  %v1213 = vlaneseq
  %v1214 = vshrl.u32 %v1213, 7
  %v1215 = vadd.s32 %v1214, 40
  %1216 = vset.pattern.permute.xlu0 %v1215
  %1217 = vperm.xlu0 %1216, %v541
  %v1218 = vpop.permute.xlu0 %1217
  %v1219 = vlaneseq
  %v1220 = vshrl.u32 %v1219, 7
  %v1221 = vadd.s32 %v1220, 32
  %1222 = vset.pattern.permute.xlu0 %v1221
  %1223 = vperm.xlu0 %1222, %v554
  %v1224 = vpop.permute.xlu0 %1223
  %v1225 = vlaneseq
  %v1226 = vshrl.u32 %v1225, 7
  %v1227 = vadd.s32 %v1226, 40
  %1228 = vset.pattern.permute.xlu0 %v1227
  %1229 = vperm.xlu0 %1228, %v554
  %v1230 = vpop.permute.xlu0 %1229
  %v1231 = vlaneseq
  %v1232 = vshrl.u32 %v1231, 7
  %v1233 = vadd.s32 %v1232, 32
  %1234 = vset.pattern.permute.xlu0 %v1233
  %1235 = vperm.xlu0 %1234, %v567
  %v1236 = vpop.permute.xlu0 %1235
  %v1237 = vlaneseq
  %v1238 = vshrl.u32 %v1237, 7
  %v1239 = vadd.s32 %v1238, 40
  %1240 = vset.pattern.permute.xlu0 %v1239
  %1241 = vperm.xlu0 %1240, %v567
  %v1242 = vpop.permute.xlu0 %1241
  %v1243 = vlaneseq
  %v1244 = vshrl.u32 %v1243, 7
  %v1245 = vadd.s32 %v1244, 32
  %1246 = vset.pattern.permute.xlu0 %v1245
  %1247 = vperm.xlu0 %1246, %v580
  %v1248 = vpop.permute.xlu0 %1247
  %v1249 = vlaneseq
  %v1250 = vshrl.u32 %v1249, 7
  %v1251 = vadd.s32 %v1250, 40
  %1252 = vset.pattern.permute.xlu0 %v1251
  %1253 = vperm.xlu0 %1252, %v580
  %v1254 = vpop.permute.xlu0 %1253
  %v1255 = vlaneseq
  %v1256 = vshrl.u32 %v1255, 7
  %v1257 = vadd.s32 %v1256, 32
  %1258 = vset.pattern.permute.xlu0 %v1257
  %1259 = vperm.xlu0 %1258, %v593
  %v1260 = vpop.permute.xlu0 %1259
  %v1261 = vlaneseq
  %v1262 = vshrl.u32 %v1261, 7
  %v1263 = vadd.s32 %v1262, 40
  %1264 = vset.pattern.permute.xlu0 %v1263
  %1265 = vperm.xlu0 %1264, %v593
  %v1266 = vpop.permute.xlu0 %1265
  %v1267 = vlaneseq
  %v1268 = vshrl.u32 %v1267, 7
  %v1269 = vadd.s32 %v1268, 32
  %1270 = vset.pattern.permute.xlu0 %v1269
  %1271 = vperm.xlu0 %1270, %v606
  %v1272 = vpop.permute.xlu0 %1271
  %v1273 = vlaneseq
  %v1274 = vshrl.u32 %v1273, 7
  %v1275 = vadd.s32 %v1274, 40
  %1276 = vset.pattern.permute.xlu0 %v1275
  %1277 = vperm.xlu0 %1276, %v606
  %v1278 = vpop.permute.xlu0 %1277
  %v1279 = vlaneseq
  %v1280 = vshrl.u32 %v1279, 7
  %v1281 = vadd.s32 %v1280, 32
  %1282 = vset.pattern.permute.xlu0 %v1281
  %1283 = vperm.xlu0 %1282, %v619
  %v1284 = vpop.permute.xlu0 %1283
  %v1285 = vlaneseq
  %v1286 = vshrl.u32 %v1285, 7
  %v1287 = vadd.s32 %v1286, 40
  %1288 = vset.pattern.permute.xlu0 %v1287
  %1289 = vperm.xlu0 %1288, %v619
  %v1290 = vpop.permute.xlu0 %1289
  %v1291 = vlaneseq
  %v1292 = vshrl.u32 %v1291, 7
  %v1293 = vadd.s32 %v1292, 32
  %1294 = vset.pattern.permute.xlu0 %v1293
  %1295 = vperm.xlu0 %1294, %v632
  %v1296 = vpop.permute.xlu0 %1295
  %v1297 = vlaneseq
  %v1298 = vshrl.u32 %v1297, 7
  %v1299 = vadd.s32 %v1298, 40
  %1300 = vset.pattern.permute.xlu0 %v1299
  %1301 = vperm.xlu0 %1300, %v632
  %v1302 = vpop.permute.xlu0 %1301
  %v1303 = vlaneseq
  %v1304 = vshrl.u32 %v1303, 7
  %v1305 = vadd.s32 %v1304, 32
  %1306 = vset.pattern.permute.xlu0 %v1305
  %1307 = vperm.xlu0 %1306, %v645
  %v1308 = vpop.permute.xlu0 %1307
  %v1309 = vlaneseq
  %v1310 = vshrl.u32 %v1309, 7
  %v1311 = vadd.s32 %v1310, 40
  %1312 = vset.pattern.permute.xlu0 %v1311
  %1313 = vperm.xlu0 %1312, %v645
  %v1314 = vpop.permute.xlu0 %1313
  %v1315 = vlaneseq
  %v1316 = vshrl.u32 %v1315, 7
  %v1317 = vadd.s32 %v1316, 32
  %1318 = vset.pattern.permute.xlu0 %v1317
  %1319 = vperm.xlu0 %1318, %v658
  %v1320 = vpop.permute.xlu0 %1319
  %v1321 = vlaneseq
  %v1322 = vshrl.u32 %v1321, 7
  %v1323 = vadd.s32 %v1322, 40
  %1324 = vset.pattern.permute.xlu0 %v1323
  %1325 = vperm.xlu0 %1324, %v658
  %v1326 = vpop.permute.xlu0 %1325
  %v1327 = vmul.f32 %v1140, %v687
  %v1328 = vmul.f32 %v1146, %v687
  %v1329 = vmul.f32 %v1152, %v688
  %v1330 = vmul.f32 %v1158, %v688
  %v1331 = vmul.f32 %v1164, %v689
  %v1332 = vmul.f32 %v1170, %v689
  %v1333 = vmul.f32 %v1176, %v690
  %v1334 = vmul.f32 %v1182, %v690
  %v1335 = vmul.f32 %v1188, %v691
  %v1336 = vmul.f32 %v1194, %v691
  %v1337 = vmul.f32 %v1200, %v692
  %v1338 = vmul.f32 %v1206, %v692
  %v1339 = vmul.f32 %v1212, %v693
  %v1340 = vmul.f32 %v1218, %v693
  %v1341 = vmul.f32 %v1224, %v694
  %v1342 = vmul.f32 %v1230, %v694
  %v1343 = vmul.f32 %v1236, %v695
  %v1344 = vmul.f32 %v1242, %v695
  %v1345 = vmul.f32 %v1248, %v696
  %v1346 = vmul.f32 %v1254, %v696
  %v1347 = vmul.f32 %v1260, %v697
  %v1348 = vmul.f32 %v1266, %v697
  %v1349 = vmul.f32 %v1272, %v698
  %v1350 = vmul.f32 %v1278, %v698
  %v1351 = vmul.f32 %v1284, %v699
  %v1352 = vmul.f32 %v1290, %v699
  %v1353 = vmul.f32 %v1296, %v700
  %v1354 = vmul.f32 %v1302, %v700
  %v1355 = vmul.f32 %v1308, %v701
  %v1356 = vmul.f32 %v1314, %v701
  %v1357 = vmul.f32 %v1320, %v702
  %v1358 = vmul.f32 %v1326, %v702
  %1391 = vrot.lane.b32.xlu0 %v1327, 96
  %v1392 = vpop.permute.xlu0 %1391
  %1393 = vrot.lane.b32.xlu0 %v1328, 96
  %v1394 = vpop.permute.xlu0 %1393
  %1395 = vrot.lane.b32.xlu0 %v1329, 96
  %v1396 = vpop.permute.xlu0 %1395
  %1397 = vrot.lane.b32.xlu0 %v1330, 96
  %v1398 = vpop.permute.xlu0 %1397
  %1399 = vrot.lane.b32.xlu0 %v1331, 96
  %v1400 = vpop.permute.xlu0 %1399
  %1401 = vrot.lane.b32.xlu0 %v1332, 96
  %v1402 = vpop.permute.xlu0 %1401
  %1403 = vrot.lane.b32.xlu0 %v1333, 96
  %v1404 = vpop.permute.xlu0 %1403
  %1405 = vrot.lane.b32.xlu0 %v1334, 96
  %v1406 = vpop.permute.xlu0 %1405
  %1407 = vrot.lane.b32.xlu0 %v1335, 96
  %v1408 = vpop.permute.xlu0 %1407
  %1409 = vrot.lane.b32.xlu0 %v1336, 96
  %v1410 = vpop.permute.xlu0 %1409
  %1411 = vrot.lane.b32.xlu0 %v1337, 96
  %v1412 = vpop.permute.xlu0 %1411
  %1413 = vrot.lane.b32.xlu0 %v1338, 96
  %v1414 = vpop.permute.xlu0 %1413
  %1415 = vrot.lane.b32.xlu0 %v1339, 96
  %v1416 = vpop.permute.xlu0 %1415
  %1417 = vrot.lane.b32.xlu0 %v1340, 96
  %v1418 = vpop.permute.xlu0 %1417
  %1419 = vrot.lane.b32.xlu0 %v1341, 96
  %v1420 = vpop.permute.xlu0 %1419
  %1421 = vrot.lane.b32.xlu0 %v1342, 96
  %v1422 = vpop.permute.xlu0 %1421
  %1423 = vrot.lane.b32.xlu0 %v1343, 96
  %v1424 = vpop.permute.xlu0 %1423
  %1425 = vrot.lane.b32.xlu0 %v1344, 96
  %v1426 = vpop.permute.xlu0 %1425
  %1427 = vrot.lane.b32.xlu0 %v1345, 96
  %v1428 = vpop.permute.xlu0 %1427
  %1429 = vrot.lane.b32.xlu0 %v1346, 96
  %v1430 = vpop.permute.xlu0 %1429
  %1431 = vrot.lane.b32.xlu0 %v1347, 96
  %v1432 = vpop.permute.xlu0 %1431
  %1433 = vrot.lane.b32.xlu0 %v1348, 96
  %v1434 = vpop.permute.xlu0 %1433
  %1435 = vrot.lane.b32.xlu0 %v1349, 96
  %v1436 = vpop.permute.xlu0 %1435
  %1437 = vrot.lane.b32.xlu0 %v1350, 96
  %v1438 = vpop.permute.xlu0 %1437
  %1439 = vrot.lane.b32.xlu0 %v1351, 96
  %v1440 = vpop.permute.xlu0 %1439
  %1441 = vrot.lane.b32.xlu0 %v1352, 96
  %v1442 = vpop.permute.xlu0 %1441
  %1443 = vrot.lane.b32.xlu0 %v1353, 96
  %v1444 = vpop.permute.xlu0 %1443
  %1445 = vrot.lane.b32.xlu0 %v1354, 96
  %v1446 = vpop.permute.xlu0 %1445
  %1447 = vrot.lane.b32.xlu0 %v1355, 96
  %v1448 = vpop.permute.xlu0 %1447
  %1449 = vrot.lane.b32.xlu0 %v1356, 96
  %v1450 = vpop.permute.xlu0 %1449
  %1451 = vrot.lane.b32.xlu0 %v1357, 96
  %v1452 = vpop.permute.xlu0 %1451
  %1453 = vrot.lane.b32.xlu0 %v1358, 96
  %v1454 = vpop.permute.xlu0 %1453
  %v1487 = vadd.f32 %v1103, %v1392
  %v1488 = vadd.f32 %v1104, %v1394
  %v1489 = vadd.f32 %v1105, %v1396
  %v1490 = vadd.f32 %v1106, %v1398
  %v1491 = vadd.f32 %v1107, %v1400
  %v1492 = vadd.f32 %v1108, %v1402
  %v1493 = vadd.f32 %v1109, %v1404
  %v1494 = vadd.f32 %v1110, %v1406
  %v1495 = vadd.f32 %v1111, %v1408
  %v1496 = vadd.f32 %v1112, %v1410
  %v1497 = vadd.f32 %v1113, %v1412
  %v1498 = vadd.f32 %v1114, %v1414
  %v1499 = vadd.f32 %v1115, %v1416
  %v1500 = vadd.f32 %v1116, %v1418
  %v1501 = vadd.f32 %v1117, %v1420
  %v1502 = vadd.f32 %v1118, %v1422
  %v1503 = vadd.f32 %v1119, %v1424
  %v1504 = vadd.f32 %v1120, %v1426
  %v1505 = vadd.f32 %v1121, %v1428
  %v1506 = vadd.f32 %v1122, %v1430
  %v1507 = vadd.f32 %v1123, %v1432
  %v1508 = vadd.f32 %v1124, %v1434
  %v1509 = vadd.f32 %v1125, %v1436
  %v1510 = vadd.f32 %v1126, %v1438
  %v1511 = vadd.f32 %v1127, %v1440
  %v1512 = vadd.f32 %v1128, %v1442
  %v1513 = vadd.f32 %v1129, %v1444
  %v1514 = vadd.f32 %v1130, %v1446
  %v1515 = vadd.f32 %v1131, %v1448
  %v1516 = vadd.f32 %v1132, %v1450
  %v1517 = vadd.f32 %v1133, %v1452
  %v1518 = vadd.f32 %v1134, %v1454
  %v1519 = vlaneseq
  %v1520 = vshrl.u32 %v1519, 7
  %v1521 = vadd.s32 %v1520, 48
  %1522 = vset.pattern.permute.xlu0 %v1521
  %1523 = vperm.xlu0 %1522, %v463
  %v1524 = vpop.permute.xlu0 %1523
  %v1525 = vlaneseq
  %v1526 = vshrl.u32 %v1525, 7
  %v1527 = vadd.s32 %v1526, 56
  %1528 = vset.pattern.permute.xlu0 %v1527
  %1529 = vperm.xlu0 %1528, %v463
  %v1530 = vpop.permute.xlu0 %1529
  %v1531 = vlaneseq
  %v1532 = vshrl.u32 %v1531, 7
  %v1533 = vadd.s32 %v1532, 48
  %1534 = vset.pattern.permute.xlu0 %v1533
  %1535 = vperm.xlu0 %1534, %v476
  %v1536 = vpop.permute.xlu0 %1535
  %v1537 = vlaneseq
  %v1538 = vshrl.u32 %v1537, 7
  %v1539 = vadd.s32 %v1538, 56
  %1540 = vset.pattern.permute.xlu0 %v1539
  %1541 = vperm.xlu0 %1540, %v476
  %v1542 = vpop.permute.xlu0 %1541
  %v1543 = vlaneseq
  %v1544 = vshrl.u32 %v1543, 7
  %v1545 = vadd.s32 %v1544, 48
  %1546 = vset.pattern.permute.xlu0 %v1545
  %1547 = vperm.xlu0 %1546, %v489
  %v1548 = vpop.permute.xlu0 %1547
  %v1549 = vlaneseq
  %v1550 = vshrl.u32 %v1549, 7
  %v1551 = vadd.s32 %v1550, 56
  %1552 = vset.pattern.permute.xlu0 %v1551
  %1553 = vperm.xlu0 %1552, %v489
  %v1554 = vpop.permute.xlu0 %1553
  %v1555 = vlaneseq
  %v1556 = vshrl.u32 %v1555, 7
  %v1557 = vadd.s32 %v1556, 48
  %1558 = vset.pattern.permute.xlu0 %v1557
  %1559 = vperm.xlu0 %1558, %v502
  %v1560 = vpop.permute.xlu0 %1559
  %v1561 = vlaneseq
  %v1562 = vshrl.u32 %v1561, 7
  %v1563 = vadd.s32 %v1562, 56
  %1564 = vset.pattern.permute.xlu0 %v1563
  %1565 = vperm.xlu0 %1564, %v502
  %v1566 = vpop.permute.xlu0 %1565
  %v1567 = vlaneseq
  %v1568 = vshrl.u32 %v1567, 7
  %v1569 = vadd.s32 %v1568, 48
  %1570 = vset.pattern.permute.xlu0 %v1569
  %1571 = vperm.xlu0 %1570, %v515
  %v1572 = vpop.permute.xlu0 %1571
  %v1573 = vlaneseq
  %v1574 = vshrl.u32 %v1573, 7
  %v1575 = vadd.s32 %v1574, 56
  %1576 = vset.pattern.permute.xlu0 %v1575
  %1577 = vperm.xlu0 %1576, %v515
  %v1578 = vpop.permute.xlu0 %1577
  %v1579 = vlaneseq
  %v1580 = vshrl.u32 %v1579, 7
  %v1581 = vadd.s32 %v1580, 48
  %1582 = vset.pattern.permute.xlu0 %v1581
  %1583 = vperm.xlu0 %1582, %v528
  %v1584 = vpop.permute.xlu0 %1583
  %v1585 = vlaneseq
  %v1586 = vshrl.u32 %v1585, 7
  %v1587 = vadd.s32 %v1586, 56
  %1588 = vset.pattern.permute.xlu0 %v1587
  %1589 = vperm.xlu0 %1588, %v528
  %v1590 = vpop.permute.xlu0 %1589
  %v1591 = vlaneseq
  %v1592 = vshrl.u32 %v1591, 7
  %v1593 = vadd.s32 %v1592, 48
  %1594 = vset.pattern.permute.xlu0 %v1593
  %1595 = vperm.xlu0 %1594, %v541
  %v1596 = vpop.permute.xlu0 %1595
  %v1597 = vlaneseq
  %v1598 = vshrl.u32 %v1597, 7
  %v1599 = vadd.s32 %v1598, 56
  %1600 = vset.pattern.permute.xlu0 %v1599
  %1601 = vperm.xlu0 %1600, %v541
  %v1602 = vpop.permute.xlu0 %1601
  %v1603 = vlaneseq
  %v1604 = vshrl.u32 %v1603, 7
  %v1605 = vadd.s32 %v1604, 48
  %1606 = vset.pattern.permute.xlu0 %v1605
  %1607 = vperm.xlu0 %1606, %v554
  %v1608 = vpop.permute.xlu0 %1607
  %v1609 = vlaneseq
  %v1610 = vshrl.u32 %v1609, 7
  %v1611 = vadd.s32 %v1610, 56
  %1612 = vset.pattern.permute.xlu0 %v1611
  %1613 = vperm.xlu0 %1612, %v554
  %v1614 = vpop.permute.xlu0 %1613
  %v1615 = vlaneseq
  %v1616 = vshrl.u32 %v1615, 7
  %v1617 = vadd.s32 %v1616, 48
  %1618 = vset.pattern.permute.xlu0 %v1617
  %1619 = vperm.xlu0 %1618, %v567
  %v1620 = vpop.permute.xlu0 %1619
  %v1621 = vlaneseq
  %v1622 = vshrl.u32 %v1621, 7
  %v1623 = vadd.s32 %v1622, 56
  %1624 = vset.pattern.permute.xlu0 %v1623
  %1625 = vperm.xlu0 %1624, %v567
  %v1626 = vpop.permute.xlu0 %1625
  %v1627 = vlaneseq
  %v1628 = vshrl.u32 %v1627, 7
  %v1629 = vadd.s32 %v1628, 48
  %1630 = vset.pattern.permute.xlu0 %v1629
  %1631 = vperm.xlu0 %1630, %v580
  %v1632 = vpop.permute.xlu0 %1631
  %v1633 = vlaneseq
  %v1634 = vshrl.u32 %v1633, 7
  %v1635 = vadd.s32 %v1634, 56
  %1636 = vset.pattern.permute.xlu0 %v1635
  %1637 = vperm.xlu0 %1636, %v580
  %v1638 = vpop.permute.xlu0 %1637
  %v1639 = vlaneseq
  %v1640 = vshrl.u32 %v1639, 7
  %v1641 = vadd.s32 %v1640, 48
  %1642 = vset.pattern.permute.xlu0 %v1641
  %1643 = vperm.xlu0 %1642, %v593
  %v1644 = vpop.permute.xlu0 %1643
  %v1645 = vlaneseq
  %v1646 = vshrl.u32 %v1645, 7
  %v1647 = vadd.s32 %v1646, 56
  %1648 = vset.pattern.permute.xlu0 %v1647
  %1649 = vperm.xlu0 %1648, %v593
  %v1650 = vpop.permute.xlu0 %1649
  %v1651 = vlaneseq
  %v1652 = vshrl.u32 %v1651, 7
  %v1653 = vadd.s32 %v1652, 48
  %1654 = vset.pattern.permute.xlu0 %v1653
  %1655 = vperm.xlu0 %1654, %v606
  %v1656 = vpop.permute.xlu0 %1655
  %v1657 = vlaneseq
  %v1658 = vshrl.u32 %v1657, 7
  %v1659 = vadd.s32 %v1658, 56
  %1660 = vset.pattern.permute.xlu0 %v1659
  %1661 = vperm.xlu0 %1660, %v606
  %v1662 = vpop.permute.xlu0 %1661
  %v1663 = vlaneseq
  %v1664 = vshrl.u32 %v1663, 7
  %v1665 = vadd.s32 %v1664, 48
  %1666 = vset.pattern.permute.xlu0 %v1665
  %1667 = vperm.xlu0 %1666, %v619
  %v1668 = vpop.permute.xlu0 %1667
  %v1669 = vlaneseq
  %v1670 = vshrl.u32 %v1669, 7
  %v1671 = vadd.s32 %v1670, 56
  %1672 = vset.pattern.permute.xlu0 %v1671
  %1673 = vperm.xlu0 %1672, %v619
  %v1674 = vpop.permute.xlu0 %1673
  %v1675 = vlaneseq
  %v1676 = vshrl.u32 %v1675, 7
  %v1677 = vadd.s32 %v1676, 48
  %1678 = vset.pattern.permute.xlu0 %v1677
  %1679 = vperm.xlu0 %1678, %v632
  %v1680 = vpop.permute.xlu0 %1679
  %v1681 = vlaneseq
  %v1682 = vshrl.u32 %v1681, 7
  %v1683 = vadd.s32 %v1682, 56
  %1684 = vset.pattern.permute.xlu0 %v1683
  %1685 = vperm.xlu0 %1684, %v632
  %v1686 = vpop.permute.xlu0 %1685
  %v1687 = vlaneseq
  %v1688 = vshrl.u32 %v1687, 7
  %v1689 = vadd.s32 %v1688, 48
  %1690 = vset.pattern.permute.xlu0 %v1689
  %1691 = vperm.xlu0 %1690, %v645
  %v1692 = vpop.permute.xlu0 %1691
  %v1693 = vlaneseq
  %v1694 = vshrl.u32 %v1693, 7
  %v1695 = vadd.s32 %v1694, 56
  %1696 = vset.pattern.permute.xlu0 %v1695
  %1697 = vperm.xlu0 %1696, %v645
  %v1698 = vpop.permute.xlu0 %1697
  %v1699 = vlaneseq
  %v1700 = vshrl.u32 %v1699, 7
  %v1701 = vadd.s32 %v1700, 48
  %1702 = vset.pattern.permute.xlu0 %v1701
  %1703 = vperm.xlu0 %1702, %v658
  %v1704 = vpop.permute.xlu0 %1703
  %v1705 = vlaneseq
  %v1706 = vshrl.u32 %v1705, 7
  %v1707 = vadd.s32 %v1706, 56
  %1708 = vset.pattern.permute.xlu0 %v1707
  %1709 = vperm.xlu0 %1708, %v658
  %v1710 = vpop.permute.xlu0 %1709
  %v1711 = vmul.f32 %v1524, %v687
  %v1712 = vmul.f32 %v1530, %v687
  %v1713 = vmul.f32 %v1536, %v688
  %v1714 = vmul.f32 %v1542, %v688
  %v1715 = vmul.f32 %v1548, %v689
  %v1716 = vmul.f32 %v1554, %v689
  %v1717 = vmul.f32 %v1560, %v690
  %v1718 = vmul.f32 %v1566, %v690
  %v1719 = vmul.f32 %v1572, %v691
  %v1720 = vmul.f32 %v1578, %v691
  %v1721 = vmul.f32 %v1584, %v692
  %v1722 = vmul.f32 %v1590, %v692
  %v1723 = vmul.f32 %v1596, %v693
  %v1724 = vmul.f32 %v1602, %v693
  %v1725 = vmul.f32 %v1608, %v694
  %v1726 = vmul.f32 %v1614, %v694
  %v1727 = vmul.f32 %v1620, %v695
  %v1728 = vmul.f32 %v1626, %v695
  %v1729 = vmul.f32 %v1632, %v696
  %v1730 = vmul.f32 %v1638, %v696
  %v1731 = vmul.f32 %v1644, %v697
  %v1732 = vmul.f32 %v1650, %v697
  %v1733 = vmul.f32 %v1656, %v698
  %v1734 = vmul.f32 %v1662, %v698
  %v1735 = vmul.f32 %v1668, %v699
  %v1736 = vmul.f32 %v1674, %v699
  %v1737 = vmul.f32 %v1680, %v700
  %v1738 = vmul.f32 %v1686, %v700
  %v1739 = vmul.f32 %v1692, %v701
  %v1740 = vmul.f32 %v1698, %v701
  %v1741 = vmul.f32 %v1704, %v702
  %v1742 = vmul.f32 %v1710, %v702
  %1775 = vrot.lane.b32.xlu0 %v1711, 80
  %v1776 = vpop.permute.xlu0 %1775
  %1777 = vrot.lane.b32.xlu0 %v1712, 80
  %v1778 = vpop.permute.xlu0 %1777
  %1779 = vrot.lane.b32.xlu0 %v1713, 80
  %v1780 = vpop.permute.xlu0 %1779
  %1781 = vrot.lane.b32.xlu0 %v1714, 80
  %v1782 = vpop.permute.xlu0 %1781
  %1783 = vrot.lane.b32.xlu0 %v1715, 80
  %v1784 = vpop.permute.xlu0 %1783
  %1785 = vrot.lane.b32.xlu0 %v1716, 80
  %v1786 = vpop.permute.xlu0 %1785
  %1787 = vrot.lane.b32.xlu0 %v1717, 80
  %v1788 = vpop.permute.xlu0 %1787
  %1789 = vrot.lane.b32.xlu0 %v1718, 80
  %v1790 = vpop.permute.xlu0 %1789
  %1791 = vrot.lane.b32.xlu0 %v1719, 80
  %v1792 = vpop.permute.xlu0 %1791
  %1793 = vrot.lane.b32.xlu0 %v1720, 80
  %v1794 = vpop.permute.xlu0 %1793
  %1795 = vrot.lane.b32.xlu0 %v1721, 80
  %v1796 = vpop.permute.xlu0 %1795
  %1797 = vrot.lane.b32.xlu0 %v1722, 80
  %v1798 = vpop.permute.xlu0 %1797
  %1799 = vrot.lane.b32.xlu0 %v1723, 80
  %v1800 = vpop.permute.xlu0 %1799
  %1801 = vrot.lane.b32.xlu0 %v1724, 80
  %v1802 = vpop.permute.xlu0 %1801
  %1803 = vrot.lane.b32.xlu0 %v1725, 80
  %v1804 = vpop.permute.xlu0 %1803
  %1805 = vrot.lane.b32.xlu0 %v1726, 80
  %v1806 = vpop.permute.xlu0 %1805
  %1807 = vrot.lane.b32.xlu0 %v1727, 80
  %v1808 = vpop.permute.xlu0 %1807
  %1809 = vrot.lane.b32.xlu0 %v1728, 80
  %v1810 = vpop.permute.xlu0 %1809
  %1811 = vrot.lane.b32.xlu0 %v1729, 80
  %v1812 = vpop.permute.xlu0 %1811
  %1813 = vrot.lane.b32.xlu0 %v1730, 80
  %v1814 = vpop.permute.xlu0 %1813
  %1815 = vrot.lane.b32.xlu0 %v1731, 80
  %v1816 = vpop.permute.xlu0 %1815
  %1817 = vrot.lane.b32.xlu0 %v1732, 80
  %v1818 = vpop.permute.xlu0 %1817
  %1819 = vrot.lane.b32.xlu0 %v1733, 80
  %v1820 = vpop.permute.xlu0 %1819
  %1821 = vrot.lane.b32.xlu0 %v1734, 80
  %v1822 = vpop.permute.xlu0 %1821
  %1823 = vrot.lane.b32.xlu0 %v1735, 80
  %v1824 = vpop.permute.xlu0 %1823
  %1825 = vrot.lane.b32.xlu0 %v1736, 80
  %v1826 = vpop.permute.xlu0 %1825
  %1827 = vrot.lane.b32.xlu0 %v1737, 80
  %v1828 = vpop.permute.xlu0 %1827
  %1829 = vrot.lane.b32.xlu0 %v1738, 80
  %v1830 = vpop.permute.xlu0 %1829
  %1831 = vrot.lane.b32.xlu0 %v1739, 80
  %v1832 = vpop.permute.xlu0 %1831
  %1833 = vrot.lane.b32.xlu0 %v1740, 80
  %v1834 = vpop.permute.xlu0 %1833
  %1835 = vrot.lane.b32.xlu0 %v1741, 80
  %v1836 = vpop.permute.xlu0 %1835
  %1837 = vrot.lane.b32.xlu0 %v1742, 80
  %v1838 = vpop.permute.xlu0 %1837
  %v1871 = vadd.f32 %v1487, %v1776
  %v1872 = vadd.f32 %v1488, %v1778
  %v1873 = vadd.f32 %v1489, %v1780
  %v1874 = vadd.f32 %v1490, %v1782
  %v1875 = vadd.f32 %v1491, %v1784
  %v1876 = vadd.f32 %v1492, %v1786
  %v1877 = vadd.f32 %v1493, %v1788
  %v1878 = vadd.f32 %v1494, %v1790
  %v1879 = vadd.f32 %v1495, %v1792
  %v1880 = vadd.f32 %v1496, %v1794
  %v1881 = vadd.f32 %v1497, %v1796
  %v1882 = vadd.f32 %v1498, %v1798
  %v1883 = vadd.f32 %v1499, %v1800
  %v1884 = vadd.f32 %v1500, %v1802
  %v1885 = vadd.f32 %v1501, %v1804
  %v1886 = vadd.f32 %v1502, %v1806
  %v1887 = vadd.f32 %v1503, %v1808
  %v1888 = vadd.f32 %v1504, %v1810
  %v1889 = vadd.f32 %v1505, %v1812
  %v1890 = vadd.f32 %v1506, %v1814
  %v1891 = vadd.f32 %v1507, %v1816
  %v1892 = vadd.f32 %v1508, %v1818
  %v1893 = vadd.f32 %v1509, %v1820
  %v1894 = vadd.f32 %v1510, %v1822
  %v1895 = vadd.f32 %v1511, %v1824
  %v1896 = vadd.f32 %v1512, %v1826
  %v1897 = vadd.f32 %v1513, %v1828
  %v1898 = vadd.f32 %v1514, %v1830
  %v1899 = vadd.f32 %v1515, %v1832
  %v1900 = vadd.f32 %v1516, %v1834
  %v1901 = vadd.f32 %v1517, %v1836
  %v1902 = vadd.f32 %v1518, %v1838
  %v1903 = vmul.f32 %v1871, 0.25
  %v1904 = vmul.f32 %v1872, 0.25
  %v1905 = vmul.f32 %v1873, 0.25
  %v1906 = vmul.f32 %v1874, 0.25
  %v1907 = vmul.f32 %v1875, 0.25
  %v1908 = vmul.f32 %v1876, 0.25
  %v1909 = vmul.f32 %v1877, 0.25
  %v1910 = vmul.f32 %v1878, 0.25
  %v1911 = vmul.f32 %v1879, 0.25
  %v1912 = vmul.f32 %v1880, 0.25
  %v1913 = vmul.f32 %v1881, 0.25
  %v1914 = vmul.f32 %v1882, 0.25
  %v1915 = vmul.f32 %v1883, 0.25
  %v1916 = vmul.f32 %v1884, 0.25
  %v1917 = vmul.f32 %v1885, 0.25
  %v1918 = vmul.f32 %v1886, 0.25
  %v1919 = vmul.f32 %v1887, 0.25
  %v1920 = vmul.f32 %v1888, 0.25
  %v1921 = vmul.f32 %v1889, 0.25
  %v1922 = vmul.f32 %v1890, 0.25
  %v1923 = vmul.f32 %v1891, 0.25
  %v1924 = vmul.f32 %v1892, 0.25
  %v1925 = vmul.f32 %v1893, 0.25
  %v1926 = vmul.f32 %v1894, 0.25
  %v1927 = vmul.f32 %v1895, 0.25
  %v1928 = vmul.f32 %v1896, 0.25
  %v1929 = vmul.f32 %v1897, 0.25
  %v1930 = vmul.f32 %v1898, 0.25
  %v1931 = vmul.f32 %v1899, 0.25
  %v1932 = vmul.f32 %v1900, 0.25
  %v1933 = vmul.f32 %v1901, 0.25
  %v1934 = vmul.f32 %v1902, 0.25
  %vm1935 = vcmask 130048
  %v1936 = vsel %vm1935, %v1903, -inf
  %1937 = vmax.xlane.f32.xlu0 %v1936
  %v1938 = vpop.xlane.xlu0 %1937
  %v1939 = vsel %vm1935, %v1904, -inf
  %1940 = vmax.xlane.f32.xlu0 %v1939
  %v1941 = vpop.xlane.xlu0 %1940
  %v1942 = vsel %vm1935, %v1905, -inf
  %1943 = vmax.xlane.f32.xlu0 %v1942
  %v1944 = vpop.xlane.xlu0 %1943
  %v1945 = vsel %vm1935, %v1906, -inf
  %1946 = vmax.xlane.f32.xlu0 %v1945
  %v1947 = vpop.xlane.xlu0 %1946
  %v1948 = vsel %vm1935, %v1907, -inf
  %1949 = vmax.xlane.f32.xlu0 %v1948
  %v1950 = vpop.xlane.xlu0 %1949
  %v1951 = vsel %vm1935, %v1908, -inf
  %1952 = vmax.xlane.f32.xlu0 %v1951
  %v1953 = vpop.xlane.xlu0 %1952
  %v1954 = vsel %vm1935, %v1909, -inf
  %1955 = vmax.xlane.f32.xlu0 %v1954
  %v1956 = vpop.xlane.xlu0 %1955
  %v1957 = vsel %vm1935, %v1910, -inf
  %1958 = vmax.xlane.f32.xlu0 %v1957
  %v1959 = vpop.xlane.xlu0 %1958
  %v1960 = vsel %vm1935, %v1911, -inf
  %1961 = vmax.xlane.f32.xlu0 %v1960
  %v1962 = vpop.xlane.xlu0 %1961
  %v1963 = vsel %vm1935, %v1912, -inf
  %1964 = vmax.xlane.f32.xlu0 %v1963
  %v1965 = vpop.xlane.xlu0 %1964
  %v1966 = vsel %vm1935, %v1913, -inf
  %1967 = vmax.xlane.f32.xlu0 %v1966
  %v1968 = vpop.xlane.xlu0 %1967
  %v1969 = vsel %vm1935, %v1914, -inf
  %1970 = vmax.xlane.f32.xlu0 %v1969
  %v1971 = vpop.xlane.xlu0 %1970
  %v1972 = vsel %vm1935, %v1915, -inf
  %1973 = vmax.xlane.f32.xlu0 %v1972
  %v1974 = vpop.xlane.xlu0 %1973
  %v1975 = vsel %vm1935, %v1916, -inf
  %1976 = vmax.xlane.f32.xlu0 %v1975
  %v1977 = vpop.xlane.xlu0 %1976
  %v1978 = vsel %vm1935, %v1917, -inf
  %1979 = vmax.xlane.f32.xlu0 %v1978
  %v1980 = vpop.xlane.xlu0 %1979
  %v1981 = vsel %vm1935, %v1918, -inf
  %1982 = vmax.xlane.f32.xlu0 %v1981
  %v1983 = vpop.xlane.xlu0 %1982
  %v1984 = vsel %vm1935, %v1919, -inf
  %1985 = vmax.xlane.f32.xlu0 %v1984
  %v1986 = vpop.xlane.xlu0 %1985
  %v1987 = vsel %vm1935, %v1920, -inf
  %1988 = vmax.xlane.f32.xlu0 %v1987
  %v1989 = vpop.xlane.xlu0 %1988
  %v1990 = vsel %vm1935, %v1921, -inf
  %1991 = vmax.xlane.f32.xlu0 %v1990
  %v1992 = vpop.xlane.xlu0 %1991
  %v1993 = vsel %vm1935, %v1922, -inf
  %1994 = vmax.xlane.f32.xlu0 %v1993
  %v1995 = vpop.xlane.xlu0 %1994
  %v1996 = vsel %vm1935, %v1923, -inf
  %1997 = vmax.xlane.f32.xlu0 %v1996
  %v1998 = vpop.xlane.xlu0 %1997
  %v1999 = vsel %vm1935, %v1924, -inf
  %2000 = vmax.xlane.f32.xlu0 %v1999
  %v2001 = vpop.xlane.xlu0 %2000
  %v2002 = vsel %vm1935, %v1925, -inf
  %2003 = vmax.xlane.f32.xlu0 %v2002
  %v2004 = vpop.xlane.xlu0 %2003
  %v2005 = vsel %vm1935, %v1926, -inf
  %2006 = vmax.xlane.f32.xlu0 %v2005
  %v2007 = vpop.xlane.xlu0 %2006
  %v2008 = vsel %vm1935, %v1927, -inf
  %2009 = vmax.xlane.f32.xlu0 %v2008
  %v2010 = vpop.xlane.xlu0 %2009
  %v2011 = vsel %vm1935, %v1928, -inf
  %2012 = vmax.xlane.f32.xlu0 %v2011
  %v2013 = vpop.xlane.xlu0 %2012
  %v2014 = vsel %vm1935, %v1929, -inf
  %2015 = vmax.xlane.f32.xlu0 %v2014
  %v2016 = vpop.xlane.xlu0 %2015
  %v2017 = vsel %vm1935, %v1930, -inf
  %2018 = vmax.xlane.f32.xlu0 %v2017
  %v2019 = vpop.xlane.xlu0 %2018
  %v2020 = vsel %vm1935, %v1931, -inf
  %2021 = vmax.xlane.f32.xlu0 %v2020
  %v2022 = vpop.xlane.xlu0 %2021
  %v2023 = vsel %vm1935, %v1932, -inf
  %2024 = vmax.xlane.f32.xlu0 %v2023
  %v2025 = vpop.xlane.xlu0 %2024
  %v2026 = vsel %vm1935, %v1933, -inf
  %2027 = vmax.xlane.f32.xlu0 %v2026
  %v2028 = vpop.xlane.xlu0 %2027
  %v2029 = vsel %vm1935, %v1934, -inf
  %2030 = vmax.xlane.f32.xlu0 %v2029
  %v2031 = vpop.xlane.xlu0 %2030
  %v2032 = vsub.f32 %v1903, %v1938
  %v2033 = vsub.f32 %v1904, %v1941
  %v2034 = vsub.f32 %v1905, %v1944
  %v2035 = vsub.f32 %v1906, %v1947
  %v2036 = vsub.f32 %v1907, %v1950
  %v2037 = vsub.f32 %v1908, %v1953
  %v2038 = vsub.f32 %v1909, %v1956
  %v2039 = vsub.f32 %v1910, %v1959
  %v2040 = vsub.f32 %v1911, %v1962
  %v2041 = vsub.f32 %v1912, %v1965
  %v2042 = vsub.f32 %v1913, %v1968
  %v2043 = vsub.f32 %v1914, %v1971
  %v2044 = vsub.f32 %v1915, %v1974
  %v2045 = vsub.f32 %v1916, %v1977
  %v2046 = vsub.f32 %v1917, %v1980
  %v2047 = vsub.f32 %v1918, %v1983
  %v2048 = vsub.f32 %v1919, %v1986
  %v2049 = vsub.f32 %v1920, %v1989
  %v2050 = vsub.f32 %v1921, %v1992
  %v2051 = vsub.f32 %v1922, %v1995
  %v2052 = vsub.f32 %v1923, %v1998
  %v2053 = vsub.f32 %v1924, %v2001
  %v2054 = vsub.f32 %v1925, %v2004
  %v2055 = vsub.f32 %v1926, %v2007
  %v2056 = vsub.f32 %v1927, %v2010
  %v2057 = vsub.f32 %v1928, %v2013
  %v2058 = vsub.f32 %v1929, %v2016
  %v2059 = vsub.f32 %v1930, %v2019
  %v2060 = vsub.f32 %v1931, %v2022
  %v2061 = vsub.f32 %v1932, %v2025
  %v2062 = vsub.f32 %v1933, %v2028
  %v2063 = vsub.f32 %v1934, %v2031
  %v2064 = vmul.f32 %v2032, 1.442695
  %v2065 = vpow.pop %v2064
  %v2066 = vmul.f32 %v2033, 1.442695
  %v2067 = vpow.pop %v2066
  %v2068 = vmul.f32 %v2034, 1.442695
  %v2069 = vpow.pop %v2068
  %v2070 = vmul.f32 %v2035, 1.442695
  %v2071 = vpow.pop %v2070
  %v2072 = vmul.f32 %v2036, 1.442695
  %v2073 = vpow.pop %v2072
  %v2074 = vmul.f32 %v2037, 1.442695
  %v2075 = vpow.pop %v2074
  %v2076 = vmul.f32 %v2038, 1.442695
  %v2077 = vpow.pop %v2076
  %v2078 = vmul.f32 %v2039, 1.442695
  %v2079 = vpow.pop %v2078
  %v2080 = vmul.f32 %v2040, 1.442695
  %v2081 = vpow.pop %v2080
  %v2082 = vmul.f32 %v2041, 1.442695
  %v2083 = vpow.pop %v2082
  %v2084 = vmul.f32 %v2042, 1.442695
  %v2085 = vpow.pop %v2084
  %v2086 = vmul.f32 %v2043, 1.442695
  %v2087 = vpow.pop %v2086
  %v2088 = vmul.f32 %v2044, 1.442695
  %v2089 = vpow.pop %v2088
  %v2090 = vmul.f32 %v2045, 1.442695
  %v2091 = vpow.pop %v2090
  %v2092 = vmul.f32 %v2046, 1.442695
  %v2093 = vpow.pop %v2092
  %v2094 = vmul.f32 %v2047, 1.442695
  %v2095 = vpow.pop %v2094
  %v2096 = vmul.f32 %v2048, 1.442695
  %v2097 = vpow.pop %v2096
  %v2098 = vmul.f32 %v2049, 1.442695
  %v2099 = vpow.pop %v2098
  %v2100 = vmul.f32 %v2050, 1.442695
  %v2101 = vpow.pop %v2100
  %v2102 = vmul.f32 %v2051, 1.442695
  %v2103 = vpow.pop %v2102
  %v2104 = vmul.f32 %v2052, 1.442695
  %v2105 = vpow.pop %v2104
  %v2106 = vmul.f32 %v2053, 1.442695
  %v2107 = vpow.pop %v2106
  %v2108 = vmul.f32 %v2054, 1.442695
  %v2109 = vpow.pop %v2108
  %v2110 = vmul.f32 %v2055, 1.442695
  %v2111 = vpow.pop %v2110
  %v2112 = vmul.f32 %v2056, 1.442695
  %v2113 = vpow.pop %v2112
  %v2114 = vmul.f32 %v2057, 1.442695
  %v2115 = vpow.pop %v2114
  %v2116 = vmul.f32 %v2058, 1.442695
  %v2117 = vpow.pop %v2116
  %v2118 = vmul.f32 %v2059, 1.442695
  %v2119 = vpow.pop %v2118
  %v2120 = vmul.f32 %v2060, 1.442695
  %v2121 = vpow.pop %v2120
  %v2122 = vmul.f32 %v2061, 1.442695
  %v2123 = vpow.pop %v2122
  %v2124 = vmul.f32 %v2062, 1.442695
  %v2125 = vpow.pop %v2124
  %v2126 = vmul.f32 %v2063, 1.442695
  %v2127 = vpow.pop %v2126
  %v2128 = vsel %vm1935, %v2065, 0.0
  %2129 = vadd.xlane.f32.xlu0 %v2128
  %v2130 = vpop.xlane.xlu0 %2129
  %v2131 = vsel %vm1935, %v2067, 0.0
  %2132 = vadd.xlane.f32.xlu0 %v2131
  %v2133 = vpop.xlane.xlu0 %2132
  %v2134 = vsel %vm1935, %v2069, 0.0
  %2135 = vadd.xlane.f32.xlu0 %v2134
  %v2136 = vpop.xlane.xlu0 %2135
  %v2137 = vsel %vm1935, %v2071, 0.0
  %2138 = vadd.xlane.f32.xlu0 %v2137
  %v2139 = vpop.xlane.xlu0 %2138
  %v2140 = vsel %vm1935, %v2073, 0.0
  %2141 = vadd.xlane.f32.xlu0 %v2140
  %v2142 = vpop.xlane.xlu0 %2141
  %v2143 = vsel %vm1935, %v2075, 0.0
  %2144 = vadd.xlane.f32.xlu0 %v2143
  %v2145 = vpop.xlane.xlu0 %2144
  %v2146 = vsel %vm1935, %v2077, 0.0
  %2147 = vadd.xlane.f32.xlu0 %v2146
  %v2148 = vpop.xlane.xlu0 %2147
  %v2149 = vsel %vm1935, %v2079, 0.0
  %2150 = vadd.xlane.f32.xlu0 %v2149
  %v2151 = vpop.xlane.xlu0 %2150
  %v2152 = vsel %vm1935, %v2081, 0.0
  %2153 = vadd.xlane.f32.xlu0 %v2152
  %v2154 = vpop.xlane.xlu0 %2153
  %v2155 = vsel %vm1935, %v2083, 0.0
  %2156 = vadd.xlane.f32.xlu0 %v2155
  %v2157 = vpop.xlane.xlu0 %2156
  %v2158 = vsel %vm1935, %v2085, 0.0
  %2159 = vadd.xlane.f32.xlu0 %v2158
  %v2160 = vpop.xlane.xlu0 %2159
  %v2161 = vsel %vm1935, %v2087, 0.0
  %2162 = vadd.xlane.f32.xlu0 %v2161
  %v2163 = vpop.xlane.xlu0 %2162
  %v2164 = vsel %vm1935, %v2089, 0.0
  %2165 = vadd.xlane.f32.xlu0 %v2164
  %v2166 = vpop.xlane.xlu0 %2165
  %v2167 = vsel %vm1935, %v2091, 0.0
  %2168 = vadd.xlane.f32.xlu0 %v2167
  %v2169 = vpop.xlane.xlu0 %2168
  %v2170 = vsel %vm1935, %v2093, 0.0
  %2171 = vadd.xlane.f32.xlu0 %v2170
  %v2172 = vpop.xlane.xlu0 %2171
  %v2173 = vsel %vm1935, %v2095, 0.0
  %2174 = vadd.xlane.f32.xlu0 %v2173
  %v2175 = vpop.xlane.xlu0 %2174
  %v2176 = vsel %vm1935, %v2097, 0.0
  %2177 = vadd.xlane.f32.xlu0 %v2176
  %v2178 = vpop.xlane.xlu0 %2177
  %v2179 = vsel %vm1935, %v2099, 0.0
  %2180 = vadd.xlane.f32.xlu0 %v2179
  %v2181 = vpop.xlane.xlu0 %2180
  %v2182 = vsel %vm1935, %v2101, 0.0
  %2183 = vadd.xlane.f32.xlu0 %v2182
  %v2184 = vpop.xlane.xlu0 %2183
  %v2185 = vsel %vm1935, %v2103, 0.0
  %2186 = vadd.xlane.f32.xlu0 %v2185
  %v2187 = vpop.xlane.xlu0 %2186
  %v2188 = vsel %vm1935, %v2105, 0.0
  %2189 = vadd.xlane.f32.xlu0 %v2188
  %v2190 = vpop.xlane.xlu0 %2189
  %v2191 = vsel %vm1935, %v2107, 0.0
  %2192 = vadd.xlane.f32.xlu0 %v2191
  %v2193 = vpop.xlane.xlu0 %2192
  %v2194 = vsel %vm1935, %v2109, 0.0
  %2195 = vadd.xlane.f32.xlu0 %v2194
  %v2196 = vpop.xlane.xlu0 %2195
  %v2197 = vsel %vm1935, %v2111, 0.0
  %2198 = vadd.xlane.f32.xlu0 %v2197
  %v2199 = vpop.xlane.xlu0 %2198
  %v2200 = vsel %vm1935, %v2113, 0.0
  %2201 = vadd.xlane.f32.xlu0 %v2200
  %v2202 = vpop.xlane.xlu0 %2201
  %v2203 = vsel %vm1935, %v2115, 0.0
  %2204 = vadd.xlane.f32.xlu0 %v2203
  %v2205 = vpop.xlane.xlu0 %2204
  %v2206 = vsel %vm1935, %v2117, 0.0
  %2207 = vadd.xlane.f32.xlu0 %v2206
  %v2208 = vpop.xlane.xlu0 %2207
  %v2209 = vsel %vm1935, %v2119, 0.0
  %2210 = vadd.xlane.f32.xlu0 %v2209
  %v2211 = vpop.xlane.xlu0 %2210
  %v2212 = vsel %vm1935, %v2121, 0.0
  %2213 = vadd.xlane.f32.xlu0 %v2212
  %v2214 = vpop.xlane.xlu0 %2213
  %v2215 = vsel %vm1935, %v2123, 0.0
  %2216 = vadd.xlane.f32.xlu0 %v2215
  %v2217 = vpop.xlane.xlu0 %2216
  %v2218 = vsel %vm1935, %v2125, 0.0
  %2219 = vadd.xlane.f32.xlu0 %v2218
  %v2220 = vpop.xlane.xlu0 %2219
  %v2221 = vsel %vm1935, %v2127, 0.0
  %2222 = vadd.xlane.f32.xlu0 %v2221
  %v2223 = vpop.xlane.xlu0 %2222
  %v2224 = vrcp.pop %v2130
  %v2225 = vrcp.pop %v2133
  %v2226 = vrcp.pop %v2136
  %v2227 = vrcp.pop %v2139
  %v2228 = vrcp.pop %v2142
  %v2229 = vrcp.pop %v2145
  %v2230 = vrcp.pop %v2148
  %v2231 = vrcp.pop %v2151
  %v2232 = vrcp.pop %v2154
  %v2233 = vrcp.pop %v2157
  %v2234 = vrcp.pop %v2160
  %v2235 = vrcp.pop %v2163
  %v2236 = vrcp.pop %v2166
  %v2237 = vrcp.pop %v2169
  %v2238 = vrcp.pop %v2172
  %v2239 = vrcp.pop %v2175
  %v2240 = vrcp.pop %v2178
  %v2241 = vrcp.pop %v2181
  %v2242 = vrcp.pop %v2184
  %v2243 = vrcp.pop %v2187
  %v2244 = vrcp.pop %v2190
  %v2245 = vrcp.pop %v2193
  %v2246 = vrcp.pop %v2196
  %v2247 = vrcp.pop %v2199
  %v2248 = vrcp.pop %v2202
  %v2249 = vrcp.pop %v2205
  %v2250 = vrcp.pop %v2208
  %v2251 = vrcp.pop %v2211
  %v2252 = vrcp.pop %v2214
  %v2253 = vrcp.pop %v2217
  %v2254 = vrcp.pop %v2220
  %v2255 = vrcp.pop %v2223
  %v2256 = vmul.f32 %v2065, %v2224
  %v2257 = vmul.f32 %v2067, %v2225
  %v2258 = vmul.f32 %v2069, %v2226
  %v2259 = vmul.f32 %v2071, %v2227
  %v2260 = vmul.f32 %v2073, %v2228
  %v2261 = vmul.f32 %v2075, %v2229
  %v2262 = vmul.f32 %v2077, %v2230
  %v2263 = vmul.f32 %v2079, %v2231
  %v2264 = vmul.f32 %v2081, %v2232
  %v2265 = vmul.f32 %v2083, %v2233
  %v2266 = vmul.f32 %v2085, %v2234
  %v2267 = vmul.f32 %v2087, %v2235
  %v2268 = vmul.f32 %v2089, %v2236
  %v2269 = vmul.f32 %v2091, %v2237
  %v2270 = vmul.f32 %v2093, %v2238
  %v2271 = vmul.f32 %v2095, %v2239
  %v2272 = vmul.f32 %v2097, %v2240
  %v2273 = vmul.f32 %v2099, %v2241
  %v2274 = vmul.f32 %v2101, %v2242
  %v2275 = vmul.f32 %v2103, %v2243
  %v2276 = vmul.f32 %v2105, %v2244
  %v2277 = vmul.f32 %v2107, %v2245
  %v2278 = vmul.f32 %v2109, %v2246
  %v2279 = vmul.f32 %v2111, %v2247
  %v2280 = vmul.f32 %v2113, %v2248
  %v2281 = vmul.f32 %v2115, %v2249
  %v2282 = vmul.f32 %v2117, %v2250
  %v2283 = vmul.f32 %v2119, %v2251
  %v2284 = vmul.f32 %v2121, %v2252
  %v2285 = vmul.f32 %v2123, %v2253
  %v2286 = vmul.f32 %v2125, %v2254
  %v2287 = vmul.f32 %v2127, %v2255
  %2288 = vrot.lane.b32.xlu0 %v687, 64
  %v2289 = vpop.permute.xlu0 %2288
  %2290 = vrot.lane.b32.xlu0 %v688, 64
  %v2291 = vpop.permute.xlu0 %2290
  %2292 = vrot.lane.b32.xlu0 %v689, 64
  %v2293 = vpop.permute.xlu0 %2292
  %2294 = vrot.lane.b32.xlu0 %v690, 64
  %v2295 = vpop.permute.xlu0 %2294
  %2296 = vrot.lane.b32.xlu0 %v691, 64
  %v2297 = vpop.permute.xlu0 %2296
  %2298 = vrot.lane.b32.xlu0 %v692, 64
  %v2299 = vpop.permute.xlu0 %2298
  %2300 = vrot.lane.b32.xlu0 %v693, 64
  %v2301 = vpop.permute.xlu0 %2300
  %2302 = vrot.lane.b32.xlu0 %v694, 64
  %v2303 = vpop.permute.xlu0 %2302
  %2304 = vrot.lane.b32.xlu0 %v695, 64
  %v2305 = vpop.permute.xlu0 %2304
  %2306 = vrot.lane.b32.xlu0 %v696, 64
  %v2307 = vpop.permute.xlu0 %2306
  %2308 = vrot.lane.b32.xlu0 %v697, 64
  %v2309 = vpop.permute.xlu0 %2308
  %2310 = vrot.lane.b32.xlu0 %v698, 64
  %v2311 = vpop.permute.xlu0 %2310
  %2312 = vrot.lane.b32.xlu0 %v699, 64
  %v2313 = vpop.permute.xlu0 %2312
  %2314 = vrot.lane.b32.xlu0 %v700, 64
  %v2315 = vpop.permute.xlu0 %2314
  %2316 = vrot.lane.b32.xlu0 %v701, 64
  %v2317 = vpop.permute.xlu0 %2316
  %2318 = vrot.lane.b32.xlu0 %v702, 64
  %v2319 = vpop.permute.xlu0 %2318
  %v2336 = vmul.f32 %v2256, %v2289
  %v2337 = vmul.f32 %v2257, %v2289
  %v2338 = vmul.f32 %v2258, %v2291
  %v2339 = vmul.f32 %v2259, %v2291
  %v2340 = vmul.f32 %v2260, %v2293
  %v2341 = vmul.f32 %v2261, %v2293
  %v2342 = vmul.f32 %v2262, %v2295
  %v2343 = vmul.f32 %v2263, %v2295
  %v2344 = vmul.f32 %v2264, %v2297
  %v2345 = vmul.f32 %v2265, %v2297
  %v2346 = vmul.f32 %v2266, %v2299
  %v2347 = vmul.f32 %v2267, %v2299
  %v2348 = vmul.f32 %v2268, %v2301
  %v2349 = vmul.f32 %v2269, %v2301
  %v2350 = vmul.f32 %v2270, %v2303
  %v2351 = vmul.f32 %v2271, %v2303
  %v2352 = vmul.f32 %v2272, %v2305
  %v2353 = vmul.f32 %v2273, %v2305
  %v2354 = vmul.f32 %v2274, %v2307
  %v2355 = vmul.f32 %v2275, %v2307
  %v2356 = vmul.f32 %v2276, %v2309
  %v2357 = vmul.f32 %v2277, %v2309
  %v2358 = vmul.f32 %v2278, %v2311
  %v2359 = vmul.f32 %v2279, %v2311
  %v2360 = vmul.f32 %v2280, %v2313
  %v2361 = vmul.f32 %v2281, %v2313
  %v2362 = vmul.f32 %v2282, %v2315
  %v2363 = vmul.f32 %v2283, %v2315
  %v2364 = vmul.f32 %v2284, %v2317
  %v2365 = vmul.f32 %v2285, %v2317
  %v2366 = vmul.f32 %v2286, %v2319
  %v2367 = vmul.f32 %v2287, %v2319
  %v2368 = vsel %vm1935, %v2336, 0.0
  %2369 = vadd.xlane.f32.xlu0 %v2368
  %v2370 = vpop.xlane.xlu0 %2369
  %v2371 = vsel %vm1935, %v2337, 0.0
  %2372 = vadd.xlane.f32.xlu0 %v2371
  %v2373 = vpop.xlane.xlu0 %2372
  %v2374 = vsel %vm1935, %v2338, 0.0
  %2375 = vadd.xlane.f32.xlu0 %v2374
  %v2376 = vpop.xlane.xlu0 %2375
  %v2377 = vsel %vm1935, %v2339, 0.0
  %2378 = vadd.xlane.f32.xlu0 %v2377
  %v2379 = vpop.xlane.xlu0 %2378
  %v2380 = vsel %vm1935, %v2340, 0.0
  %2381 = vadd.xlane.f32.xlu0 %v2380
  %v2382 = vpop.xlane.xlu0 %2381
  %v2383 = vsel %vm1935, %v2341, 0.0
  %2384 = vadd.xlane.f32.xlu0 %v2383
  %v2385 = vpop.xlane.xlu0 %2384
  %v2386 = vsel %vm1935, %v2342, 0.0
  %2387 = vadd.xlane.f32.xlu0 %v2386
  %v2388 = vpop.xlane.xlu0 %2387
  %v2389 = vsel %vm1935, %v2343, 0.0
  %2390 = vadd.xlane.f32.xlu0 %v2389
  %v2391 = vpop.xlane.xlu0 %2390
  %v2392 = vsel %vm1935, %v2344, 0.0
  %2393 = vadd.xlane.f32.xlu0 %v2392
  %v2394 = vpop.xlane.xlu0 %2393
  %v2395 = vsel %vm1935, %v2345, 0.0
  %2396 = vadd.xlane.f32.xlu0 %v2395
  %v2397 = vpop.xlane.xlu0 %2396
  %v2398 = vsel %vm1935, %v2346, 0.0
  %2399 = vadd.xlane.f32.xlu0 %v2398
  %v2400 = vpop.xlane.xlu0 %2399
  %v2401 = vsel %vm1935, %v2347, 0.0
  %2402 = vadd.xlane.f32.xlu0 %v2401
  %v2403 = vpop.xlane.xlu0 %2402
  %v2404 = vsel %vm1935, %v2348, 0.0
  %2405 = vadd.xlane.f32.xlu0 %v2404
  %v2406 = vpop.xlane.xlu0 %2405
  %v2407 = vsel %vm1935, %v2349, 0.0
  %2408 = vadd.xlane.f32.xlu0 %v2407
  %v2409 = vpop.xlane.xlu0 %2408
  %v2410 = vsel %vm1935, %v2350, 0.0
  %2411 = vadd.xlane.f32.xlu0 %v2410
  %v2412 = vpop.xlane.xlu0 %2411
  %v2413 = vsel %vm1935, %v2351, 0.0
  %2414 = vadd.xlane.f32.xlu0 %v2413
  %v2415 = vpop.xlane.xlu0 %2414
  %v2416 = vsel %vm1935, %v2352, 0.0
  %2417 = vadd.xlane.f32.xlu0 %v2416
  %v2418 = vpop.xlane.xlu0 %2417
  %v2419 = vsel %vm1935, %v2353, 0.0
  %2420 = vadd.xlane.f32.xlu0 %v2419
  %v2421 = vpop.xlane.xlu0 %2420
  %v2422 = vsel %vm1935, %v2354, 0.0
  %2423 = vadd.xlane.f32.xlu0 %v2422
  %v2424 = vpop.xlane.xlu0 %2423
  %v2425 = vsel %vm1935, %v2355, 0.0
  %2426 = vadd.xlane.f32.xlu0 %v2425
  %v2427 = vpop.xlane.xlu0 %2426
  %v2428 = vsel %vm1935, %v2356, 0.0
  %2429 = vadd.xlane.f32.xlu0 %v2428
  %v2430 = vpop.xlane.xlu0 %2429
  %v2431 = vsel %vm1935, %v2357, 0.0
  %2432 = vadd.xlane.f32.xlu0 %v2431
  %v2433 = vpop.xlane.xlu0 %2432
  %v2434 = vsel %vm1935, %v2358, 0.0
  %2435 = vadd.xlane.f32.xlu0 %v2434
  %v2436 = vpop.xlane.xlu0 %2435
  %v2437 = vsel %vm1935, %v2359, 0.0
  %2438 = vadd.xlane.f32.xlu0 %v2437
  %v2439 = vpop.xlane.xlu0 %2438
  %v2440 = vsel %vm1935, %v2360, 0.0
  %2441 = vadd.xlane.f32.xlu0 %v2440
  %v2442 = vpop.xlane.xlu0 %2441
  %v2443 = vsel %vm1935, %v2361, 0.0
  %2444 = vadd.xlane.f32.xlu0 %v2443
  %v2445 = vpop.xlane.xlu0 %2444
  %v2446 = vsel %vm1935, %v2362, 0.0
  %2447 = vadd.xlane.f32.xlu0 %v2446
  %v2448 = vpop.xlane.xlu0 %2447
  %v2449 = vsel %vm1935, %v2363, 0.0
  %2450 = vadd.xlane.f32.xlu0 %v2449
  %v2451 = vpop.xlane.xlu0 %2450
  %v2452 = vsel %vm1935, %v2364, 0.0
  %2453 = vadd.xlane.f32.xlu0 %v2452
  %v2454 = vpop.xlane.xlu0 %2453
  %v2455 = vsel %vm1935, %v2365, 0.0
  %2456 = vadd.xlane.f32.xlu0 %v2455
  %v2457 = vpop.xlane.xlu0 %2456
  %v2458 = vsel %vm1935, %v2366, 0.0
  %2459 = vadd.xlane.f32.xlu0 %v2458
  %v2460 = vpop.xlane.xlu0 %2459
  %v2461 = vsel %vm1935, %v2367, 0.0
  %2462 = vadd.xlane.f32.xlu0 %v2461
  %v2463 = vpop.xlane.xlu0 %2462
  %2464 = vrot.lane.b32.xlu0 %v687, 48
  %v2465 = vpop.permute.xlu0 %2464
  %2466 = vrot.lane.b32.xlu0 %v688, 48
  %v2467 = vpop.permute.xlu0 %2466
  %2468 = vrot.lane.b32.xlu0 %v689, 48
  %v2469 = vpop.permute.xlu0 %2468
  %2470 = vrot.lane.b32.xlu0 %v690, 48
  %v2471 = vpop.permute.xlu0 %2470
  %2472 = vrot.lane.b32.xlu0 %v691, 48
  %v2473 = vpop.permute.xlu0 %2472
  %2474 = vrot.lane.b32.xlu0 %v692, 48
  %v2475 = vpop.permute.xlu0 %2474
  %2476 = vrot.lane.b32.xlu0 %v693, 48
  %v2477 = vpop.permute.xlu0 %2476
  %2478 = vrot.lane.b32.xlu0 %v694, 48
  %v2479 = vpop.permute.xlu0 %2478
  %2480 = vrot.lane.b32.xlu0 %v695, 48
  %v2481 = vpop.permute.xlu0 %2480
  %2482 = vrot.lane.b32.xlu0 %v696, 48
  %v2483 = vpop.permute.xlu0 %2482
  %2484 = vrot.lane.b32.xlu0 %v697, 48
  %v2485 = vpop.permute.xlu0 %2484
  %2486 = vrot.lane.b32.xlu0 %v698, 48
  %v2487 = vpop.permute.xlu0 %2486
  %2488 = vrot.lane.b32.xlu0 %v699, 48
  %v2489 = vpop.permute.xlu0 %2488
  %2490 = vrot.lane.b32.xlu0 %v700, 48
  %v2491 = vpop.permute.xlu0 %2490
  %2492 = vrot.lane.b32.xlu0 %v701, 48
  %v2493 = vpop.permute.xlu0 %2492
  %2494 = vrot.lane.b32.xlu0 %v702, 48
  %v2495 = vpop.permute.xlu0 %2494
  %v2512 = vmul.f32 %v2256, %v2465
  %v2513 = vmul.f32 %v2257, %v2465
  %v2514 = vmul.f32 %v2258, %v2467
  %v2515 = vmul.f32 %v2259, %v2467
  %v2516 = vmul.f32 %v2260, %v2469
  %v2517 = vmul.f32 %v2261, %v2469
  %v2518 = vmul.f32 %v2262, %v2471
  %v2519 = vmul.f32 %v2263, %v2471
  %v2520 = vmul.f32 %v2264, %v2473
  %v2521 = vmul.f32 %v2265, %v2473
  %v2522 = vmul.f32 %v2266, %v2475
  %v2523 = vmul.f32 %v2267, %v2475
  %v2524 = vmul.f32 %v2268, %v2477
  %v2525 = vmul.f32 %v2269, %v2477
  %v2526 = vmul.f32 %v2270, %v2479
  %v2527 = vmul.f32 %v2271, %v2479
  %v2528 = vmul.f32 %v2272, %v2481
  %v2529 = vmul.f32 %v2273, %v2481
  %v2530 = vmul.f32 %v2274, %v2483
  %v2531 = vmul.f32 %v2275, %v2483
  %v2532 = vmul.f32 %v2276, %v2485
  %v2533 = vmul.f32 %v2277, %v2485
  %v2534 = vmul.f32 %v2278, %v2487
  %v2535 = vmul.f32 %v2279, %v2487
  %v2536 = vmul.f32 %v2280, %v2489
  %v2537 = vmul.f32 %v2281, %v2489
  %v2538 = vmul.f32 %v2282, %v2491
  %v2539 = vmul.f32 %v2283, %v2491
  %v2540 = vmul.f32 %v2284, %v2493
  %v2541 = vmul.f32 %v2285, %v2493
  %v2542 = vmul.f32 %v2286, %v2495
  %v2543 = vmul.f32 %v2287, %v2495
  %v2544 = vsel %vm1935, %v2512, 0.0
  %2545 = vadd.xlane.f32.xlu0 %v2544
  %v2546 = vpop.xlane.xlu0 %2545
  %v2547 = vsel %vm1935, %v2513, 0.0
  %2548 = vadd.xlane.f32.xlu0 %v2547
  %v2549 = vpop.xlane.xlu0 %2548
  %v2550 = vsel %vm1935, %v2514, 0.0
  %2551 = vadd.xlane.f32.xlu0 %v2550
  %v2552 = vpop.xlane.xlu0 %2551
  %v2553 = vsel %vm1935, %v2515, 0.0
  %2554 = vadd.xlane.f32.xlu0 %v2553
  %v2555 = vpop.xlane.xlu0 %2554
  %v2556 = vsel %vm1935, %v2516, 0.0
  %2557 = vadd.xlane.f32.xlu0 %v2556
  %v2558 = vpop.xlane.xlu0 %2557
  %v2559 = vsel %vm1935, %v2517, 0.0
  %2560 = vadd.xlane.f32.xlu0 %v2559
  %v2561 = vpop.xlane.xlu0 %2560
  %v2562 = vsel %vm1935, %v2518, 0.0
  %2563 = vadd.xlane.f32.xlu0 %v2562
  %v2564 = vpop.xlane.xlu0 %2563
  %v2565 = vsel %vm1935, %v2519, 0.0
  %2566 = vadd.xlane.f32.xlu0 %v2565
  %v2567 = vpop.xlane.xlu0 %2566
  %v2568 = vsel %vm1935, %v2520, 0.0
  %2569 = vadd.xlane.f32.xlu0 %v2568
  %v2570 = vpop.xlane.xlu0 %2569
  %v2571 = vsel %vm1935, %v2521, 0.0
  %2572 = vadd.xlane.f32.xlu0 %v2571
  %v2573 = vpop.xlane.xlu0 %2572
  %v2574 = vsel %vm1935, %v2522, 0.0
  %2575 = vadd.xlane.f32.xlu0 %v2574
  %v2576 = vpop.xlane.xlu0 %2575
  %v2577 = vsel %vm1935, %v2523, 0.0
  %2578 = vadd.xlane.f32.xlu0 %v2577
  %v2579 = vpop.xlane.xlu0 %2578
  %v2580 = vsel %vm1935, %v2524, 0.0
  %2581 = vadd.xlane.f32.xlu0 %v2580
  %v2582 = vpop.xlane.xlu0 %2581
  %v2583 = vsel %vm1935, %v2525, 0.0
  %2584 = vadd.xlane.f32.xlu0 %v2583
  %v2585 = vpop.xlane.xlu0 %2584
  %v2586 = vsel %vm1935, %v2526, 0.0
  %2587 = vadd.xlane.f32.xlu0 %v2586
  %v2588 = vpop.xlane.xlu0 %2587
  %v2589 = vsel %vm1935, %v2527, 0.0
  %2590 = vadd.xlane.f32.xlu0 %v2589
  %v2591 = vpop.xlane.xlu0 %2590
  %v2592 = vsel %vm1935, %v2528, 0.0
  %2593 = vadd.xlane.f32.xlu0 %v2592
  %v2594 = vpop.xlane.xlu0 %2593
  %v2595 = vsel %vm1935, %v2529, 0.0
  %2596 = vadd.xlane.f32.xlu0 %v2595
  %v2597 = vpop.xlane.xlu0 %2596
  %v2598 = vsel %vm1935, %v2530, 0.0
  %2599 = vadd.xlane.f32.xlu0 %v2598
  %v2600 = vpop.xlane.xlu0 %2599
  %v2601 = vsel %vm1935, %v2531, 0.0
  %2602 = vadd.xlane.f32.xlu0 %v2601
  %v2603 = vpop.xlane.xlu0 %2602
  %v2604 = vsel %vm1935, %v2532, 0.0
  %2605 = vadd.xlane.f32.xlu0 %v2604
  %v2606 = vpop.xlane.xlu0 %2605
  %v2607 = vsel %vm1935, %v2533, 0.0
  %2608 = vadd.xlane.f32.xlu0 %v2607
  %v2609 = vpop.xlane.xlu0 %2608
  %v2610 = vsel %vm1935, %v2534, 0.0
  %2611 = vadd.xlane.f32.xlu0 %v2610
  %v2612 = vpop.xlane.xlu0 %2611
  %v2613 = vsel %vm1935, %v2535, 0.0
  %2614 = vadd.xlane.f32.xlu0 %v2613
  %v2615 = vpop.xlane.xlu0 %2614
  %v2616 = vsel %vm1935, %v2536, 0.0
  %2617 = vadd.xlane.f32.xlu0 %v2616
  %v2618 = vpop.xlane.xlu0 %2617
  %v2619 = vsel %vm1935, %v2537, 0.0
  %2620 = vadd.xlane.f32.xlu0 %v2619
  %v2621 = vpop.xlane.xlu0 %2620
  %v2622 = vsel %vm1935, %v2538, 0.0
  %2623 = vadd.xlane.f32.xlu0 %v2622
  %v2624 = vpop.xlane.xlu0 %2623
  %v2625 = vsel %vm1935, %v2539, 0.0
  %2626 = vadd.xlane.f32.xlu0 %v2625
  %v2627 = vpop.xlane.xlu0 %2626
  %v2628 = vsel %vm1935, %v2540, 0.0
  %2629 = vadd.xlane.f32.xlu0 %v2628
  %v2630 = vpop.xlane.xlu0 %2629
  %v2631 = vsel %vm1935, %v2541, 0.0
  %2632 = vadd.xlane.f32.xlu0 %v2631
  %v2633 = vpop.xlane.xlu0 %2632
  %v2634 = vsel %vm1935, %v2542, 0.0
  %2635 = vadd.xlane.f32.xlu0 %v2634
  %v2636 = vpop.xlane.xlu0 %2635
  %v2637 = vsel %vm1935, %v2543, 0.0
  %2638 = vadd.xlane.f32.xlu0 %v2637
  %v2639 = vpop.xlane.xlu0 %2638
  %2640 = vrot.lane.b32.xlu0 %v687, 32
  %v2641 = vpop.permute.xlu0 %2640
  %2642 = vrot.lane.b32.xlu0 %v688, 32
  %v2643 = vpop.permute.xlu0 %2642
  %2644 = vrot.lane.b32.xlu0 %v689, 32
  %v2645 = vpop.permute.xlu0 %2644
  %2646 = vrot.lane.b32.xlu0 %v690, 32
  %v2647 = vpop.permute.xlu0 %2646
  %2648 = vrot.lane.b32.xlu0 %v691, 32
  %v2649 = vpop.permute.xlu0 %2648
  %2650 = vrot.lane.b32.xlu0 %v692, 32
  %v2651 = vpop.permute.xlu0 %2650
  %2652 = vrot.lane.b32.xlu0 %v693, 32
  %v2653 = vpop.permute.xlu0 %2652
  %2654 = vrot.lane.b32.xlu0 %v694, 32
  %v2655 = vpop.permute.xlu0 %2654
  %2656 = vrot.lane.b32.xlu0 %v695, 32
  %v2657 = vpop.permute.xlu0 %2656
  %2658 = vrot.lane.b32.xlu0 %v696, 32
  %v2659 = vpop.permute.xlu0 %2658
  %2660 = vrot.lane.b32.xlu0 %v697, 32
  %v2661 = vpop.permute.xlu0 %2660
  %2662 = vrot.lane.b32.xlu0 %v698, 32
  %v2663 = vpop.permute.xlu0 %2662
  %2664 = vrot.lane.b32.xlu0 %v699, 32
  %v2665 = vpop.permute.xlu0 %2664
  %2666 = vrot.lane.b32.xlu0 %v700, 32
  %v2667 = vpop.permute.xlu0 %2666
  %2668 = vrot.lane.b32.xlu0 %v701, 32
  %v2669 = vpop.permute.xlu0 %2668
  %2670 = vrot.lane.b32.xlu0 %v702, 32
  %v2671 = vpop.permute.xlu0 %2670
  %v2688 = vmul.f32 %v2256, %v2641
  %v2689 = vmul.f32 %v2257, %v2641
  %v2690 = vmul.f32 %v2258, %v2643
  %v2691 = vmul.f32 %v2259, %v2643
  %v2692 = vmul.f32 %v2260, %v2645
  %v2693 = vmul.f32 %v2261, %v2645
  %v2694 = vmul.f32 %v2262, %v2647
  %v2695 = vmul.f32 %v2263, %v2647
  %v2696 = vmul.f32 %v2264, %v2649
  %v2697 = vmul.f32 %v2265, %v2649
  %v2698 = vmul.f32 %v2266, %v2651
  %v2699 = vmul.f32 %v2267, %v2651
  %v2700 = vmul.f32 %v2268, %v2653
  %v2701 = vmul.f32 %v2269, %v2653
  %v2702 = vmul.f32 %v2270, %v2655
  %v2703 = vmul.f32 %v2271, %v2655
  %v2704 = vmul.f32 %v2272, %v2657
  %v2705 = vmul.f32 %v2273, %v2657
  %v2706 = vmul.f32 %v2274, %v2659
  %v2707 = vmul.f32 %v2275, %v2659
  %v2708 = vmul.f32 %v2276, %v2661
  %v2709 = vmul.f32 %v2277, %v2661
  %v2710 = vmul.f32 %v2278, %v2663
  %v2711 = vmul.f32 %v2279, %v2663
  %v2712 = vmul.f32 %v2280, %v2665
  %v2713 = vmul.f32 %v2281, %v2665
  %v2714 = vmul.f32 %v2282, %v2667
  %v2715 = vmul.f32 %v2283, %v2667
  %v2716 = vmul.f32 %v2284, %v2669
  %v2717 = vmul.f32 %v2285, %v2669
  %v2718 = vmul.f32 %v2286, %v2671
  %v2719 = vmul.f32 %v2287, %v2671
  %v2720 = vsel %vm1935, %v2688, 0.0
  %2721 = vadd.xlane.f32.xlu0 %v2720
  %v2722 = vpop.xlane.xlu0 %2721
  %v2723 = vsel %vm1935, %v2689, 0.0
  %2724 = vadd.xlane.f32.xlu0 %v2723
  %v2725 = vpop.xlane.xlu0 %2724
  %v2726 = vsel %vm1935, %v2690, 0.0
  %2727 = vadd.xlane.f32.xlu0 %v2726
  %v2728 = vpop.xlane.xlu0 %2727
  %v2729 = vsel %vm1935, %v2691, 0.0
  %2730 = vadd.xlane.f32.xlu0 %v2729
  %v2731 = vpop.xlane.xlu0 %2730
  %v2732 = vsel %vm1935, %v2692, 0.0
  %2733 = vadd.xlane.f32.xlu0 %v2732
  %v2734 = vpop.xlane.xlu0 %2733
  %v2735 = vsel %vm1935, %v2693, 0.0
  %2736 = vadd.xlane.f32.xlu0 %v2735
  %v2737 = vpop.xlane.xlu0 %2736
  %v2738 = vsel %vm1935, %v2694, 0.0
  %2739 = vadd.xlane.f32.xlu0 %v2738
  %v2740 = vpop.xlane.xlu0 %2739
  %v2741 = vsel %vm1935, %v2695, 0.0
  %2742 = vadd.xlane.f32.xlu0 %v2741
  %v2743 = vpop.xlane.xlu0 %2742
  %v2744 = vsel %vm1935, %v2696, 0.0
  %2745 = vadd.xlane.f32.xlu0 %v2744
  %v2746 = vpop.xlane.xlu0 %2745
  %v2747 = vsel %vm1935, %v2697, 0.0
  %2748 = vadd.xlane.f32.xlu0 %v2747
  %v2749 = vpop.xlane.xlu0 %2748
  %v2750 = vsel %vm1935, %v2698, 0.0
  %2751 = vadd.xlane.f32.xlu0 %v2750
  %v2752 = vpop.xlane.xlu0 %2751
  %v2753 = vsel %vm1935, %v2699, 0.0
  %2754 = vadd.xlane.f32.xlu0 %v2753
  %v2755 = vpop.xlane.xlu0 %2754
  %v2756 = vsel %vm1935, %v2700, 0.0
  %2757 = vadd.xlane.f32.xlu0 %v2756
  %v2758 = vpop.xlane.xlu0 %2757
  %v2759 = vsel %vm1935, %v2701, 0.0
  %2760 = vadd.xlane.f32.xlu0 %v2759
  %v2761 = vpop.xlane.xlu0 %2760
  %v2762 = vsel %vm1935, %v2702, 0.0
  %2763 = vadd.xlane.f32.xlu0 %v2762
  %v2764 = vpop.xlane.xlu0 %2763
  %v2765 = vsel %vm1935, %v2703, 0.0
  %2766 = vadd.xlane.f32.xlu0 %v2765
  %v2767 = vpop.xlane.xlu0 %2766
  %v2768 = vsel %vm1935, %v2704, 0.0
  %2769 = vadd.xlane.f32.xlu0 %v2768
  %v2770 = vpop.xlane.xlu0 %2769
  %v2771 = vsel %vm1935, %v2705, 0.0
  %2772 = vadd.xlane.f32.xlu0 %v2771
  %v2773 = vpop.xlane.xlu0 %2772
  %v2774 = vsel %vm1935, %v2706, 0.0
  %2775 = vadd.xlane.f32.xlu0 %v2774
  %v2776 = vpop.xlane.xlu0 %2775
  %v2777 = vsel %vm1935, %v2707, 0.0
  %2778 = vadd.xlane.f32.xlu0 %v2777
  %v2779 = vpop.xlane.xlu0 %2778
  %v2780 = vsel %vm1935, %v2708, 0.0
  %2781 = vadd.xlane.f32.xlu0 %v2780
  %v2782 = vpop.xlane.xlu0 %2781
  %v2783 = vsel %vm1935, %v2709, 0.0
  %2784 = vadd.xlane.f32.xlu0 %v2783
  %v2785 = vpop.xlane.xlu0 %2784
  %v2786 = vsel %vm1935, %v2710, 0.0
  %2787 = vadd.xlane.f32.xlu0 %v2786
  %v2788 = vpop.xlane.xlu0 %2787
  %v2789 = vsel %vm1935, %v2711, 0.0
  %2790 = vadd.xlane.f32.xlu0 %v2789
  %v2791 = vpop.xlane.xlu0 %2790
  %v2792 = vsel %vm1935, %v2712, 0.0
  %2793 = vadd.xlane.f32.xlu0 %v2792
  %v2794 = vpop.xlane.xlu0 %2793
  %v2795 = vsel %vm1935, %v2713, 0.0
  %2796 = vadd.xlane.f32.xlu0 %v2795
  %v2797 = vpop.xlane.xlu0 %2796
  %v2798 = vsel %vm1935, %v2714, 0.0
  %2799 = vadd.xlane.f32.xlu0 %v2798
  %v2800 = vpop.xlane.xlu0 %2799
  %v2801 = vsel %vm1935, %v2715, 0.0
  %2802 = vadd.xlane.f32.xlu0 %v2801
  %v2803 = vpop.xlane.xlu0 %2802
  %v2804 = vsel %vm1935, %v2716, 0.0
  %2805 = vadd.xlane.f32.xlu0 %v2804
  %v2806 = vpop.xlane.xlu0 %2805
  %v2807 = vsel %vm1935, %v2717, 0.0
  %2808 = vadd.xlane.f32.xlu0 %v2807
  %v2809 = vpop.xlane.xlu0 %2808
  %v2810 = vsel %vm1935, %v2718, 0.0
  %2811 = vadd.xlane.f32.xlu0 %v2810
  %v2812 = vpop.xlane.xlu0 %2811
  %v2813 = vsel %vm1935, %v2719, 0.0
  %2814 = vadd.xlane.f32.xlu0 %v2813
  %v2815 = vpop.xlane.xlu0 %2814
  %2816 = vrot.lane.b32.xlu0 %v687, 16
  %v2817 = vpop.permute.xlu0 %2816
  %2818 = vrot.lane.b32.xlu0 %v688, 16
  %v2819 = vpop.permute.xlu0 %2818
  %2820 = vrot.lane.b32.xlu0 %v689, 16
  %v2821 = vpop.permute.xlu0 %2820
  %2822 = vrot.lane.b32.xlu0 %v690, 16
  %v2823 = vpop.permute.xlu0 %2822
  %2824 = vrot.lane.b32.xlu0 %v691, 16
  %v2825 = vpop.permute.xlu0 %2824
  %2826 = vrot.lane.b32.xlu0 %v692, 16
  %v2827 = vpop.permute.xlu0 %2826
  %2828 = vrot.lane.b32.xlu0 %v693, 16
  %v2829 = vpop.permute.xlu0 %2828
  %2830 = vrot.lane.b32.xlu0 %v694, 16
  %v2831 = vpop.permute.xlu0 %2830
  %2832 = vrot.lane.b32.xlu0 %v695, 16
  %v2833 = vpop.permute.xlu0 %2832
  %2834 = vrot.lane.b32.xlu0 %v696, 16
  %v2835 = vpop.permute.xlu0 %2834
  %2836 = vrot.lane.b32.xlu0 %v697, 16
  %v2837 = vpop.permute.xlu0 %2836
  %2838 = vrot.lane.b32.xlu0 %v698, 16
  %v2839 = vpop.permute.xlu0 %2838
  %2840 = vrot.lane.b32.xlu0 %v699, 16
  %v2841 = vpop.permute.xlu0 %2840
  %2842 = vrot.lane.b32.xlu0 %v700, 16
  %v2843 = vpop.permute.xlu0 %2842
  %2844 = vrot.lane.b32.xlu0 %v701, 16
  %v2845 = vpop.permute.xlu0 %2844
  %2846 = vrot.lane.b32.xlu0 %v702, 16
  %v2847 = vpop.permute.xlu0 %2846
  %v2864 = vmul.f32 %v2256, %v2817
  %v2865 = vmul.f32 %v2257, %v2817
  %v2866 = vmul.f32 %v2258, %v2819
  %v2867 = vmul.f32 %v2259, %v2819
  %v2868 = vmul.f32 %v2260, %v2821
  %v2869 = vmul.f32 %v2261, %v2821
  %v2870 = vmul.f32 %v2262, %v2823
  %v2871 = vmul.f32 %v2263, %v2823
  %v2872 = vmul.f32 %v2264, %v2825
  %v2873 = vmul.f32 %v2265, %v2825
  %v2874 = vmul.f32 %v2266, %v2827
  %v2875 = vmul.f32 %v2267, %v2827
  %v2876 = vmul.f32 %v2268, %v2829
  %v2877 = vmul.f32 %v2269, %v2829
  %v2878 = vmul.f32 %v2270, %v2831
  %v2879 = vmul.f32 %v2271, %v2831
  %v2880 = vmul.f32 %v2272, %v2833
  %v2881 = vmul.f32 %v2273, %v2833
  %v2882 = vmul.f32 %v2274, %v2835
  %v2883 = vmul.f32 %v2275, %v2835
  %v2884 = vmul.f32 %v2276, %v2837
  %v2885 = vmul.f32 %v2277, %v2837
  %v2886 = vmul.f32 %v2278, %v2839
  %v2887 = vmul.f32 %v2279, %v2839
  %v2888 = vmul.f32 %v2280, %v2841
  %v2889 = vmul.f32 %v2281, %v2841
  %v2890 = vmul.f32 %v2282, %v2843
  %v2891 = vmul.f32 %v2283, %v2843
  %v2892 = vmul.f32 %v2284, %v2845
  %v2893 = vmul.f32 %v2285, %v2845
  %v2894 = vmul.f32 %v2286, %v2847
  %v2895 = vmul.f32 %v2287, %v2847
  %v2896 = vsel %vm1935, %v2864, 0.0
  %2897 = vadd.xlane.f32.xlu0 %v2896
  %v2898 = vpop.xlane.xlu0 %2897
  %v2899 = vsel %vm1935, %v2865, 0.0
  %2900 = vadd.xlane.f32.xlu0 %v2899
  %v2901 = vpop.xlane.xlu0 %2900
  %v2902 = vsel %vm1935, %v2866, 0.0
  %2903 = vadd.xlane.f32.xlu0 %v2902
  %v2904 = vpop.xlane.xlu0 %2903
  %v2905 = vsel %vm1935, %v2867, 0.0
  %2906 = vadd.xlane.f32.xlu0 %v2905
  %v2907 = vpop.xlane.xlu0 %2906
  %v2908 = vsel %vm1935, %v2868, 0.0
  %2909 = vadd.xlane.f32.xlu0 %v2908
  %v2910 = vpop.xlane.xlu0 %2909
  %v2911 = vsel %vm1935, %v2869, 0.0
  %2912 = vadd.xlane.f32.xlu0 %v2911
  %v2913 = vpop.xlane.xlu0 %2912
  %v2914 = vsel %vm1935, %v2870, 0.0
  %2915 = vadd.xlane.f32.xlu0 %v2914
  %v2916 = vpop.xlane.xlu0 %2915
  %v2917 = vsel %vm1935, %v2871, 0.0
  %2918 = vadd.xlane.f32.xlu0 %v2917
  %v2919 = vpop.xlane.xlu0 %2918
  %v2920 = vsel %vm1935, %v2872, 0.0
  %2921 = vadd.xlane.f32.xlu0 %v2920
  %v2922 = vpop.xlane.xlu0 %2921
  %v2923 = vsel %vm1935, %v2873, 0.0
  %2924 = vadd.xlane.f32.xlu0 %v2923
  %v2925 = vpop.xlane.xlu0 %2924
  %v2926 = vsel %vm1935, %v2874, 0.0
  %2927 = vadd.xlane.f32.xlu0 %v2926
  %v2928 = vpop.xlane.xlu0 %2927
  %v2929 = vsel %vm1935, %v2875, 0.0
  %2930 = vadd.xlane.f32.xlu0 %v2929
  %v2931 = vpop.xlane.xlu0 %2930
  %v2932 = vsel %vm1935, %v2876, 0.0
  %2933 = vadd.xlane.f32.xlu0 %v2932
  %v2934 = vpop.xlane.xlu0 %2933
  %v2935 = vsel %vm1935, %v2877, 0.0
  %2936 = vadd.xlane.f32.xlu0 %v2935
  %v2937 = vpop.xlane.xlu0 %2936
  %v2938 = vsel %vm1935, %v2878, 0.0
  %2939 = vadd.xlane.f32.xlu0 %v2938
  %v2940 = vpop.xlane.xlu0 %2939
  %v2941 = vsel %vm1935, %v2879, 0.0
  %2942 = vadd.xlane.f32.xlu0 %v2941
  %v2943 = vpop.xlane.xlu0 %2942
  %v2944 = vsel %vm1935, %v2880, 0.0
  %2945 = vadd.xlane.f32.xlu0 %v2944
  %v2946 = vpop.xlane.xlu0 %2945
  %v2947 = vsel %vm1935, %v2881, 0.0
  %2948 = vadd.xlane.f32.xlu0 %v2947
  %v2949 = vpop.xlane.xlu0 %2948
  %v2950 = vsel %vm1935, %v2882, 0.0
  %2951 = vadd.xlane.f32.xlu0 %v2950
  %v2952 = vpop.xlane.xlu0 %2951
  %v2953 = vsel %vm1935, %v2883, 0.0
  %2954 = vadd.xlane.f32.xlu0 %v2953
  %v2955 = vpop.xlane.xlu0 %2954
  %v2956 = vsel %vm1935, %v2884, 0.0
  %2957 = vadd.xlane.f32.xlu0 %v2956
  %v2958 = vpop.xlane.xlu0 %2957
  %v2959 = vsel %vm1935, %v2885, 0.0
  %2960 = vadd.xlane.f32.xlu0 %v2959
  %v2961 = vpop.xlane.xlu0 %2960
  %v2962 = vsel %vm1935, %v2886, 0.0
  %2963 = vadd.xlane.f32.xlu0 %v2962
  %v2964 = vpop.xlane.xlu0 %2963
  %v2965 = vsel %vm1935, %v2887, 0.0
  %2966 = vadd.xlane.f32.xlu0 %v2965
  %v2967 = vpop.xlane.xlu0 %2966
  %v2968 = vsel %vm1935, %v2888, 0.0
  %2969 = vadd.xlane.f32.xlu0 %v2968
  %v2970 = vpop.xlane.xlu0 %2969
  %v2971 = vsel %vm1935, %v2889, 0.0
  %2972 = vadd.xlane.f32.xlu0 %v2971
  %v2973 = vpop.xlane.xlu0 %2972
  %v2974 = vsel %vm1935, %v2890, 0.0
  %2975 = vadd.xlane.f32.xlu0 %v2974
  %v2976 = vpop.xlane.xlu0 %2975
  %v2977 = vsel %vm1935, %v2891, 0.0
  %2978 = vadd.xlane.f32.xlu0 %v2977
  %v2979 = vpop.xlane.xlu0 %2978
  %v2980 = vsel %vm1935, %v2892, 0.0
  %2981 = vadd.xlane.f32.xlu0 %v2980
  %v2982 = vpop.xlane.xlu0 %2981
  %v2983 = vsel %vm1935, %v2893, 0.0
  %2984 = vadd.xlane.f32.xlu0 %v2983
  %v2985 = vpop.xlane.xlu0 %2984
  %v2986 = vsel %vm1935, %v2894, 0.0
  %2987 = vadd.xlane.f32.xlu0 %v2986
  %v2988 = vpop.xlane.xlu0 %2987
  %v2989 = vsel %vm1935, %v2895, 0.0
  %2990 = vadd.xlane.f32.xlu0 %v2989
  %v2991 = vpop.xlane.xlu0 %2990
  %v3024 = vlaneseq
  %v3025 = vand.u32 %v3024, 127
  %v3026 = vperm.slane %v2370, %v3025
  %v3027 = vadd.s32 %v3025, 4294967288
  %v3028 = vperm.slane %v2373, %v3027
  %vm3029 = vcmask 130112
  %v3030 = vsel %vm3029, %v3028, %v3026
  %v3031 = vperm.slane %v2376, %v3025
  %v3032 = vperm.slane %v2379, %v3027
  %v3033 = vsel %vm3029, %v3032, %v3031
  %v3034 = vperm.slane %v2382, %v3025
  %v3035 = vperm.slane %v2385, %v3027
  %v3036 = vsel %vm3029, %v3035, %v3034
  %v3037 = vperm.slane %v2388, %v3025
  %v3038 = vperm.slane %v2391, %v3027
  %v3039 = vsel %vm3029, %v3038, %v3037
  %v3040 = vperm.slane %v2394, %v3025
  %v3041 = vperm.slane %v2397, %v3027
  %v3042 = vsel %vm3029, %v3041, %v3040
  %v3043 = vperm.slane %v2400, %v3025
  %v3044 = vperm.slane %v2403, %v3027
  %v3045 = vsel %vm3029, %v3044, %v3043
  %v3046 = vperm.slane %v2406, %v3025
  %v3047 = vperm.slane %v2409, %v3027
  %v3048 = vsel %vm3029, %v3047, %v3046
  %v3049 = vperm.slane %v2412, %v3025
  %v3050 = vperm.slane %v2415, %v3027
  %v3051 = vsel %vm3029, %v3050, %v3049
  %v3052 = vperm.slane %v2418, %v3025
  %v3053 = vperm.slane %v2421, %v3027
  %v3054 = vsel %vm3029, %v3053, %v3052
  %v3055 = vperm.slane %v2424, %v3025
  %v3056 = vperm.slane %v2427, %v3027
  %v3057 = vsel %vm3029, %v3056, %v3055
  %v3058 = vperm.slane %v2430, %v3025
  %v3059 = vperm.slane %v2433, %v3027
  %v3060 = vsel %vm3029, %v3059, %v3058
  %v3061 = vperm.slane %v2436, %v3025
  %v3062 = vperm.slane %v2439, %v3027
  %v3063 = vsel %vm3029, %v3062, %v3061
  %v3064 = vperm.slane %v2442, %v3025
  %v3065 = vperm.slane %v2445, %v3027
  %v3066 = vsel %vm3029, %v3065, %v3064
  %v3067 = vperm.slane %v2448, %v3025
  %v3068 = vperm.slane %v2451, %v3027
  %v3069 = vsel %vm3029, %v3068, %v3067
  %v3070 = vperm.slane %v2454, %v3025
  %v3071 = vperm.slane %v2457, %v3027
  %v3072 = vsel %vm3029, %v3071, %v3070
  %v3073 = vperm.slane %v2460, %v3025
  %v3074 = vperm.slane %v2463, %v3027
  %v3075 = vsel %vm3029, %v3074, %v3073
  %vm3076 = vcmask 1041409
  %v3077 = vsel %vm3076, %v3033, %v3030
  %vm3078 = vcmask 1042434
  %v3079 = vsel %vm3078, %v3036, %v3077
  %vm3080 = vcmask 1043459
  %v3081 = vsel %vm3080, %v3039, %v3079
  %vm3082 = vcmask 1044484
  %v3083 = vsel %vm3082, %v3042, %v3081
  %vm3084 = vcmask 1045509
  %v3085 = vsel %vm3084, %v3045, %v3083
  %vm3086 = vcmask 1046534
  %v3087 = vsel %vm3086, %v3048, %v3085
  %vm3088 = vcmask 1047559
  %v3089 = vsel %vm3088, %v3051, %v3087
  %v3090 = vsel %vm3076, %v3057, %v3054
  %v3091 = vsel %vm3078, %v3060, %v3090
  %v3092 = vsel %vm3080, %v3063, %v3091
  %v3093 = vsel %vm3082, %v3066, %v3092
  %v3094 = vsel %vm3084, %v3069, %v3093
  %v3095 = vsel %vm3086, %v3072, %v3094
  %v3096 = vsel %vm3088, %v3075, %v3095
  %v3131 = vadd.s32 %v3025, 4294967280
  %v3132 = vperm.slane %v2546, %v3131
  %v3133 = vadd.s32 %v3025, 4294967272
  %v3134 = vperm.slane %v2549, %v3133
  %vm3135 = vcmask 261312
  %v3136 = vsel %vm3135, %v3134, %v3132
  %v3137 = vperm.slane %v2552, %v3131
  %v3138 = vperm.slane %v2555, %v3133
  %v3139 = vsel %vm3135, %v3138, %v3137
  %v3140 = vperm.slane %v2558, %v3131
  %v3141 = vperm.slane %v2561, %v3133
  %v3142 = vsel %vm3135, %v3141, %v3140
  %v3143 = vperm.slane %v2564, %v3131
  %v3144 = vperm.slane %v2567, %v3133
  %v3145 = vsel %vm3135, %v3144, %v3143
  %v3146 = vperm.slane %v2570, %v3131
  %v3147 = vperm.slane %v2573, %v3133
  %v3148 = vsel %vm3135, %v3147, %v3146
  %v3149 = vperm.slane %v2576, %v3131
  %v3150 = vperm.slane %v2579, %v3133
  %v3151 = vsel %vm3135, %v3150, %v3149
  %v3152 = vperm.slane %v2582, %v3131
  %v3153 = vperm.slane %v2585, %v3133
  %v3154 = vsel %vm3135, %v3153, %v3152
  %v3155 = vperm.slane %v2588, %v3131
  %v3156 = vperm.slane %v2591, %v3133
  %v3157 = vsel %vm3135, %v3156, %v3155
  %v3158 = vperm.slane %v2594, %v3131
  %v3159 = vperm.slane %v2597, %v3133
  %v3160 = vsel %vm3135, %v3159, %v3158
  %v3161 = vperm.slane %v2600, %v3131
  %v3162 = vperm.slane %v2603, %v3133
  %v3163 = vsel %vm3135, %v3162, %v3161
  %v3164 = vperm.slane %v2606, %v3131
  %v3165 = vperm.slane %v2609, %v3133
  %v3166 = vsel %vm3135, %v3165, %v3164
  %v3167 = vperm.slane %v2612, %v3131
  %v3168 = vperm.slane %v2615, %v3133
  %v3169 = vsel %vm3135, %v3168, %v3167
  %v3170 = vperm.slane %v2618, %v3131
  %v3171 = vperm.slane %v2621, %v3133
  %v3172 = vsel %vm3135, %v3171, %v3170
  %v3173 = vperm.slane %v2624, %v3131
  %v3174 = vperm.slane %v2627, %v3133
  %v3175 = vsel %vm3135, %v3174, %v3173
  %v3176 = vperm.slane %v2630, %v3131
  %v3177 = vperm.slane %v2633, %v3133
  %v3178 = vsel %vm3135, %v3177, %v3176
  %v3179 = vperm.slane %v2636, %v3131
  %v3180 = vperm.slane %v2639, %v3133
  %v3181 = vsel %vm3135, %v3180, %v3179
  %v3182 = vsel %vm3076, %v3139, %v3136
  %v3183 = vsel %vm3078, %v3142, %v3182
  %v3184 = vsel %vm3080, %v3145, %v3183
  %v3185 = vsel %vm3082, %v3148, %v3184
  %v3186 = vsel %vm3084, %v3151, %v3185
  %v3187 = vsel %vm3086, %v3154, %v3186
  %v3188 = vsel %vm3088, %v3157, %v3187
  %v3189 = vsel %vm3076, %v3163, %v3160
  %v3190 = vsel %vm3078, %v3166, %v3189
  %v3191 = vsel %vm3080, %v3169, %v3190
  %v3192 = vsel %vm3082, %v3172, %v3191
  %v3193 = vsel %vm3084, %v3175, %v3192
  %v3194 = vsel %vm3086, %v3178, %v3193
  %v3195 = vsel %vm3088, %v3181, %v3194
  %v3230 = vadd.s32 %v3025, 4294967264
  %v3231 = vperm.slane %v2722, %v3230
  %v3232 = vadd.s32 %v3025, 4294967256
  %v3233 = vperm.slane %v2725, %v3232
  %vm3234 = vcmask 392512
  %v3235 = vsel %vm3234, %v3233, %v3231
  %v3236 = vperm.slane %v2728, %v3230
  %v3237 = vperm.slane %v2731, %v3232
  %v3238 = vsel %vm3234, %v3237, %v3236
  %v3239 = vperm.slane %v2734, %v3230
  %v3240 = vperm.slane %v2737, %v3232
  %v3241 = vsel %vm3234, %v3240, %v3239
  %v3242 = vperm.slane %v2740, %v3230
  %v3243 = vperm.slane %v2743, %v3232
  %v3244 = vsel %vm3234, %v3243, %v3242
  %v3245 = vperm.slane %v2746, %v3230
  %v3246 = vperm.slane %v2749, %v3232
  %v3247 = vsel %vm3234, %v3246, %v3245
  %v3248 = vperm.slane %v2752, %v3230
  %v3249 = vperm.slane %v2755, %v3232
  %v3250 = vsel %vm3234, %v3249, %v3248
  %v3251 = vperm.slane %v2758, %v3230
  %v3252 = vperm.slane %v2761, %v3232
  %v3253 = vsel %vm3234, %v3252, %v3251
  %v3254 = vperm.slane %v2764, %v3230
  %v3255 = vperm.slane %v2767, %v3232
  %v3256 = vsel %vm3234, %v3255, %v3254
  %v3257 = vperm.slane %v2770, %v3230
  %v3258 = vperm.slane %v2773, %v3232
  %v3259 = vsel %vm3234, %v3258, %v3257
  %v3260 = vperm.slane %v2776, %v3230
  %v3261 = vperm.slane %v2779, %v3232
  %v3262 = vsel %vm3234, %v3261, %v3260
  %v3263 = vperm.slane %v2782, %v3230
  %v3264 = vperm.slane %v2785, %v3232
  %v3265 = vsel %vm3234, %v3264, %v3263
  %v3266 = vperm.slane %v2788, %v3230
  %v3267 = vperm.slane %v2791, %v3232
  %v3268 = vsel %vm3234, %v3267, %v3266
  %v3269 = vperm.slane %v2794, %v3230
  %v3270 = vperm.slane %v2797, %v3232
  %v3271 = vsel %vm3234, %v3270, %v3269
  %v3272 = vperm.slane %v2800, %v3230
  %v3273 = vperm.slane %v2803, %v3232
  %v3274 = vsel %vm3234, %v3273, %v3272
  %v3275 = vperm.slane %v2806, %v3230
  %v3276 = vperm.slane %v2809, %v3232
  %v3277 = vsel %vm3234, %v3276, %v3275
  %v3278 = vperm.slane %v2812, %v3230
  %v3279 = vperm.slane %v2815, %v3232
  %v3280 = vsel %vm3234, %v3279, %v3278
  %v3281 = vsel %vm3076, %v3238, %v3235
  %v3282 = vsel %vm3078, %v3241, %v3281
  %v3283 = vsel %vm3080, %v3244, %v3282
  %v3284 = vsel %vm3082, %v3247, %v3283
  %v3285 = vsel %vm3084, %v3250, %v3284
  %v3286 = vsel %vm3086, %v3253, %v3285
  %v3287 = vsel %vm3088, %v3256, %v3286
  %v3288 = vsel %vm3076, %v3262, %v3259
  %v3289 = vsel %vm3078, %v3265, %v3288
  %v3290 = vsel %vm3080, %v3268, %v3289
  %v3291 = vsel %vm3082, %v3271, %v3290
  %v3292 = vsel %vm3084, %v3274, %v3291
  %v3293 = vsel %vm3086, %v3277, %v3292
  %v3294 = vsel %vm3088, %v3280, %v3293
  %v3329 = vadd.s32 %v3025, 4294967248
  %v3330 = vperm.slane %v2898, %v3329
  %v3331 = vadd.s32 %v3025, 4294967240
  %v3332 = vperm.slane %v2901, %v3331
  %vm3333 = vcmask 523712
  %v3334 = vsel %vm3333, %v3332, %v3330
  %v3335 = vperm.slane %v2904, %v3329
  %v3336 = vperm.slane %v2907, %v3331
  %v3337 = vsel %vm3333, %v3336, %v3335
  %v3338 = vperm.slane %v2910, %v3329
  %v3339 = vperm.slane %v2913, %v3331
  %v3340 = vsel %vm3333, %v3339, %v3338
  %v3341 = vperm.slane %v2916, %v3329
  %v3342 = vperm.slane %v2919, %v3331
  %v3343 = vsel %vm3333, %v3342, %v3341
  %v3344 = vperm.slane %v2922, %v3329
  %v3345 = vperm.slane %v2925, %v3331
  %v3346 = vsel %vm3333, %v3345, %v3344
  %v3347 = vperm.slane %v2928, %v3329
  %v3348 = vperm.slane %v2931, %v3331
  %v3349 = vsel %vm3333, %v3348, %v3347
  %v3350 = vperm.slane %v2934, %v3329
  %v3351 = vperm.slane %v2937, %v3331
  %v3352 = vsel %vm3333, %v3351, %v3350
  %v3353 = vperm.slane %v2940, %v3329
  %v3354 = vperm.slane %v2943, %v3331
  %v3355 = vsel %vm3333, %v3354, %v3353
  %v3356 = vperm.slane %v2946, %v3329
  %v3357 = vperm.slane %v2949, %v3331
  %v3358 = vsel %vm3333, %v3357, %v3356
  %v3359 = vperm.slane %v2952, %v3329
  %v3360 = vperm.slane %v2955, %v3331
  %v3361 = vsel %vm3333, %v3360, %v3359
  %v3362 = vperm.slane %v2958, %v3329
  %v3363 = vperm.slane %v2961, %v3331
  %v3364 = vsel %vm3333, %v3363, %v3362
  %v3365 = vperm.slane %v2964, %v3329
  %v3366 = vperm.slane %v2967, %v3331
  %v3367 = vsel %vm3333, %v3366, %v3365
  %v3368 = vperm.slane %v2970, %v3329
  %v3369 = vperm.slane %v2973, %v3331
  %v3370 = vsel %vm3333, %v3369, %v3368
  %v3371 = vperm.slane %v2976, %v3329
  %v3372 = vperm.slane %v2979, %v3331
  %v3373 = vsel %vm3333, %v3372, %v3371
  %v3374 = vperm.slane %v2982, %v3329
  %v3375 = vperm.slane %v2985, %v3331
  %v3376 = vsel %vm3333, %v3375, %v3374
  %v3377 = vperm.slane %v2988, %v3329
  %v3378 = vperm.slane %v2991, %v3331
  %v3379 = vsel %vm3333, %v3378, %v3377
  %v3380 = vsel %vm3076, %v3337, %v3334
  %v3381 = vsel %vm3078, %v3340, %v3380
  %v3382 = vsel %vm3080, %v3343, %v3381
  %v3383 = vsel %vm3082, %v3346, %v3382
  %v3384 = vsel %vm3084, %v3349, %v3383
  %v3385 = vsel %vm3086, %v3352, %v3384
  %v3386 = vsel %vm3088, %v3355, %v3385
  %v3387 = vsel %vm3076, %v3361, %v3358
  %v3388 = vsel %vm3078, %v3364, %v3387
  %v3389 = vsel %vm3080, %v3367, %v3388
  %v3390 = vsel %vm3082, %v3370, %v3389
  %v3391 = vsel %vm3084, %v3373, %v3390
  %v3392 = vsel %vm3086, %v3376, %v3391
  %v3393 = vsel %vm3088, %v3379, %v3392
  %v3396 = vsel %vm1935, %v3089, %v3188
  %v3397 = vsel %vm1935, %v3096, %v3195
  %vm3398 = vcmask 261120
  %v3399 = vsel %vm3398, %v3396, %v3287
  %v3400 = vsel %vm3398, %v3397, %v3294
  %vm3401 = vcmask 392192
  %v3402 = vsel %vm3401, %v3399, %v3386
  %v3403 = vsel %vm3401, %v3400, %v3393
  %v3404 = vpack.c.bf16 %v3403, %v3402
  %v3405 = vperm.slane %v31, 0
  %v3414 = vunpack.c.l.b16 %v43
  %v3415 = vunpack.c.l.b16 %v44
  %v3416 = vunpack.c.l.b16 %v45
  %v3417 = vunpack.c.l.b16 %v46
  %v3418 = vunpack.c.l.b16 %v47
  %v3419 = vunpack.c.l.b16 %v48
  %v3420 = vunpack.c.l.b16 %v49
  %v3421 = vunpack.c.l.b16 %v50
  %v3422 = vpack.c.b16 %v3415, %v3414
  %v3423 = vpack.c.b16 %v3417, %v3416
  %v3424 = vpack.c.b16 %v3419, %v3418
  %v3425 = vpack.c.b16 %v3421, %v3420
  %v3431 = vsel %vm318, %v3404, 0
  %3433 = vmatpush.bf16.msra.mxu0 0
  %3434 = vmatpush.bf16.msra.mxu0 0
  %3435 = vmatpush.bf16.msra.mxu0 0
  %3436 = vmatpush.bf16.msra.mxu0 0
  %3437 = vmatpush.bf16.msra.mxu0 %v3425
  %3438 = vmatpush.bf16.msra.mxu0 %v3424
  %3439 = vmatpush.bf16.msra.mxu0 %v3423
  %3440 = vmatpush.bf16.msra.mxu0 %v3422
  %3441 = vmatmul.bf16.gmra.mxu0 %v3431
  %v3442 = vpop.f32.mrf.mxu0
  %v3443 = vadd.f32 %v3405, %v3442
  %v3444 = vpop.f32.mrf.mxu0
  %v3445 = vadd.f32 %v3405, %v3444
  %3446 = vdwg.mxu0
  %v3447 = vmul.f32 %v3443, %v363
  %v3448 = vmul.f32 %v3445, %v364
  %v3449 = vpack.c.bf16 %v3448, %v3447
  %v3451 = vsel %vm318, %v3449, 0
  %3453 = vmatpush.bf16.msra.mxu0 0
  %3454 = vmatpush.bf16.msra.mxu0 0
  %3455 = vmatpush.bf16.msra.mxu0 0
  %3456 = vmatpush.bf16.msra.mxu0 0
  %3457 = vmatpush.bf16.msra.mxu0 %v3425
  %3458 = vmatpush.bf16.msra.mxu0 %v3424
  %3459 = vmatpush.bf16.msra.mxu0 %v3423
  %3460 = vmatpush.bf16.msra.mxu0 %v3422
  %3461 = vmatmul.bf16.gmra.mxu0 %v3451
  %v3462 = vpop.f32.mrf.mxu0
  %v3463 = vadd.f32 %v3405, %v3462
  %v3464 = vpop.f32.mrf.mxu0
  %v3465 = vadd.f32 %v3405, %v3464
  %3466 = vdwg.mxu0
  %v3467 = vsel %vm318, %v3463, 0.0
  %3468 = vadd.xlane.f32.xlu0 %v3467
  %v3469 = vpop.xlane.xlu0 %3468
  %v3470 = vsel %vm318, %v3465, 0.0
  %3471 = vadd.xlane.f32.xlu0 %v3470
  %v3472 = vpop.xlane.xlu0 %3471
  %v3473 = vrcp.pop 64.0
  %v3474 = vmul.f32 64.0, %v3473
  %v3475 = vsub.f32 1.0, %v3474
  %v3476 = vmul.f32 %v3473, %v3475
  %v3477 = vadd.f32 %v3473, %v3476
  %vm3478 = vweird.f32 %v3473
  %v3479 = vsel %vm3478, %v3473, %v3477
  %v3480 = vmul.f32 %v3469, %v3479
  %v3481 = vmul.f32 %v3472, %v3479
  %v3482 = vsub.f32 %v3463, %v3480
  %v3483 = vsub.f32 %v3465, %v3481
  %v3484 = vmul.f32 %v3482, %v3482
  %v3485 = vmul.f32 %v3483, %v3483
  %v3486 = vsel %vm318, %v3484, 0.0
  %3487 = vadd.xlane.f32.xlu0 %v3486
  %v3488 = vpop.xlane.xlu0 %3487
  %v3489 = vsel %vm318, %v3485, 0.0
  %3490 = vadd.xlane.f32.xlu0 %v3489
  %v3491 = vpop.xlane.xlu0 %3490
  %v3492 = vmul.f32 %v3488, %v3479
  %v3493 = vmul.f32 %v3491, %v3479
  %v3494 = vadd.f32 %v3492, 1e-12
  %v3495 = vadd.f32 %v3493, 1e-12
  %v3496 = vrsqrt.pop %v3494
  %v3497 = vmul.f32 %v3496, %v3494
  %v3498 = vmul.f32 %v3497, %v3496
  %v3499 = vmul.f32 0.5, %v3498
  %v3500 = vsub.f32 1.5, %v3499
  %v3501 = vmul.f32 %v3496, %v3500
  %vm3502 = vweird.f32 %v3494
  %vm3503 = vweird.f32 %v3496
  %vm3504 = vmor %vm3502, %vm3503
  %v3505 = vsel %vm3504, %v3496, %v3501
  %v3506 = vrsqrt.pop %v3495
  %v3507 = vmul.f32 %v3506, %v3495
  %v3508 = vmul.f32 %v3507, %v3506
  %v3509 = vmul.f32 0.5, %v3508
  %v3510 = vsub.f32 1.5, %v3509
  %v3511 = vmul.f32 %v3506, %v3510
  %vm3512 = vweird.f32 %v3495
  %vm3513 = vweird.f32 %v3506
  %vm3514 = vmor %vm3512, %vm3513
  %v3515 = vsel %vm3514, %v3506, %v3511
  %v3516 = vmul.f32 %v3482, %v3505
  %v3517 = vmul.f32 %v3483, %v3515
  %v3518 = vpack.c.bf16 %v3517, %v3516
  %v3519 = vperm.slane %v34, 0
  %v3528 = vunpack.c.l.b16 %v51
  %v3529 = vunpack.c.l.b16 %v52
  %v3530 = vunpack.c.l.b16 %v53
  %v3531 = vunpack.c.l.b16 %v54
  %v3532 = vunpack.c.l.b16 %v55
  %v3533 = vunpack.c.l.b16 %v56
  %v3534 = vunpack.c.l.b16 %v57
  %v3535 = vunpack.c.l.b16 %v58
  %v3536 = vpack.c.b16 %v3529, %v3528
  %v3537 = vpack.c.b16 %v3531, %v3530
  %v3538 = vpack.c.b16 %v3533, %v3532
  %v3539 = vpack.c.b16 %v3535, %v3534
  %v3545 = vsel %vm318, %v3518, 0
  %3547 = vmatpush.bf16.msra.mxu0 0
  %3548 = vmatpush.bf16.msra.mxu0 0
  %3549 = vmatpush.bf16.msra.mxu0 0
  %3550 = vmatpush.bf16.msra.mxu0 0
  %3551 = vmatpush.bf16.msra.mxu0 %v3539
  %3552 = vmatpush.bf16.msra.mxu0 %v3538
  %3553 = vmatpush.bf16.msra.mxu0 %v3537
  %3554 = vmatpush.bf16.msra.mxu0 %v3536
  %3555 = vmatmul.bf16.gmra.mxu0 %v3545
  %v3556 = vpop.f32.mrf.mxu0
  %v3557 = vadd.f32 %v3519, %v3556
  %v3558 = vpop.f32.mrf.mxu0
  %v3559 = vadd.f32 %v3519, %v3558
  %3560 = vdwg.mxu0
  %v3561 = vmul.f32 %v360, 4.0
  %v3562 = vmul.f32 %v361, 4.0
  %v3563 = vsub.f32 %v3557, %v3561
  %v3564 = vsub.f32 %v3559, %v3562
  %v3565 = vadd.f32 %v3563, %v71
  %v3566 = vadd.f32 %v3564, %v72
  %v3567 = vpack.c.bf16 %v3566, %v3565
  %v3568 = vperm.slane %v32, 0
  %v3577 = vunpack.c.l.b16 %v59
  %v3578 = vunpack.c.l.b16 %v60
  %v3579 = vunpack.c.l.b16 %v61
  %v3580 = vunpack.c.l.b16 %v62
  %v3581 = vunpack.c.l.b16 %v63
  %v3582 = vunpack.c.l.b16 %v64
  %v3583 = vunpack.c.l.b16 %v65
  %v3584 = vunpack.c.l.b16 %v66
  %v3585 = vpack.c.b16 %v3578, %v3577
  %v3586 = vpack.c.b16 %v3580, %v3579
  %v3587 = vpack.c.b16 %v3582, %v3581
  %v3588 = vpack.c.b16 %v3584, %v3583
  %v3594 = vsel %vm318, %v3567, 0
  %3596 = vmatpush.bf16.msra.mxu0 0
  %3597 = vmatpush.bf16.msra.mxu0 0
  %3598 = vmatpush.bf16.msra.mxu0 0
  %3599 = vmatpush.bf16.msra.mxu0 0
  %3600 = vmatpush.bf16.msra.mxu0 %v3588
  %3601 = vmatpush.bf16.msra.mxu0 %v3587
  %3602 = vmatpush.bf16.msra.mxu0 %v3586
  %3603 = vmatpush.bf16.msra.mxu0 %v3585
  %3604 = vmatmul.bf16.gmra.mxu0 %v3594
  %v3605 = vpop.f32.mrf.mxu0
  %v3606 = vadd.f32 %v3568, %v3605
  %v3607 = vpop.f32.mrf.mxu0
  %v3608 = vadd.f32 %v3568, %v3607
  %3609 = vdwg.mxu0
  %v3610 = vmul.f32 %v339, %v339
  %v3611 = vmul.f32 %v341, %v341
  %v3612 = vmul.f32 %v332, %v332
  %v3613 = vmul.f32 %v334, %v334
  %v3614 = vmul.f32 %v3610, %v3610
  %v3615 = vmul.f32 %v3611, %v3611
  %3618 = vrot.lane.b32.xlu0 %v3614, 64
  %v3619 = vpop.permute.xlu0 %3618
  %3620 = vrot.lane.b32.xlu0 %v3615, 64
  %v3621 = vpop.permute.xlu0 %3620
  %v3624 = vadd.f32 %v3612, %v3619
  %v3625 = vadd.f32 %v3613, %v3621
  %v3626 = vmul.f32 %v332, 2.0
  %v3627 = vmul.f32 %v334, 2.0
  %3630 = vrot.lane.b32.xlu0 %v3626, 64
  %v3631 = vpop.permute.xlu0 %3630
  %3632 = vrot.lane.b32.xlu0 %v3627, 64
  %v3633 = vpop.permute.xlu0 %3632
  %v3636 = vsub.f32 %v3624, %v3631
  %v3637 = vsub.f32 %v3625, %v3633
  %v3638 = vsub.f32 %v3636, 1.0
  %v3639 = vsub.f32 %v3637, 1.0
  %v3640 = vsel %vm318, %v3638, 0.0
  %3641 = vadd.xlane.f32.xlu0 %v3640
  %v3642 = vpop.xlane.xlu0 %3641
  %v3643 = vsel %vm318, %v3639, 0.0
  %3644 = vadd.xlane.f32.xlu0 %v3643
  %v3645 = vpop.xlane.xlu0 %3644
  %v3646 = vmul.f32 %v3642, 0.5
  %v3647 = vmul.f32 %v3645, 0.5
  %v3648 = vsel %vm318, %v3606, %v3646
  %v3649 = vsel %vm318, %v3608, %v3647
  %3650 = vst [vmem:[%s7] sm:$0xff] %v3648
  %3651 = vst [vmem:[%s7 + $0x8] sm:$0xff] %v3649
  // Predicated region
  $region30: #{atf_forward.1} parent=0 // pred_check
    _
  $region31: #{atf_forward.1} parent=0 // pred_check_branch
    %3653 = sbr.rel (0) target = $region33
  $region32: #{atf_forward.1} parent=0 // pred_region
    _
  $region33: #{atf_forward.1} parent=0 // pred_fallthru
    _
  // Predicated region
  $region34: #{atf_forward.1} parent=0 // pred_check
    _
  $region35: #{atf_forward.1} parent=0 // pred_check_branch
    %3655 = sbr.rel (0) target = $region37
  $region36: #{atf_forward.1} parent=0 // pred_region
    _
  $region37: #{atf_forward.1} parent=0 // pred_fallthru
    _

</llo_original>
